<compile_context>
chip_gen: v7x
topology: tpu7x:2x2x1
jax: 0.10.0
libtpu: 0.0.40
codegen_flags: <defaults>
</compile_context>

<pallas_src>
import jax
import jax.numpy as jnp
from jax import lax
from jax.experimental import pallas as pl
from jax.experimental.pallas import tpu as pltpu


def _round_up(x, m):
    return ((x + m - 1) // m) * m


# --------------------------------------------------------------------------- #
# Kernel
# --------------------------------------------------------------------------- #
def _lstm_model_kernel(z_ref, w_in_ref, b_in_ref, w_ih_ref, w_hh_ref, b_g_ref,
                       w_out_ref, b_out_ref, out_ref, gates_scr, seq_scr):
    T, Bt, ninv = z_ref.shape
    Hp = w_hh_ref.shape[0]
    ntp_p = out_ref.shape[2]
    mdt = w_in_ref.dtype                       # matmul (MXU) dtype, e.g. bf16

    # ---- linearIn + relu over all timesteps at once: (T*Bt,ninv)@(ninv,Hp) --
    z2 = z_ref[...].reshape(T * Bt, ninv).astype(mdt)
    x0 = jnp.maximum(
        jnp.dot(z2, w_in_ref[...], preferred_element_type=jnp.float32)
        + b_in_ref[...],
        0.0,
    )

    # ---- input contribution to all LSTM gates, all timesteps (big matmul) --
    # gate order (cuDNN / PyTorch): i, f, g, o
    gates_scr[...] = (
        jnp.dot(x0.astype(mdt), w_ih_ref[...],
                preferred_element_type=jnp.float32)
        + b_g_ref[...]                          # b_ih + b_hh (pre-summed)
    )                                           # (T*Bt, 4*Hp) f32

    h0 = jnp.zeros((Bt, Hp), jnp.float32)
    c0 = jnp.zeros((Bt, Hp), jnp.float32)

    # ---- sequential LSTM recurrence; h/c live in registers -----------------
    def step(t, carry):
        h, c = carry
        row = t * Bt
        if Bt % 8 == 0:
            row = pl.multiple_of(row, Bt)       # aligned, unmasked access
        g = (gates_scr[pl.ds(row, Bt), :]
             + jnp.dot(h.astype(mdt), w_hh_ref[...],
                       preferred_element_type=jnp.float32))
        # Hp is a multiple of 128 -> each gate slice is a whole lane-block.
        i_g = jax.nn.sigmoid(g[:, 0:Hp])
        f_g = jax.nn.sigmoid(g[:, Hp:2 * Hp])
        g_g = jnp.tanh(g[:, 2 * Hp:3 * Hp])
        o_g = jax.nn.sigmoid(g[:, 3 * Hp:4 * Hp])
        c_new = f_g * c + i_g * g_g
        h_new = o_g * jnp.tanh(c_new)
        seq_scr[pl.ds(row, Bt), :] = h_new
        return (h_new, c_new)

    lax.fori_loop(0, T, step, (h0, c0), unroll=(T <= 16))

    # ---- linearOut + sigmoid (lane-dense 128-wide output) ------------------
    gen = (jnp.dot(seq_scr[...].astype(mdt), w_out_ref[...],
                   preferred_element_type=jnp.float32)
           + b_out_ref[...])                    # (T*Bt, ntp_p)
    out_ref[...] = jax.nn.sigmoid(gen).reshape(T, Bt, ntp_p)


# --------------------------------------------------------------------------- #
# Wrapper
# --------------------------------------------------------------------------- #
def _pack_params(params, H, ninv, ntp, Hp, ntp_p, mat_dtype):
    """Pad to lane-aligned sizes (zero padding keeps padded hidden units == 0)."""
    w_in, b_in, w_ih, w_hh, b_ih, b_hh, w_out, b_out = params

    w_in_p = jnp.zeros((Hp, ninv), jnp.float32).at[:H].set(w_in)
    b_in_p = jnp.zeros((Hp,), jnp.float32).at[:H].set(b_in)

    def pad_gate_mat(w):                        # (4H, H) -> (4Hp, Hp), per gate
        wg = w.reshape(4, H, H)
        out = jnp.zeros((4, Hp, Hp), jnp.float32).at[:, :H, :H].set(wg)
        return out.reshape(4 * Hp, Hp)

    def pad_gate_vec(b):                        # (4H,) -> (4Hp,), per gate
        bg = b.reshape(4, H)
        return jnp.zeros((4, Hp), jnp.float32).at[:, :H].set(bg).reshape(4 * Hp)

    w_ih_p = pad_gate_mat(w_ih)
    w_hh_p = pad_gate_mat(w_hh)
    b_g = (pad_gate_vec(b_ih) + pad_gate_vec(b_hh)).reshape(1, 4 * Hp)

    w_out_p = jnp.zeros((ntp_p, Hp), jnp.float32).at[:ntp, :H].set(w_out)
    b_out_p = jnp.zeros((ntp_p,), jnp.float32).at[:ntp].set(b_out)

    return (
        w_in_p.T.astype(mat_dtype),             # (ninv, Hp)
        b_in_p.reshape(1, Hp),                  # f32
        w_ih_p.T.astype(mat_dtype),             # (Hp, 4Hp)
        w_hh_p.T.astype(mat_dtype),             # (Hp, 4Hp)
        b_g,                                    # f32 (1, 4Hp)
        w_out_p.T.astype(mat_dtype),            # (Hp, ntp_p)
        b_out_p.reshape(1, ntp_p),              # f32
    )


def lstm_model_forward(z, params, *, nfea, nmul, hiddeninv, routDy=False,
                       bt=None, mat_dtype=jnp.bfloat16):
    """z: (T, B, ninv) f32 -> (hbvpara (T,B,nfea*nmul), routpara (T,B,nrout))."""
    T, B, ninv = z.shape
    H = hiddeninv
    nhbv = nfea * nmul
    nrout = (2 * nmul) if routDy else 2
    ntp = nhbv + nrout

    Hp = _round_up(max(H, 128), 128)            # vreg-aligned hidden size
    ntp_p = _round_up(max(ntp, 128), 128)       # lane-dense output width

    if bt is None:
        bt = B
    assert B % bt == 0, "batch must divide into tiles"
    assert bt % 8 == 0 or bt == B, "batch tile should be a multiple of 8"

    packed = _pack_params(params, H, ninv, ntp, Hp, ntp_p, mat_dtype)
    z_in = z.astype(jnp.float32)

    def full_spec(shape):
        return pl.BlockSpec(shape, lambda i, _s=shape: tuple(0 for _ in _s))

    in_specs = [
        pl.BlockSpec((T, bt, ninv), lambda i: (0, i, 0)),   # z tile (batch)
        full_spec((ninv, Hp)),
        full_spec((1, Hp)),
        full_spec((Hp, 4 * Hp)),
        full_spec((Hp, 4 * Hp)),
        full_spec((1, 4 * Hp)),
        full_spec((Hp, ntp_p)),
        full_spec((1, ntp_p)),
    ]
    out_specs = pl.BlockSpec((T, bt, ntp_p), lambda i: (0, i, 0))

    itemsize = jnp.dtype(mat_dtype).itemsize
    flops = 2 * T * B * (ninv * Hp + 4 * Hp * Hp + 4 * Hp * Hp + Hp * ntp_p)
    transcendentals = T * B * (5 * Hp + ntp_p)
    bytes_accessed = (z_in.size * 4
                      + sum(int(a.size) * itemsize for a in packed[::2])
                      + (Hp + 4 * Hp + ntp_p) * 4
                      + T * B * ntp_p * 4)

    gen = pl.pallas_call(
        _lstm_model_kernel,
        out_shape=jax.ShapeDtypeStruct((T, B, ntp_p), jnp.float32),
        grid_spec=pltpu.PrefetchScalarGridSpec(
            num_scalar_prefetch=0,
            grid=(B // bt,),
            in_specs=in_specs,
            out_specs=out_specs,
            scratch_shapes=[
                pltpu.VMEM((T * bt, 4 * Hp), jnp.float32),  # input-gate slab
                pltpu.VMEM((T * bt, Hp), jnp.float32),      # LSTM outputs
            ],
        ),
        compiler_params=pltpu.CompilerParams(
            dimension_semantics=("parallel",)),
        cost_estimate=pl.CostEstimate(
            flops=flops, transcendentals=transcendentals,
            bytes_accessed=bytes_accessed),
    )(z_in, *packed)

    # lane-dense output -> free slicing in the wrapper
    hbv = gen[..., :nhbv]
    rout = gen[..., nhbv:nhbv + nrout]
    return hbv, rout


# --------------------------------------------------------------------------- #
# Pure-JAX reference (eval-mode PyTorch forward)
# --------------------------------------------------------------------------- #
def reference_forward(z, params, *, nfea, nmul, hiddeninv, routDy=False):
    w_in, b_in, w_ih, w_hh, b_ih, b_hh, w_out, b_out = params
    T, B, _ = z.shape
    H = hiddeninv
    x0 = jax.nn.relu(z @ w_in.T + b_in)

    def step(carry, xt):
        h, c = carry
        g = xt @ w_ih.T + b_ih + h @ w_hh.T + b_hh
        i, f, gg, o = jnp.split(g, 4, axis=-1)
        c = jax.nn.sigmoid(f) * c + jax.nn.sigmoid(i) * jnp.tanh(gg)
        h = jax.nn.sigmoid(o) * jnp.tanh(c)
        return (h, c), h

    h0 = jnp.zeros((B, H), jnp.float32)
    c0 = jnp.zeros((B, H), jnp.float32)
    _, outs = lax.scan(step, (h0, c0), x0)
    gen = outs @ w_out.T + b_out
    nhbv = nfea * nmul
    nrout = (2 * nmul) if routDy else 2
    return (jax.nn.sigmoid(gen[..., :nhbv]),
            jax.nn.sigmoid(gen[..., nhbv:nhbv + nrout]))


if __name__ == "__main__":
    # lstmModel(ninv=8, nfea=4, nmul=2, hiddeninv=32, routDy=False)
    ninv, nfea, nmul, hiddeninv = 8, 4, 2, 32
    T, B = 8, 8
    H = hiddeninv
    nhbv = nfea * nmul
    nrout = 2
    ntp = nhbv + nrout

    key = jax.random.PRNGKey(0)
    ks = jax.random.split(key, 9)
    s_in = 1.0 / jnp.sqrt(jnp.float32(ninv))
    s_h = 1.0 / jnp.sqrt(jnp.float32(H))

    def u(k, shape, s):
        return jax.random.uniform(k, shape, jnp.float32, -s, s)

    params = (
        u(ks[0], (H, ninv), s_in),      # linearIn.weight
        u(ks[1], (H,), s_in),           # linearIn.bias
        u(ks[2], (4 * H, H), s_h),      # lstm.w_ih
        u(ks[3], (4 * H, H), s_h),      # lstm.w_hh
        u(ks[4], (4 * H,), s_h),        # lstm.b_ih
        u(ks[5], (4 * H,), s_h),        # lstm.b_hh
        u(ks[6], (ntp, H), s_h),        # linearOut.weight
        u(ks[7], (ntp,), s_h),          # linearOut.bias
    )
    z = jax.random.normal(ks[8], (T, B, ninv), jnp.float32)

    hbv, rout = lstm_model_forward(z, params, nfea=nfea, nmul=nmul,
                                   hiddeninv=hiddeninv)
    jax.block_until_ready((hbv, rout))

    hbv_ref, rout_ref = reference_forward(z, params, nfea=nfea, nmul=nmul,
                                          hiddeninv=hiddeninv)
    assert hbv.shape == (T, B, nhbv) and rout.shape == (T, B, nrout)
    assert jnp.allclose(hbv, hbv_ref, atol=5e-2), "hbvpara mismatch"
    assert jnp.allclose(rout, rout_ref, atol=5e-2), "routpara mismatch"

    print("KERNEL_OK")
</pallas_src>

<mosaic_0001>
module attributes {stable_mosaic.version = 11 : i64} {
  func.func @_lstm_model_kernel(%arg0: i32, %arg1: memref<8x8x8xf32, #tpu.memory_space<vmem>>, %arg2: memref<8x128xbf16, #tpu.memory_space<vmem>>, %arg3: memref<1x128xf32, #tpu.memory_space<vmem>>, %arg4: memref<128x512xbf16, #tpu.memory_space<vmem>>, %arg5: memref<128x512xbf16, #tpu.memory_space<vmem>>, %arg6: memref<1x512xf32, #tpu.memory_space<vmem>>, %arg7: memref<128x128xbf16, #tpu.memory_space<vmem>>, %arg8: memref<1x128xf32, #tpu.memory_space<vmem>>, %arg9: memref<8x8x128xf32, #tpu.memory_space<vmem>>, %arg10: memref<64x512xf32, #tpu.memory_space<vmem>>, %arg11: memref<64x128xf32, #tpu.memory_space<vmem>>) attributes {dimension_semantics = [#tpu.dimension_semantics<parallel>], iteration_bounds = array<i64: 1>, scalar_prefetch = 0 : i64, scratch_operands = 2 : i64, tpu.core_type = #tpu.core_type<tc>, window_params = [{transform_indices = @transform_0, window_bounds = array<i64: 8, 8, 8>}, {pipeline_mode = #tpu.pipeline_mode<synchronous>, transform_indices = @transform_1, window_bounds = array<i64: 8, 128>}, {pipeline_mode = #tpu.pipeline_mode<synchronous>, transform_indices = @transform_2, window_bounds = array<i64: 1, 128>}, {pipeline_mode = #tpu.pipeline_mode<synchronous>, transform_indices = @transform_3, window_bounds = array<i64: 128, 512>}, {pipeline_mode = #tpu.pipeline_mode<synchronous>, transform_indices = @transform_4, window_bounds = array<i64: 128, 512>}, {pipeline_mode = #tpu.pipeline_mode<synchronous>, transform_indices = @transform_5, window_bounds = array<i64: 1, 512>}, {pipeline_mode = #tpu.pipeline_mode<synchronous>, transform_indices = @transform_6, window_bounds = array<i64: 128, 128>}, {pipeline_mode = #tpu.pipeline_mode<synchronous>, transform_indices = @transform_7, window_bounds = array<i64: 1, 128>}, {transform_indices = @transform_8, window_bounds = array<i64: 8, 8, 128>}]} {
    %c0 = arith.constant 0 : index
    %c0_0 = arith.constant 0 : index
    %c0_1 = arith.constant 0 : index
    %0 = vector.load %arg1[%c0, %c0_0, %c0_1] : memref<8x8x8xf32, #tpu.memory_space<vmem>>, vector<8x8x8xf32>
    %1 = vector.shape_cast %0 : vector<8x8x8xf32> to vector<64x8xf32>
    %2 = arith.truncf %1 : vector<64x8xf32> to vector<64x8xbf16>
    %c0_2 = arith.constant 0 : index
    %c0_3 = arith.constant 0 : index
    %3 = vector.load %arg2[%c0_2, %c0_3] : memref<8x128xbf16, #tpu.memory_space<vmem>>, vector<8x128xbf16>
    %cst = arith.constant dense<0.000000e+00> : vector<64x128xf32>
    %4 = tpu.matmul %2, %3, %cst {dimension_numbers = #tpu.dot_dimension_numbers<[1], [0], [0], [1], [0, 0, 1, 1], [], []>} : vector<64x8xbf16>, vector<8x128xbf16>, vector<64x128xf32> -> vector<64x128xf32>
    %c0_4 = arith.constant 0 : index
    %c0_5 = arith.constant 0 : index
    %5 = vector.load %arg3[%c0_4, %c0_5] : memref<1x128xf32, #tpu.memory_space<vmem>>, vector<1x128xf32>
    %6 = vector.broadcast %5 : vector<1x128xf32> to vector<64x128xf32>
    %7 = arith.addf %4, %6 : vector<64x128xf32>
    %cst_6 = arith.constant 0.000000e+00 : f32
    %8 = vector.broadcast %cst_6 : f32 to vector<64x128xf32>
    %9 = arith.maximumf %7, %8 : vector<64x128xf32>
    %10 = arith.truncf %9 : vector<64x128xf32> to vector<64x128xbf16>
    %c0_7 = arith.constant 0 : index
    %c0_8 = arith.constant 0 : index
    %11 = vector.load %arg4[%c0_7, %c0_8] : memref<128x512xbf16, #tpu.memory_space<vmem>>, vector<128x512xbf16>
    %cst_9 = arith.constant dense<0.000000e+00> : vector<64x512xf32>
    %12 = tpu.matmul %10, %11, %cst_9 {dimension_numbers = #tpu.dot_dimension_numbers<[1], [0], [0], [1], [0, 0, 1, 1], [], []>} : vector<64x128xbf16>, vector<128x512xbf16>, vector<64x512xf32> -> vector<64x512xf32>
    %c0_10 = arith.constant 0 : index
    %c0_11 = arith.constant 0 : index
    %13 = vector.load %arg6[%c0_10, %c0_11] : memref<1x512xf32, #tpu.memory_space<vmem>>, vector<1x512xf32>
    %14 = vector.broadcast %13 : vector<1x512xf32> to vector<64x512xf32>
    %15 = arith.addf %12, %14 : vector<64x512xf32>
    %c0_12 = arith.constant 0 : index
    %c0_13 = arith.constant 0 : index
    %16 = vector.load %arg10[%c0_12, %c0_13] : memref<64x512xf32, #tpu.memory_space<vmem>>, vector<64x512xf32>
    tpu.vector_store %arg10[%c0_12, %c0_13], %15 {strides = array<i32>} : memref<64x512xf32, #tpu.memory_space<vmem>>, vector<64x512xf32>,
    %cst_14 = arith.constant 0.000000e+00 : f32
    %17 = vector.broadcast %cst_14 : f32 to vector<8x128xf32>
    %cst_15 = arith.constant 0.000000e+00 : f32
    %18 = vector.broadcast %cst_15 : f32 to vector<8x128xf32>
    %c0_i32 = arith.constant 0 : i32
    %c8_i32 = arith.constant 8 : i32
    %19 = arith.muli %c0_i32, %c8_i32 : i32
    %20 = tpu.assume_multiple %19, 8 : i32
    %21 = arith.index_cast %20 : i32 to index
    %c0_16 = arith.constant 0 : index
    %22 = vector.load %arg10[%21, %c0_16] : memref<64x512xf32, #tpu.memory_space<vmem>>, vector<8x512xf32>
    %23 = arith.truncf %17 : vector<8x128xf32> to vector<8x128xbf16>
    %c0_17 = arith.constant 0 : index
    %c0_18 = arith.constant 0 : index
    %24 = vector.load %arg5[%c0_17, %c0_18] : memref<128x512xbf16, #tpu.memory_space<vmem>>, vector<128x512xbf16>
    %cst_19 = arith.constant dense<0.000000e+00> : vector<8x512xf32>
    %25 = tpu.matmul %23, %24, %cst_19 {dimension_numbers = #tpu.dot_dimension_numbers<[1], [0], [0], [1], [0, 0, 1, 1], [], []>} : vector<8x128xbf16>, vector<128x512xbf16>, vector<8x512xf32> -> vector<8x512xf32>
    %26 = arith.addf %22, %25 : vector<8x512xf32>
    %27 = vector.extract_strided_slice %26 {offsets = [0, 0], sizes = [8, 128], strides = [1, 1]} : vector<8x512xf32> to vector<8x128xf32>
    %28 = arith.negf %27 : vector<8x128xf32>
    %29 = math.exp %28 : vector<8x128xf32>
    %cst_20 = arith.constant 1.000000e+00 : f32
    %30 = vector.broadcast %cst_20 : f32 to vector<8x128xf32>
    %31 = arith.addf %30, %29 : vector<8x128xf32>
    %32 = arith.divf %30, %31 : vector<8x128xf32>
    %33 = vector.extract_strided_slice %26 {offsets = [0, 128], sizes = [8, 128], strides = [1, 1]} : vector<8x512xf32> to vector<8x128xf32>
    %34 = arith.negf %33 : vector<8x128xf32>
    %35 = math.exp %34 : vector<8x128xf32>
    %cst_21 = arith.constant 1.000000e+00 : f32
    %36 = vector.broadcast %cst_21 : f32 to vector<8x128xf32>
    %37 = arith.addf %36, %35 : vector<8x128xf32>
    %38 = arith.divf %36, %37 : vector<8x128xf32>
    %39 = vector.extract_strided_slice %26 {offsets = [0, 256], sizes = [8, 128], strides = [1, 1]} : vector<8x512xf32> to vector<8x128xf32>
    %40 = math.tanh %39 : vector<8x128xf32>
    %41 = vector.extract_strided_slice %26 {offsets = [0, 384], sizes = [8, 128], strides = [1, 1]} : vector<8x512xf32> to vector<8x128xf32>
    %42 = arith.negf %41 : vector<8x128xf32>
    %43 = math.exp %42 : vector<8x128xf32>
    %cst_22 = arith.constant 1.000000e+00 : f32
    %44 = vector.broadcast %cst_22 : f32 to vector<8x128xf32>
    %45 = arith.addf %44, %43 : vector<8x128xf32>
    %46 = arith.divf %44, %45 : vector<8x128xf32>
    %47 = arith.mulf %38, %18 : vector<8x128xf32>
    %48 = arith.mulf %32, %40 : vector<8x128xf32>
    %49 = arith.addf %47, %48 : vector<8x128xf32>
    %50 = math.tanh %49 : vector<8x128xf32>
    %51 = arith.mulf %46, %50 : vector<8x128xf32>
    %52 = arith.index_cast %20 : i32 to index
    %c0_23 = arith.constant 0 : index
    %53 = vector.load %arg11[%52, %c0_23] : memref<64x128xf32, #tpu.memory_space<vmem>>, vector<8x128xf32>
    tpu.vector_store %arg11[%52, %c0_23], %51 {strides = array<i32>} : memref<64x128xf32, #tpu.memory_space<vmem>>, vector<8x128xf32>,
    %c1_i32 = arith.constant 1 : i32
    %c8_i32_24 = arith.constant 8 : i32
    %54 = arith.muli %c1_i32, %c8_i32_24 : i32
    %55 = tpu.assume_multiple %54, 8 : i32
    %56 = arith.index_cast %55 : i32 to index
    %c0_25 = arith.constant 0 : index
    %57 = vector.load %arg10[%56, %c0_25] : memref<64x512xf32, #tpu.memory_space<vmem>>, vector<8x512xf32>
    %58 = arith.truncf %51 : vector<8x128xf32> to vector<8x128xbf16>
    %c0_26 = arith.constant 0 : index
    %c0_27 = arith.constant 0 : index
    %59 = vector.load %arg5[%c0_26, %c0_27] : memref<128x512xbf16, #tpu.memory_space<vmem>>, vector<128x512xbf16>
    %cst_28 = arith.constant dense<0.000000e+00> : vector<8x512xf32>
    %60 = tpu.matmul %58, %59, %cst_28 {dimension_numbers = #tpu.dot_dimension_numbers<[1], [0], [0], [1], [0, 0, 1, 1], [], []>} : vector<8x128xbf16>, vector<128x512xbf16>, vector<8x512xf32> -> vector<8x512xf32>
    %61 = arith.addf %57, %60 : vector<8x512xf32>
    %62 = vector.extract_strided_slice %61 {offsets = [0, 0], sizes = [8, 128], strides = [1, 1]} : vector<8x512xf32> to vector<8x128xf32>
    %63 = arith.negf %62 : vector<8x128xf32>
    %64 = math.exp %63 : vector<8x128xf32>
    %cst_29 = arith.constant 1.000000e+00 : f32
    %65 = vector.broadcast %cst_29 : f32 to vector<8x128xf32>
    %66 = arith.addf %65, %64 : vector<8x128xf32>
    %67 = arith.divf %65, %66 : vector<8x128xf32>
    %68 = vector.extract_strided_slice %61 {offsets = [0, 128], sizes = [8, 128], strides = [1, 1]} : vector<8x512xf32> to vector<8x128xf32>
    %69 = arith.negf %68 : vector<8x128xf32>
    %70 = math.exp %69 : vector<8x128xf32>
    %cst_30 = arith.constant 1.000000e+00 : f32
    %71 = vector.broadcast %cst_30 : f32 to vector<8x128xf32>
    %72 = arith.addf %71, %70 : vector<8x128xf32>
    %73 = arith.divf %71, %72 : vector<8x128xf32>
    %74 = vector.extract_strided_slice %61 {offsets = [0, 256], sizes = [8, 128], strides = [1, 1]} : vector<8x512xf32> to vector<8x128xf32>
    %75 = math.tanh %74 : vector<8x128xf32>
    %76 = vector.extract_strided_slice %61 {offsets = [0, 384], sizes = [8, 128], strides = [1, 1]} : vector<8x512xf32> to vector<8x128xf32>
    %77 = arith.negf %76 : vector<8x128xf32>
    %78 = math.exp %77 : vector<8x128xf32>
    %cst_31 = arith.constant 1.000000e+00 : f32
    %79 = vector.broadcast %cst_31 : f32 to vector<8x128xf32>
    %80 = arith.addf %79, %78 : vector<8x128xf32>
    %81 = arith.divf %79, %80 : vector<8x128xf32>
    %82 = arith.mulf %73, %49 : vector<8x128xf32>
    %83 = arith.mulf %67, %75 : vector<8x128xf32>
    %84 = arith.addf %82, %83 : vector<8x128xf32>
    %85 = math.tanh %84 : vector<8x128xf32>
    %86 = arith.mulf %81, %85 : vector<8x128xf32>
    %87 = arith.index_cast %55 : i32 to index
    %c0_32 = arith.constant 0 : index
    %88 = vector.load %arg11[%87, %c0_32] : memref<64x128xf32, #tpu.memory_space<vmem>>, vector<8x128xf32>
    tpu.vector_store %arg11[%87, %c0_32], %86 {strides = array<i32>} : memref<64x128xf32, #tpu.memory_space<vmem>>, vector<8x128xf32>,
    %c2_i32 = arith.constant 2 : i32
    %c8_i32_33 = arith.constant 8 : i32
    %89 = arith.muli %c2_i32, %c8_i32_33 : i32
    %90 = tpu.assume_multiple %89, 8 : i32
    %91 = arith.index_cast %90 : i32 to index
    %c0_34 = arith.constant 0 : index
    %92 = vector.load %arg10[%91, %c0_34] : memref<64x512xf32, #tpu.memory_space<vmem>>, vector<8x512xf32>
    %93 = arith.truncf %86 : vector<8x128xf32> to vector<8x128xbf16>
    %c0_35 = arith.constant 0 : index
    %c0_36 = arith.constant 0 : index
    %94 = vector.load %arg5[%c0_35, %c0_36] : memref<128x512xbf16, #tpu.memory_space<vmem>>, vector<128x512xbf16>
    %cst_37 = arith.constant dense<0.000000e+00> : vector<8x512xf32>
    %95 = tpu.matmul %93, %94, %cst_37 {dimension_numbers = #tpu.dot_dimension_numbers<[1], [0], [0], [1], [0, 0, 1, 1], [], []>} : vector<8x128xbf16>, vector<128x512xbf16>, vector<8x512xf32> -> vector<8x512xf32>
    %96 = arith.addf %92, %95 : vector<8x512xf32>
    %97 = vector.extract_strided_slice %96 {offsets = [0, 0], sizes = [8, 128], strides = [1, 1]} : vector<8x512xf32> to vector<8x128xf32>
    %98 = arith.negf %97 : vector<8x128xf32>
    %99 = math.exp %98 : vector<8x128xf32>
    %cst_38 = arith.constant 1.000000e+00 : f32
    %100 = vector.broadcast %cst_38 : f32 to vector<8x128xf32>
    %101 = arith.addf %100, %99 : vector<8x128xf32>
    %102 = arith.divf %100, %101 : vector<8x128xf32>
    %103 = vector.extract_strided_slice %96 {offsets = [0, 128], sizes = [8, 128], strides = [1, 1]} : vector<8x512xf32> to vector<8x128xf32>
    %104 = arith.negf %103 : vector<8x128xf32>
    %105 = math.exp %104 : vector<8x128xf32>
    %cst_39 = arith.constant 1.000000e+00 : f32
    %106 = vector.broadcast %cst_39 : f32 to vector<8x128xf32>
    %107 = arith.addf %106, %105 : vector<8x128xf32>
    %108 = arith.divf %106, %107 : vector<8x128xf32>
    %109 = vector.extract_strided_slice %96 {offsets = [0, 256], sizes = [8, 128], strides = [1, 1]} : vector<8x512xf32> to vector<8x128xf32>
    %110 = math.tanh %109 : vector<8x128xf32>
    %111 = vector.extract_strided_slice %96 {offsets = [0, 384], sizes = [8, 128], strides = [1, 1]} : vector<8x512xf32> to vector<8x128xf32>
    %112 = arith.negf %111 : vector<8x128xf32>
    %113 = math.exp %112 : vector<8x128xf32>
    %cst_40 = arith.constant 1.000000e+00 : f32
    %114 = vector.broadcast %cst_40 : f32 to vector<8x128xf32>
    %115 = arith.addf %114, %113 : vector<8x128xf32>
    %116 = arith.divf %114, %115 : vector<8x128xf32>
    %117 = arith.mulf %108, %84 : vector<8x128xf32>
    %118 = arith.mulf %102, %110 : vector<8x128xf32>
    %119 = arith.addf %117, %118 : vector<8x128xf32>
    %120 = math.tanh %119 : vector<8x128xf32>
    %121 = arith.mulf %116, %120 : vector<8x128xf32>
    %122 = arith.index_cast %90 : i32 to index
    %c0_41 = arith.constant 0 : index
    %123 = vector.load %arg11[%122, %c0_41] : memref<64x128xf32, #tpu.memory_space<vmem>>, vector<8x128xf32>
    tpu.vector_store %arg11[%122, %c0_41], %121 {strides = array<i32>} : memref<64x128xf32, #tpu.memory_space<vmem>>, vector<8x128xf32>,
    %c3_i32 = arith.constant 3 : i32
    %c8_i32_42 = arith.constant 8 : i32
    %124 = arith.muli %c3_i32, %c8_i32_42 : i32
    %125 = tpu.assume_multiple %124, 8 : i32
    %126 = arith.index_cast %125 : i32 to index
    %c0_43 = arith.constant 0 : index
    %127 = vector.load %arg10[%126, %c0_43] : memref<64x512xf32, #tpu.memory_space<vmem>>, vector<8x512xf32>
    %128 = arith.truncf %121 : vector<8x128xf32> to vector<8x128xbf16>
    %c0_44 = arith.constant 0 : index
    %c0_45 = arith.constant 0 : index
    %129 = vector.load %arg5[%c0_44, %c0_45] : memref<128x512xbf16, #tpu.memory_space<vmem>>, vector<128x512xbf16>
    %cst_46 = arith.constant dense<0.000000e+00> : vector<8x512xf32>
    %130 = tpu.matmul %128, %129, %cst_46 {dimension_numbers = #tpu.dot_dimension_numbers<[1], [0], [0], [1], [0, 0, 1, 1], [], []>} : vector<8x128xbf16>, vector<128x512xbf16>, vector<8x512xf32> -> vector<8x512xf32>
    %131 = arith.addf %127, %130 : vector<8x512xf32>
    %132 = vector.extract_strided_slice %131 {offsets = [0, 0], sizes = [8, 128], strides = [1, 1]} : vector<8x512xf32> to vector<8x128xf32>
    %133 = arith.negf %132 : vector<8x128xf32>
    %134 = math.exp %133 : vector<8x128xf32>
    %cst_47 = arith.constant 1.000000e+00 : f32
    %135 = vector.broadcast %cst_47 : f32 to vector<8x128xf32>
    %136 = arith.addf %135, %134 : vector<8x128xf32>
    %137 = arith.divf %135, %136 : vector<8x128xf32>
    %138 = vector.extract_strided_slice %131 {offsets = [0, 128], sizes = [8, 128], strides = [1, 1]} : vector<8x512xf32> to vector<8x128xf32>
    %139 = arith.negf %138 : vector<8x128xf32>
    %140 = math.exp %139 : vector<8x128xf32>
    %cst_48 = arith.constant 1.000000e+00 : f32
    %141 = vector.broadcast %cst_48 : f32 to vector<8x128xf32>
    %142 = arith.addf %141, %140 : vector<8x128xf32>
    %143 = arith.divf %141, %142 : vector<8x128xf32>
    %144 = vector.extract_strided_slice %131 {offsets = [0, 256], sizes = [8, 128], strides = [1, 1]} : vector<8x512xf32> to vector<8x128xf32>
    %145 = math.tanh %144 : vector<8x128xf32>
    %146 = vector.extract_strided_slice %131 {offsets = [0, 384], sizes = [8, 128], strides = [1, 1]} : vector<8x512xf32> to vector<8x128xf32>
    %147 = arith.negf %146 : vector<8x128xf32>
    %148 = math.exp %147 : vector<8x128xf32>
    %cst_49 = arith.constant 1.000000e+00 : f32
    %149 = vector.broadcast %cst_49 : f32 to vector<8x128xf32>
    %150 = arith.addf %149, %148 : vector<8x128xf32>
    %151 = arith.divf %149, %150 : vector<8x128xf32>
    %152 = arith.mulf %143, %119 : vector<8x128xf32>
    %153 = arith.mulf %137, %145 : vector<8x128xf32>
    %154 = arith.addf %152, %153 : vector<8x128xf32>
    %155 = math.tanh %154 : vector<8x128xf32>
    %156 = arith.mulf %151, %155 : vector<8x128xf32>
    %157 = arith.index_cast %125 : i32 to index
    %c0_50 = arith.constant 0 : index
    %158 = vector.load %arg11[%157, %c0_50] : memref<64x128xf32, #tpu.memory_space<vmem>>, vector<8x128xf32>
    tpu.vector_store %arg11[%157, %c0_50], %156 {strides = array<i32>} : memref<64x128xf32, #tpu.memory_space<vmem>>, vector<8x128xf32>,
    %c4_i32 = arith.constant 4 : i32
    %c8_i32_51 = arith.constant 8 : i32
    %159 = arith.muli %c4_i32, %c8_i32_51 : i32
    %160 = tpu.assume_multiple %159, 8 : i32
    %161 = arith.index_cast %160 : i32 to index
    %c0_52 = arith.constant 0 : index
    %162 = vector.load %arg10[%161, %c0_52] : memref<64x512xf32, #tpu.memory_space<vmem>>, vector<8x512xf32>
    %163 = arith.truncf %156 : vector<8x128xf32> to vector<8x128xbf16>
    %c0_53 = arith.constant 0 : index
    %c0_54 = arith.constant 0 : index
    %164 = vector.load %arg5[%c0_53, %c0_54] : memref<128x512xbf16, #tpu.memory_space<vmem>>, vector<128x512xbf16>
    %cst_55 = arith.constant dense<0.000000e+00> : vector<8x512xf32>
    %165 = tpu.matmul %163, %164, %cst_55 {dimension_numbers = #tpu.dot_dimension_numbers<[1], [0], [0], [1], [0, 0, 1, 1], [], []>} : vector<8x128xbf16>, vector<128x512xbf16>, vector<8x512xf32> -> vector<8x512xf32>
    %166 = arith.addf %162, %165 : vector<8x512xf32>
    %167 = vector.extract_strided_slice %166 {offsets = [0, 0], sizes = [8, 128], strides = [1, 1]} : vector<8x512xf32> to vector<8x128xf32>
    %168 = arith.negf %167 : vector<8x128xf32>
    %169 = math.exp %168 : vector<8x128xf32>
    %cst_56 = arith.constant 1.000000e+00 : f32
    %170 = vector.broadcast %cst_56 : f32 to vector<8x128xf32>
    %171 = arith.addf %170, %169 : vector<8x128xf32>
    %172 = arith.divf %170, %171 : vector<8x128xf32>
    %173 = vector.extract_strided_slice %166 {offsets = [0, 128], sizes = [8, 128], strides = [1, 1]} : vector<8x512xf32> to vector<8x128xf32>
    %174 = arith.negf %173 : vector<8x128xf32>
    %175 = math.exp %174 : vector<8x128xf32>
    %cst_57 = arith.constant 1.000000e+00 : f32
    %176 = vector.broadcast %cst_57 : f32 to vector<8x128xf32>
    %177 = arith.addf %176, %175 : vector<8x128xf32>
    %178 = arith.divf %176, %177 : vector<8x128xf32>
    %179 = vector.extract_strided_slice %166 {offsets = [0, 256], sizes = [8, 128], strides = [1, 1]} : vector<8x512xf32> to vector<8x128xf32>
    %180 = math.tanh %179 : vector<8x128xf32>
    %181 = vector.extract_strided_slice %166 {offsets = [0, 384], sizes = [8, 128], strides = [1, 1]} : vector<8x512xf32> to vector<8x128xf32>
    %182 = arith.negf %181 : vector<8x128xf32>
    %183 = math.exp %182 : vector<8x128xf32>
    %cst_58 = arith.constant 1.000000e+00 : f32
    %184 = vector.broadcast %cst_58 : f32 to vector<8x128xf32>
    %185 = arith.addf %184, %183 : vector<8x128xf32>
    %186 = arith.divf %184, %185 : vector<8x128xf32>
    %187 = arith.mulf %178, %154 : vector<8x128xf32>
    %188 = arith.mulf %172, %180 : vector<8x128xf32>
    %189 = arith.addf %187, %188 : vector<8x128xf32>
    %190 = math.tanh %189 : vector<8x128xf32>
    %191 = arith.mulf %186, %190 : vector<8x128xf32>
    %192 = arith.index_cast %160 : i32 to index
    %c0_59 = arith.constant 0 : index
    %193 = vector.load %arg11[%192, %c0_59] : memref<64x128xf32, #tpu.memory_space<vmem>>, vector<8x128xf32>
    tpu.vector_store %arg11[%192, %c0_59], %191 {strides = array<i32>} : memref<64x128xf32, #tpu.memory_space<vmem>>, vector<8x128xf32>,
    %c5_i32 = arith.constant 5 : i32
    %c8_i32_60 = arith.constant 8 : i32
    %194 = arith.muli %c5_i32, %c8_i32_60 : i32
    %195 = tpu.assume_multiple %194, 8 : i32
    %196 = arith.index_cast %195 : i32 to index
    %c0_61 = arith.constant 0 : index
    %197 = vector.load %arg10[%196, %c0_61] : memref<64x512xf32, #tpu.memory_space<vmem>>, vector<8x512xf32>
    %198 = arith.truncf %191 : vector<8x128xf32> to vector<8x128xbf16>
    %c0_62 = arith.constant 0 : index
    %c0_63 = arith.constant 0 : index
    %199 = vector.load %arg5[%c0_62, %c0_63] : memref<128x512xbf16, #tpu.memory_space<vmem>>, vector<128x512xbf16>
    %cst_64 = arith.constant dense<0.000000e+00> : vector<8x512xf32>
    %200 = tpu.matmul %198, %199, %cst_64 {dimension_numbers = #tpu.dot_dimension_numbers<[1], [0], [0], [1], [0, 0, 1, 1], [], []>} : vector<8x128xbf16>, vector<128x512xbf16>, vector<8x512xf32> -> vector<8x512xf32>
    %201 = arith.addf %197, %200 : vector<8x512xf32>
    %202 = vector.extract_strided_slice %201 {offsets = [0, 0], sizes = [8, 128], strides = [1, 1]} : vector<8x512xf32> to vector<8x128xf32>
    %203 = arith.negf %202 : vector<8x128xf32>
    %204 = math.exp %203 : vector<8x128xf32>
    %cst_65 = arith.constant 1.000000e+00 : f32
    %205 = vector.broadcast %cst_65 : f32 to vector<8x128xf32>
    %206 = arith.addf %205, %204 : vector<8x128xf32>
    %207 = arith.divf %205, %206 : vector<8x128xf32>
    %208 = vector.extract_strided_slice %201 {offsets = [0, 128], sizes = [8, 128], strides = [1, 1]} : vector<8x512xf32> to vector<8x128xf32>
    %209 = arith.negf %208 : vector<8x128xf32>
    %210 = math.exp %209 : vector<8x128xf32>
    %cst_66 = arith.constant 1.000000e+00 : f32
    %211 = vector.broadcast %cst_66 : f32 to vector<8x128xf32>
    %212 = arith.addf %211, %210 : vector<8x128xf32>
    %213 = arith.divf %211, %212 : vector<8x128xf32>
    %214 = vector.extract_strided_slice %201 {offsets = [0, 256], sizes = [8, 128], strides = [1, 1]} : vector<8x512xf32> to vector<8x128xf32>
    %215 = math.tanh %214 : vector<8x128xf32>
    %216 = vector.extract_strided_slice %201 {offsets = [0, 384], sizes = [8, 128], strides = [1, 1]} : vector<8x512xf32> to vector<8x128xf32>
    %217 = arith.negf %216 : vector<8x128xf32>
    %218 = math.exp %217 : vector<8x128xf32>
    %cst_67 = arith.constant 1.000000e+00 : f32
    %219 = vector.broadcast %cst_67 : f32 to vector<8x128xf32>
    %220 = arith.addf %219, %218 : vector<8x128xf32>
    %221 = arith.divf %219, %220 : vector<8x128xf32>
    %222 = arith.mulf %213, %189 : vector<8x128xf32>
    %223 = arith.mulf %207, %215 : vector<8x128xf32>
    %224 = arith.addf %222, %223 : vector<8x128xf32>
    %225 = math.tanh %224 : vector<8x128xf32>
    %226 = arith.mulf %221, %225 : vector<8x128xf32>
    %227 = arith.index_cast %195 : i32 to index
    %c0_68 = arith.constant 0 : index
    %228 = vector.load %arg11[%227, %c0_68] : memref<64x128xf32, #tpu.memory_space<vmem>>, vector<8x128xf32>
    tpu.vector_store %arg11[%227, %c0_68], %226 {strides = array<i32>} : memref<64x128xf32, #tpu.memory_space<vmem>>, vector<8x128xf32>,
    %c6_i32 = arith.constant 6 : i32
    %c8_i32_69 = arith.constant 8 : i32
    %229 = arith.muli %c6_i32, %c8_i32_69 : i32
    %230 = tpu.assume_multiple %229, 8 : i32
    %231 = arith.index_cast %230 : i32 to index
    %c0_70 = arith.constant 0 : index
    %232 = vector.load %arg10[%231, %c0_70] : memref<64x512xf32, #tpu.memory_space<vmem>>, vector<8x512xf32>
    %233 = arith.truncf %226 : vector<8x128xf32> to vector<8x128xbf16>
    %c0_71 = arith.constant 0 : index
    %c0_72 = arith.constant 0 : index
    %234 = vector.load %arg5[%c0_71, %c0_72] : memref<128x512xbf16, #tpu.memory_space<vmem>>, vector<128x512xbf16>
    %cst_73 = arith.constant dense<0.000000e+00> : vector<8x512xf32>
    %235 = tpu.matmul %233, %234, %cst_73 {dimension_numbers = #tpu.dot_dimension_numbers<[1], [0], [0], [1], [0, 0, 1, 1], [], []>} : vector<8x128xbf16>, vector<128x512xbf16>, vector<8x512xf32> -> vector<8x512xf32>
    %236 = arith.addf %232, %235 : vector<8x512xf32>
    %237 = vector.extract_strided_slice %236 {offsets = [0, 0], sizes = [8, 128], strides = [1, 1]} : vector<8x512xf32> to vector<8x128xf32>
    %238 = arith.negf %237 : vector<8x128xf32>
    %239 = math.exp %238 : vector<8x128xf32>
    %cst_74 = arith.constant 1.000000e+00 : f32
    %240 = vector.broadcast %cst_74 : f32 to vector<8x128xf32>
    %241 = arith.addf %240, %239 : vector<8x128xf32>
    %242 = arith.divf %240, %241 : vector<8x128xf32>
    %243 = vector.extract_strided_slice %236 {offsets = [0, 128], sizes = [8, 128], strides = [1, 1]} : vector<8x512xf32> to vector<8x128xf32>
    %244 = arith.negf %243 : vector<8x128xf32>
    %245 = math.exp %244 : vector<8x128xf32>
    %cst_75 = arith.constant 1.000000e+00 : f32
    %246 = vector.broadcast %cst_75 : f32 to vector<8x128xf32>
    %247 = arith.addf %246, %245 : vector<8x128xf32>
    %248 = arith.divf %246, %247 : vector<8x128xf32>
    %249 = vector.extract_strided_slice %236 {offsets = [0, 256], sizes = [8, 128], strides = [1, 1]} : vector<8x512xf32> to vector<8x128xf32>
    %250 = math.tanh %249 : vector<8x128xf32>
    %251 = vector.extract_strided_slice %236 {offsets = [0, 384], sizes = [8, 128], strides = [1, 1]} : vector<8x512xf32> to vector<8x128xf32>
    %252 = arith.negf %251 : vector<8x128xf32>
    %253 = math.exp %252 : vector<8x128xf32>
    %cst_76 = arith.constant 1.000000e+00 : f32
    %254 = vector.broadcast %cst_76 : f32 to vector<8x128xf32>
    %255 = arith.addf %254, %253 : vector<8x128xf32>
    %256 = arith.divf %254, %255 : vector<8x128xf32>
    %257 = arith.mulf %248, %224 : vector<8x128xf32>
    %258 = arith.mulf %242, %250 : vector<8x128xf32>
    %259 = arith.addf %257, %258 : vector<8x128xf32>
    %260 = math.tanh %259 : vector<8x128xf32>
    %261 = arith.mulf %256, %260 : vector<8x128xf32>
    %262 = arith.index_cast %230 : i32 to index
    %c0_77 = arith.constant 0 : index
    %263 = vector.load %arg11[%262, %c0_77] : memref<64x128xf32, #tpu.memory_space<vmem>>, vector<8x128xf32>
    tpu.vector_store %arg11[%262, %c0_77], %261 {strides = array<i32>} : memref<64x128xf32, #tpu.memory_space<vmem>>, vector<8x128xf32>,
    %c7_i32 = arith.constant 7 : i32
    %c8_i32_78 = arith.constant 8 : i32
    %264 = arith.muli %c7_i32, %c8_i32_78 : i32
    %265 = tpu.assume_multiple %264, 8 : i32
    %266 = arith.index_cast %265 : i32 to index
    %c0_79 = arith.constant 0 : index
    %267 = vector.load %arg10[%266, %c0_79] : memref<64x512xf32, #tpu.memory_space<vmem>>, vector<8x512xf32>
    %268 = arith.truncf %261 : vector<8x128xf32> to vector<8x128xbf16>
    %c0_80 = arith.constant 0 : index
    %c0_81 = arith.constant 0 : index
    %269 = vector.load %arg5[%c0_80, %c0_81] : memref<128x512xbf16, #tpu.memory_space<vmem>>, vector<128x512xbf16>
    %cst_82 = arith.constant dense<0.000000e+00> : vector<8x512xf32>
    %270 = tpu.matmul %268, %269, %cst_82 {dimension_numbers = #tpu.dot_dimension_numbers<[1], [0], [0], [1], [0, 0, 1, 1], [], []>} : vector<8x128xbf16>, vector<128x512xbf16>, vector<8x512xf32> -> vector<8x512xf32>
    %271 = arith.addf %267, %270 : vector<8x512xf32>
    %272 = vector.extract_strided_slice %271 {offsets = [0, 0], sizes = [8, 128], strides = [1, 1]} : vector<8x512xf32> to vector<8x128xf32>
    %273 = arith.negf %272 : vector<8x128xf32>
    %274 = math.exp %273 : vector<8x128xf32>
    %cst_83 = arith.constant 1.000000e+00 : f32
    %275 = vector.broadcast %cst_83 : f32 to vector<8x128xf32>
    %276 = arith.addf %275, %274 : vector<8x128xf32>
    %277 = arith.divf %275, %276 : vector<8x128xf32>
    %278 = vector.extract_strided_slice %271 {offsets = [0, 128], sizes = [8, 128], strides = [1, 1]} : vector<8x512xf32> to vector<8x128xf32>
    %279 = arith.negf %278 : vector<8x128xf32>
    %280 = math.exp %279 : vector<8x128xf32>
    %cst_84 = arith.constant 1.000000e+00 : f32
    %281 = vector.broadcast %cst_84 : f32 to vector<8x128xf32>
    %282 = arith.addf %281, %280 : vector<8x128xf32>
    %283 = arith.divf %281, %282 : vector<8x128xf32>
    %284 = vector.extract_strided_slice %271 {offsets = [0, 256], sizes = [8, 128], strides = [1, 1]} : vector<8x512xf32> to vector<8x128xf32>
    %285 = math.tanh %284 : vector<8x128xf32>
    %286 = vector.extract_strided_slice %271 {offsets = [0, 384], sizes = [8, 128], strides = [1, 1]} : vector<8x512xf32> to vector<8x128xf32>
    %287 = arith.negf %286 : vector<8x128xf32>
    %288 = math.exp %287 : vector<8x128xf32>
    %cst_85 = arith.constant 1.000000e+00 : f32
    %289 = vector.broadcast %cst_85 : f32 to vector<8x128xf32>
    %290 = arith.addf %289, %288 : vector<8x128xf32>
    %291 = arith.divf %289, %290 : vector<8x128xf32>
    %292 = arith.mulf %283, %259 : vector<8x128xf32>
    %293 = arith.mulf %277, %285 : vector<8x128xf32>
    %294 = arith.addf %292, %293 : vector<8x128xf32>
    %295 = math.tanh %294 : vector<8x128xf32>
    %296 = arith.mulf %291, %295 : vector<8x128xf32>
    %297 = arith.index_cast %265 : i32 to index
    %c0_86 = arith.constant 0 : index
    %298 = vector.load %arg11[%297, %c0_86] : memref<64x128xf32, #tpu.memory_space<vmem>>, vector<8x128xf32>
    tpu.vector_store %arg11[%297, %c0_86], %296 {strides = array<i32>} : memref<64x128xf32, #tpu.memory_space<vmem>>, vector<8x128xf32>,
    %c8_i32_87 = arith.constant 8 : i32
    %c0_88 = arith.constant 0 : index
    %c0_89 = arith.constant 0 : index
    %299 = vector.load %arg11[%c0_88, %c0_89] : memref<64x128xf32, #tpu.memory_space<vmem>>, vector<64x128xf32>
    %300 = arith.truncf %299 : vector<64x128xf32> to vector<64x128xbf16>
    %c0_90 = arith.constant 0 : index
    %c0_91 = arith.constant 0 : index
    %301 = vector.load %arg7[%c0_90, %c0_91] : memref<128x128xbf16, #tpu.memory_space<vmem>>, vector<128x128xbf16>
    %cst_92 = arith.constant dense<0.000000e+00> : vector<64x128xf32>
    %302 = tpu.matmul %300, %301, %cst_92 {dimension_numbers = #tpu.dot_dimension_numbers<[1], [0], [0], [1], [0, 0, 1, 1], [], []>} : vector<64x128xbf16>, vector<128x128xbf16>, vector<64x128xf32> -> vector<64x128xf32>
    %c0_93 = arith.constant 0 : index
    %c0_94 = arith.constant 0 : index
    %303 = vector.load %arg8[%c0_93, %c0_94] : memref<1x128xf32, #tpu.memory_space<vmem>>, vector<1x128xf32>
    %304 = vector.broadcast %303 : vector<1x128xf32> to vector<64x128xf32>
    %305 = arith.addf %302, %304 : vector<64x128xf32>
    %306 = arith.negf %305 : vector<64x128xf32>
    %307 = math.exp %306 : vector<64x128xf32>
    %cst_95 = arith.constant 1.000000e+00 : f32
    %308 = vector.broadcast %cst_95 : f32 to vector<64x128xf32>
    %309 = arith.addf %308, %307 : vector<64x128xf32>
    %310 = arith.divf %308, %309 : vector<64x128xf32>
    %311 = vector.shape_cast %310 : vector<64x128xf32> to vector<8x8x128xf32>
    %c0_96 = arith.constant 0 : index
    %c0_97 = arith.constant 0 : index
    %c0_98 = arith.constant 0 : index
    %312 = vector.load %arg9[%c0_96, %c0_97, %c0_98] : memref<8x8x128xf32, #tpu.memory_space<vmem>>, vector<8x8x128xf32>
    tpu.vector_store %arg9[%c0_96, %c0_97, %c0_98], %311 {strides = array<i32>} : memref<8x8x128xf32, #tpu.memory_space<vmem>>, vector<8x8x128xf32>,
    return
  }
  func.func @transform_0(%arg0: i32) -> (i32, i32, i32) {
    %c0_i32 = arith.constant 0 : i32
    %c0_i32_0 = arith.constant 0 : i32
    %c0_i32_1 = arith.constant 0 : i32
    return %c0_i32, %arg0, %c0_i32_0 : i32, i32, i32
  }
  func.func @transform_1(%arg0: i32) -> (i32, i32) {
    %c0_i32 = arith.constant 0 : i32
    %c0_i32_0 = arith.constant 0 : i32
    %c0_i32_1 = arith.constant 0 : i32
    return %c0_i32, %c0_i32_0 : i32, i32
  }
  func.func @transform_2(%arg0: i32) -> (i32, i32) {
    %c0_i32 = arith.constant 0 : i32
    %c0_i32_0 = arith.constant 0 : i32
    %c0_i32_1 = arith.constant 0 : i32
    return %c0_i32, %c0_i32_0 : i32, i32
  }
  func.func @transform_3(%arg0: i32) -> (i32, i32) {
    %c0_i32 = arith.constant 0 : i32
    %c0_i32_0 = arith.constant 0 : i32
    %c0_i32_1 = arith.constant 0 : i32
    return %c0_i32, %c0_i32_0 : i32, i32
  }
  func.func @transform_4(%arg0: i32) -> (i32, i32) {
    %c0_i32 = arith.constant 0 : i32
    %c0_i32_0 = arith.constant 0 : i32
    %c0_i32_1 = arith.constant 0 : i32
    return %c0_i32, %c0_i32_0 : i32, i32
  }
  func.func @transform_5(%arg0: i32) -> (i32, i32) {
    %c0_i32 = arith.constant 0 : i32
    %c0_i32_0 = arith.constant 0 : i32
    %c0_i32_1 = arith.constant 0 : i32
    return %c0_i32, %c0_i32_0 : i32, i32
  }
  func.func @transform_6(%arg0: i32) -> (i32, i32) {
    %c0_i32 = arith.constant 0 : i32
    %c0_i32_0 = arith.constant 0 : i32
    %c0_i32_1 = arith.constant 0 : i32
    return %c0_i32, %c0_i32_0 : i32, i32
  }
  func.func @transform_7(%arg0: i32) -> (i32, i32) {
    %c0_i32 = arith.constant 0 : i32
    %c0_i32_0 = arith.constant 0 : i32
    %c0_i32_1 = arith.constant 0 : i32
    return %c0_i32, %c0_i32_0 : i32, i32
  }
  func.func @transform_8(%arg0: i32) -> (i32, i32, i32) {
    %c0_i32 = arith.constant 0 : i32
    %c0_i32_0 = arith.constant 0 : i32
    %c0_i32_1 = arith.constant 0 : i32
    return %c0_i32, %arg0, %c0_i32_0 : i32, i32, i32
  }
}

</mosaic_0001>

<llo_original>
// kernel: tpu_custom_call.1
$region0: #{tpu_custom_call.1}
  #allocation0 [shape = 'u32[]', space=smem, size = 0x4, offset = 0x4, fixed_abs, tag = 'smem constant byte address 0x4 - core index']
  #allocation1 [shape = 'u32[144,128]{1,0:T(1,128)}', space=vmem, size = 0x12000, scoped, tag = 'internal scratch']
  #allocation2 [shape = 'f32[64,512]{1,0:T(8,128)}', space=vmem, size = 0x20000, scoped, tag = 'scratch operand']
  #allocation3 [shape = 'f32[64,128]{1,0:T(8,128)}', space=vmem, size = 0x8000, scoped, tag = 'scratch operand']
  %s0 = inlined_call_operand.hbm [shape: f32[8,8,8], index: 0, kind: input, shape index: {}]
  %s1 = inlined_call_operand.hbm [shape: bf16[8,128], index: 1, kind: input, shape index: {}]
  %s2 = inlined_call_operand.vmem [shape: f32[1,128], index: 2, kind: input, shape index: {}]
  %s3 = inlined_call_operand.hbm [shape: bf16[128,512], index: 3, kind: input, shape index: {}]
  %s4 = inlined_call_operand.hbm [shape: bf16[128,512], index: 4, kind: input, shape index: {}]
  %s5 = inlined_call_operand.vmem [shape: f32[1,512], index: 5, kind: input, shape index: {}]
  %s6 = inlined_call_operand.hbm [shape: bf16[128,128], index: 6, kind: input, shape index: {}]
  %s7 = inlined_call_operand.vmem [shape: f32[1,128], index: 7, kind: input, shape index: {}]
  %s8 = inlined_call_operand.hbm [shape: f32[8,8,128], index: 8, kind: output, shape index: {}]
  %s9 = sld [smem:[#allocation0]]
  $region62: #{tpu_custom_call.1} parent=0
    _
  %s11 = ssub.s32 1, %s9
  %s12 = scalar_select 0, %s11, %s9
  $region1: #{tpu_custom_call.1} parent=0
    #allocation4 [shape = 'u8[32768]{0}', space=vmem, size = 0x8000, scoped, tag = 'input window, operand 0, single buffered']
    #allocation5 [shape = 's32[1]{0}', space=sflag, size = 0x4, scoped, tag = 'scoped memory for tpu_custom_call.1']
    #allocation6 [shape = 's32[1]{0}', space=sflag, size = 0x4, scoped, tag = 'scoped memory for tpu_custom_call.1']
    #allocation7 [shape = 'u8[2048]{0}', space=vmem, size = 0x800, scoped, tag = 'input window, operand 1, single buffered']
    #allocation8 [shape = 's32[1]{0}', space=sflag, size = 0x4, scoped, tag = 'scoped memory for tpu_custom_call.1']
    #allocation9 [shape = 'u8[131072]{0}', space=vmem, size = 0x20000, scoped, tag = 'input window, operand 3, single buffered']
    #allocation10 [shape = 'u8[131072]{0}', space=vmem, size = 0x20000, scoped, tag = 'input window, operand 4, single buffered']
    #allocation11 [shape = 's32[1]{0}', space=sflag, size = 0x4, scoped, tag = 'scoped memory for tpu_custom_call.1']
    #allocation12 [shape = 'u8[32768]{0}', space=vmem, size = 0x8000, scoped, tag = 'input window, operand 6, single buffered']
    #allocation13 [shape = 'u8[32768]{0}', space=vmem, size = 0x8000, scoped, tag = 'output window, operand 0, single buffered']
    %13 = vsyncpa [#allocation5], 0
    %14 = vsyncpa [#allocation8], 0
    %15 = vsyncpa [#allocation11], 0
    %16 = vsyncpa [#allocation6], 0
    // Predicated region
    $region2: #{tpu_custom_call.1} parent=1 // pred_check
      _
    $region3: #{tpu_custom_call.1} parent=1 // pred_check_branch
      %18 = sbr.rel (0) target = $region5
    $region4: #{tpu_custom_call.1} parent=1 // pred_region
      %s20 = ssub.s32 1024, 1024
      %21 = vsyncadd [#allocation5], %s20
      %s22 = sshll.u32 [#allocation4], 4
      %s23 = int_to_ptr.vmem [resolvable:$true] %s22
      %28 = dma.hbm_to_vmem [thread:$0]  %s0, 1024, %s23, [#allocation5], 128, 128, 8
    $region5: #{tpu_custom_call.1} parent=1 // pred_fallthru
      _
    // Predicated region
    $region6: #{tpu_custom_call.1} parent=1 // pred_check
      _
    $region7: #{tpu_custom_call.1} parent=1 // pred_check_branch
      %30 = sbr.rel (0) target = $region9
    $region8: #{tpu_custom_call.1} parent=1 // pred_region
      %s32 = ssub.s32 64, 64
      %33 = vsyncadd [#allocation8], %s32
      %s35 = sshll.u32 [#allocation7], 4
      %s36 = int_to_ptr.vmem [resolvable:$true] %s35
      %38 = dma.hbm_to_vmem [thread:$0]  %s1, 64, %s36, [#allocation8]
    $region9: #{tpu_custom_call.1} parent=1 // pred_fallthru
      _
    // Predicated region
    $region10: #{tpu_custom_call.1} parent=1 // pred_check
      _
    $region11: #{tpu_custom_call.1} parent=1 // pred_check_branch
      %40 = sbr.rel (0) target = $region13
    $region12: #{tpu_custom_call.1} parent=1 // pred_region
      _
    $region13: #{tpu_custom_call.1} parent=1 // pred_fallthru
      _
    // Predicated region
    $region14: #{tpu_custom_call.1} parent=1 // pred_check
      _
    $region15: #{tpu_custom_call.1} parent=1 // pred_check_branch
      %42 = sbr.rel (0) target = $region17
    $region16: #{tpu_custom_call.1} parent=1 // pred_region
      %s44 = ssub.s32 4096, 4096
      %45 = vsyncadd [#allocation8], %s44
      %s46 = sshll.u32 [#allocation9], 4
      %s47 = int_to_ptr.vmem [resolvable:$true] %s46
      %52 = dma.hbm_to_vmem [thread:$0]  %s3, 4096, %s47, [#allocation8], 256, 256, 16
    $region17: #{tpu_custom_call.1} parent=1 // pred_fallthru
      _
    // Predicated region
    $region18: #{tpu_custom_call.1} parent=1 // pred_check
      _
    $region19: #{tpu_custom_call.1} parent=1 // pred_check_branch
      %54 = sbr.rel (0) target = $region21
    $region20: #{tpu_custom_call.1} parent=1 // pred_region
      %s56 = ssub.s32 4096, 4096
      %57 = vsyncadd [#allocation11], %s56
      %s58 = sshll.u32 [#allocation10], 4
      %s59 = int_to_ptr.vmem [resolvable:$true] %s58
      %64 = dma.hbm_to_vmem [thread:$0]  %s4, 4096, %s59, [#allocation11], 256, 256, 16
    $region21: #{tpu_custom_call.1} parent=1 // pred_fallthru
      _
    // Predicated region
    $region22: #{tpu_custom_call.1} parent=1 // pred_check
      _
    $region23: #{tpu_custom_call.1} parent=1 // pred_check_branch
      %66 = sbr.rel (0) target = $region25
    $region24: #{tpu_custom_call.1} parent=1 // pred_region
      _
    $region25: #{tpu_custom_call.1} parent=1 // pred_fallthru
      _
    // Predicated region
    $region26: #{tpu_custom_call.1} parent=1 // pred_check
      _
    $region27: #{tpu_custom_call.1} parent=1 // pred_check_branch
      %68 = sbr.rel (0) target = $region29
    $region28: #{tpu_custom_call.1} parent=1 // pred_region
      %s70 = ssub.s32 1024, 1024
      %71 = vsyncadd [#allocation11], %s70
      %s72 = sshll.u32 [#allocation12], 4
      %s73 = int_to_ptr.vmem [resolvable:$true] %s72
      %78 = dma.hbm_to_vmem [thread:$0]  %s6, 1024, %s73, [#allocation11], 64, 64, 4
    $region29: #{tpu_custom_call.1} parent=1 // pred_fallthru
      _
    // Predicated region
    $region30: #{tpu_custom_call.1} parent=1 // pred_check
      _
    $region31: #{tpu_custom_call.1} parent=1 // pred_check_branch
      %80 = sbr.rel (0) target = $region33
    $region32: #{tpu_custom_call.1} parent=1 // pred_region
      _
    $region33: #{tpu_custom_call.1} parent=1 // pred_fallthru
      _
    // Predicated region
    $region34: #{tpu_custom_call.1} parent=1 // pred_check
      _
    $region35: #{tpu_custom_call.1} parent=1 // pred_check_branch
      %82 = sbr.rel (0) target = $region37
    $region36: #{tpu_custom_call.1} parent=1 // pred_region
      %83 = dma.done [#allocation5], 1024
    $region37: #{tpu_custom_call.1} parent=1 // pred_fallthru
      _
    // Predicated region
    $region38: #{tpu_custom_call.1} parent=1 // pred_check
      _
    $region39: #{tpu_custom_call.1} parent=1 // pred_check_branch
      %85 = sbr.rel (0) target = $region41
    $region40: #{tpu_custom_call.1} parent=1 // pred_region
      %86 = dma.done [#allocation8], 64
    $region41: #{tpu_custom_call.1} parent=1 // pred_fallthru
      _
    // Predicated region
    $region42: #{tpu_custom_call.1} parent=1 // pred_check
      _
    $region43: #{tpu_custom_call.1} parent=1 // pred_check_branch
      %88 = sbr.rel (0) target = $region45
    $region44: #{tpu_custom_call.1} parent=1 // pred_region
      %89 = dma.done [#allocation8], 4096
    $region45: #{tpu_custom_call.1} parent=1 // pred_fallthru
      _
    // Predicated region
    $region46: #{tpu_custom_call.1} parent=1 // pred_check
      _
    $region47: #{tpu_custom_call.1} parent=1 // pred_check_branch
      %91 = sbr.rel (0) target = $region49
    $region48: #{tpu_custom_call.1} parent=1 // pred_region
      %92 = dma.done [#allocation11], 4096
    $region49: #{tpu_custom_call.1} parent=1 // pred_fallthru
      _
    // Predicated region
    $region50: #{tpu_custom_call.1} parent=1 // pred_check
      _
    $region51: #{tpu_custom_call.1} parent=1 // pred_check_branch
      %94 = sbr.rel (0) target = $region53
    $region52: #{tpu_custom_call.1} parent=1 // pred_region
      %95 = dma.done [#allocation11], 1024
    $region53: #{tpu_custom_call.1} parent=1 // pred_fallthru
      _
    %v97 = vld [vmem:[#allocation4] sm:$0xff]
    %v98 = vld [vmem:[#allocation4 + $0x8] sm:$0xff]
    %v99 = vld [vmem:[#allocation4 + $0x10] sm:$0xff]
    %v100 = vld [vmem:[#allocation4 + $0x18] sm:$0xff]
    %v101 = vld [vmem:[#allocation4 + $0x20] sm:$0xff]
    %v102 = vld [vmem:[#allocation4 + $0x28] sm:$0xff]
    %v103 = vld [vmem:[#allocation4 + $0x30] sm:$0xff]
    %v104 = vld [vmem:[#allocation4 + $0x38] sm:$0xff]
    %v105 = vpack.c.bf16 %v98, %v97
    %v106 = vpack.c.bf16 %v100, %v99
    %v107 = vpack.c.bf16 %v102, %v101
    %v108 = vpack.c.bf16 %v104, %v103
    %v109 = vld [vmem:[#allocation7] sm:$0xf]
    %v110 = vld [vmem:[%s2] sm:$0x1]
    %v112 = vlaneseq
    %v113 = vshrl.u32 %v112, 7
    %v114 = vsub.s32 0, %v113
    %v115 = vrot.slane %v110, %v114
    %vm117 = vcmask 64512
    %v119 = vsel %vm117, %v105, 0
    %v122 = vsel %vm117, %v106, 0
    %v125 = vsel %vm117, %v107, 0
    %v128 = vsel %vm117, %v108, 0
    %vm130 = vcmask 1043456
    %v132 = vsel %vm130, %v109, 0
    %134 = vmatprep.subr.bf16.mxu0 0
    %135 = vmatpush1.bf16.msra.mxu0 %v132
    %136 = vmatprep.subr.bf16.mxu0 0
    %137 = vmatpush1.bf16.msra.mxu0 0
    %138 = vmatprep.subr.bf16.mxu0 0
    %139 = vmatpush1.bf16.msra.mxu0 0
    %140 = vmatprep.subr.bf16.mxu0 0
    %141 = vmatpush1.bf16.msra.mxu0 0
    %142 = vmatprep.subr.bf16.mxu0 0
    %143 = vmatpush1.bf16.msra.mxu0 0
    %144 = vmatprep.subr.bf16.mxu0 0
    %145 = vmatpush1.bf16.msra.mxu0 0
    %146 = vmatprep.subr.bf16.mxu0 0
    %147 = vmatpush1.bf16.msra.mxu0 0
    %148 = vmatprep.subr.bf16.mxu0 0
    %149 = vmatpush1.bf16.msra.mxu0 0
    %150 = vmatprep.subr.bf16.mxu0 0
    %151 = vmatpush1.bf16.msra.mxu0 0
    %152 = vmatprep.subr.bf16.mxu0 0
    %153 = vmatpush1.bf16.msra.mxu0 0
    %154 = vmatprep.subr.bf16.mxu0 0
    %155 = vmatpush1.bf16.msra.mxu0 0
    %156 = vmatprep.subr.bf16.mxu0 0
    %157 = vmatpush1.bf16.msra.mxu0 0
    %158 = vmatprep.subr.bf16.mxu0 0
    %159 = vmatpush1.bf16.msra.mxu0 0
    %160 = vmatprep.subr.bf16.mxu0 0
    %161 = vmatpush1.bf16.msra.mxu0 0
    %162 = vmatprep.subr.bf16.mxu0 0
    %163 = vmatpush1.bf16.msra.mxu0 0
    %164 = vmatprep.subr.bf16.mxu0 0
    %165 = vmatpush1.bf16.msra.mxu0 0
    %166 = vmatprep.mubr.bf16.mxu0 0
    %167 = vmatmul.mubr.bf16.gmra.mrb[0].mxu0 %v119
    %v168 = vpop.f32.mrb[0].mxu0
    %v169 = vadd.f32 %v115, %v168
    %v170 = vpop.f32.mrb[0].mxu0
    %v171 = vpop.f32.mrb[0].mxu0
    %v172 = vadd.f32 %v115, %v171
    %v173 = vpop.f32.mrb[0].mxu0
    %174 = vmatprep.mubr.bf16.mxu0 0
    %175 = vmatmul.mubr.bf16.gmra.mrb[0].mxu0 %v122
    %v176 = vpop.f32.mrb[0].mxu0
    %v177 = vadd.f32 %v115, %v176
    %v178 = vpop.f32.mrb[0].mxu0
    %v179 = vpop.f32.mrb[0].mxu0
    %v180 = vadd.f32 %v115, %v179
    %v181 = vpop.f32.mrb[0].mxu0
    %182 = vmatprep.mubr.bf16.mxu0 0
    %183 = vmatmul.mubr.bf16.gmra.mrb[0].mxu0 %v125
    %v184 = vpop.f32.mrb[0].mxu0
    %v185 = vadd.f32 %v115, %v184
    %v186 = vpop.f32.mrb[0].mxu0
    %v187 = vpop.f32.mrb[0].mxu0
    %v188 = vadd.f32 %v115, %v187
    %v189 = vpop.f32.mrb[0].mxu0
    %190 = vmatprep.mubr.bf16.mxu0 0
    %191 = vmatmul.mubr.bf16.gmra.mrb[0].mxu0 %v128
    %v192 = vpop.f32.mrb[0].mxu0
    %v193 = vadd.f32 %v115, %v192
    %v194 = vpop.f32.mrb[0].mxu0
    %v195 = vpop.f32.mrb[0].mxu0
    %v196 = vadd.f32 %v115, %v195
    %v197 = vpop.f32.mrb[0].mxu0
    %198 = vdwg.mxu0
    %v199 = vmax.f32 %v169, 0.0
    %v200 = vmax.f32 %v172, 0.0
    %v201 = vmax.f32 %v177, 0.0
    %v202 = vmax.f32 %v180, 0.0
    %v203 = vmax.f32 %v185, 0.0
    %v204 = vmax.f32 %v188, 0.0
    %v205 = vmax.f32 %v193, 0.0
    %v206 = vmax.f32 %v196, 0.0
    %v207 = vpack.c.bf16 %v200, %v199
    %v208 = vpack.c.bf16 %v202, %v201
    %v209 = vpack.c.bf16 %v204, %v203
    %v210 = vpack.c.bf16 %v206, %v205
    %v211 = vld [vmem:[#allocation9] sm:$0xff]
    %v212 = vld [vmem:[#allocation9 + $0x8] sm:$0xff]
    %v213 = vld [vmem:[#allocation9 + $0x10] sm:$0xff]
    %v214 = vld [vmem:[#allocation9 + $0x18] sm:$0xff]
    %v215 = vld [vmem:[#allocation9 + $0x20] sm:$0xff]
    %v216 = vld [vmem:[#allocation9 + $0x28] sm:$0xff]
    %v217 = vld [vmem:[#allocation9 + $0x30] sm:$0xff]
    %v218 = vld [vmem:[#allocation9 + $0x38] sm:$0xff]
    %v219 = vld [vmem:[#allocation9 + $0x40] sm:$0xff]
    %v220 = vld [vmem:[#allocation9 + $0x48] sm:$0xff]
    %v221 = vld [vmem:[#allocation9 + $0x50] sm:$0xff]
    %v222 = vld [vmem:[#allocation9 + $0x58] sm:$0xff]
    %v223 = vld [vmem:[#allocation9 + $0x60] sm:$0xff]
    %v224 = vld [vmem:[#allocation9 + $0x68] sm:$0xff]
    %v225 = vld [vmem:[#allocation9 + $0x70] sm:$0xff]
    %v226 = vld [vmem:[#allocation9 + $0x78] sm:$0xff]
    %v227 = vld [vmem:[#allocation9 + $0x80] sm:$0xff]
    %v228 = vld [vmem:[#allocation9 + $0x88] sm:$0xff]
    %v229 = vld [vmem:[#allocation9 + $0x90] sm:$0xff]
    %v230 = vld [vmem:[#allocation9 + $0x98] sm:$0xff]
    %v231 = vld [vmem:[#allocation9 + $0xa0] sm:$0xff]
    %v232 = vld [vmem:[#allocation9 + $0xa8] sm:$0xff]
    %v233 = vld [vmem:[#allocation9 + $0xb0] sm:$0xff]
    %v234 = vld [vmem:[#allocation9 + $0xb8] sm:$0xff]
    %v235 = vld [vmem:[#allocation9 + $0xc0] sm:$0xff]
    %v236 = vld [vmem:[#allocation9 + $0xc8] sm:$0xff]
    %v237 = vld [vmem:[#allocation9 + $0xd0] sm:$0xff]
    %v238 = vld [vmem:[#allocation9 + $0xd8] sm:$0xff]
    %v239 = vld [vmem:[#allocation9 + $0xe0] sm:$0xff]
    %v240 = vld [vmem:[#allocation9 + $0xe8] sm:$0xff]
    %v241 = vld [vmem:[#allocation9 + $0xf0] sm:$0xff]
    %v242 = vld [vmem:[#allocation9 + $0xf8] sm:$0xff]
    %v243 = vld [vmem:[%s5] sm:$0xf]
    %v245 = vlaneseq
    %v246 = vshrl.u32 %v245, 7
    %v247 = vsub.s32 0, %v246
    %v248 = vrot.slane %v243, %v247
    %v249 = vlaneseq
    %v250 = vshrl.u32 %v249, 7
    %v251 = vsub.s32 1, %v250
    %v252 = vrot.slane %v243, %v251
    %v253 = vlaneseq
    %v254 = vshrl.u32 %v253, 7
    %v255 = vsub.s32 2, %v254
    %v256 = vrot.slane %v243, %v255
    %v257 = vlaneseq
    %v258 = vshrl.u32 %v257, 7
    %v259 = vsub.s32 3, %v258
    %v260 = vrot.slane %v243, %v259
    %v297 = vunpack.c.l.b16 %v211
    %v298 = vunpack.c.h.b16 %v211
    %v299 = vunpack.c.l.b16 %v212
    %v300 = vunpack.c.h.b16 %v212
    %v301 = vunpack.c.l.b16 %v213
    %v302 = vunpack.c.h.b16 %v213
    %v303 = vunpack.c.l.b16 %v214
    %v304 = vunpack.c.h.b16 %v214
    %v305 = vunpack.c.l.b16 %v215
    %v306 = vunpack.c.h.b16 %v215
    %v307 = vunpack.c.l.b16 %v216
    %v308 = vunpack.c.h.b16 %v216
    %v309 = vunpack.c.l.b16 %v217
    %v310 = vunpack.c.h.b16 %v217
    %v311 = vunpack.c.l.b16 %v218
    %v312 = vunpack.c.h.b16 %v218
    %v313 = vunpack.c.l.b16 %v219
    %v314 = vunpack.c.h.b16 %v219
    %v315 = vunpack.c.l.b16 %v220
    %v316 = vunpack.c.h.b16 %v220
    %v317 = vunpack.c.l.b16 %v221
    %v318 = vunpack.c.h.b16 %v221
    %v319 = vunpack.c.l.b16 %v222
    %v320 = vunpack.c.h.b16 %v222
    %v321 = vunpack.c.l.b16 %v223
    %v322 = vunpack.c.h.b16 %v223
    %v323 = vunpack.c.l.b16 %v224
    %v324 = vunpack.c.h.b16 %v224
    %v325 = vunpack.c.l.b16 %v225
    %v326 = vunpack.c.h.b16 %v225
    %v327 = vunpack.c.l.b16 %v226
    %v328 = vunpack.c.h.b16 %v226
    %v329 = vunpack.c.l.b16 %v227
    %v330 = vunpack.c.h.b16 %v227
    %v331 = vunpack.c.l.b16 %v228
    %v332 = vunpack.c.h.b16 %v228
    %v333 = vunpack.c.l.b16 %v229
    %v334 = vunpack.c.h.b16 %v229
    %v335 = vunpack.c.l.b16 %v230
    %v336 = vunpack.c.h.b16 %v230
    %v337 = vunpack.c.l.b16 %v231
    %v338 = vunpack.c.h.b16 %v231
    %v339 = vunpack.c.l.b16 %v232
    %v340 = vunpack.c.h.b16 %v232
    %v341 = vunpack.c.l.b16 %v233
    %v342 = vunpack.c.h.b16 %v233
    %v343 = vunpack.c.l.b16 %v234
    %v344 = vunpack.c.h.b16 %v234
    %v345 = vunpack.c.l.b16 %v235
    %v346 = vunpack.c.h.b16 %v235
    %v347 = vunpack.c.l.b16 %v236
    %v348 = vunpack.c.h.b16 %v236
    %v349 = vunpack.c.l.b16 %v237
    %v350 = vunpack.c.h.b16 %v237
    %v351 = vunpack.c.l.b16 %v238
    %v352 = vunpack.c.h.b16 %v238
    %v353 = vunpack.c.l.b16 %v239
    %v354 = vunpack.c.h.b16 %v239
    %v355 = vunpack.c.l.b16 %v240
    %v356 = vunpack.c.h.b16 %v240
    %v357 = vunpack.c.l.b16 %v241
    %v358 = vunpack.c.h.b16 %v241
    %v359 = vunpack.c.l.b16 %v242
    %v360 = vunpack.c.h.b16 %v242
    %v361 = vpack.c.b16 %v301, %v297
    %v362 = vpack.c.b16 %v302, %v298
    %v363 = vpack.c.b16 %v303, %v299
    %v364 = vpack.c.b16 %v304, %v300
    %v365 = vpack.c.b16 %v309, %v305
    %v366 = vpack.c.b16 %v310, %v306
    %v367 = vpack.c.b16 %v311, %v307
    %v368 = vpack.c.b16 %v312, %v308
    %v369 = vpack.c.b16 %v317, %v313
    %v370 = vpack.c.b16 %v318, %v314
    %v371 = vpack.c.b16 %v319, %v315
    %v372 = vpack.c.b16 %v320, %v316
    %v373 = vpack.c.b16 %v325, %v321
    %v374 = vpack.c.b16 %v326, %v322
    %v375 = vpack.c.b16 %v327, %v323
    %v376 = vpack.c.b16 %v328, %v324
    %v377 = vpack.c.b16 %v333, %v329
    %v378 = vpack.c.b16 %v334, %v330
    %v379 = vpack.c.b16 %v335, %v331
    %v380 = vpack.c.b16 %v336, %v332
    %v381 = vpack.c.b16 %v341, %v337
    %v382 = vpack.c.b16 %v342, %v338
    %v383 = vpack.c.b16 %v343, %v339
    %v384 = vpack.c.b16 %v344, %v340
    %v385 = vpack.c.b16 %v349, %v345
    %v386 = vpack.c.b16 %v350, %v346
    %v387 = vpack.c.b16 %v351, %v347
    %v388 = vpack.c.b16 %v352, %v348
    %v389 = vpack.c.b16 %v357, %v353
    %v390 = vpack.c.b16 %v358, %v354
    %v391 = vpack.c.b16 %v359, %v355
    %v392 = vpack.c.b16 %v360, %v356
    %425 = vmatprep.subr.bf16.mxu0 %v362
    %426 = vmatpush1.bf16.msra.mxu0 %v361
    %427 = vmatprep.subr.bf16.mxu0 %v366
    %428 = vmatpush1.bf16.msra.mxu0 %v365
    %429 = vmatprep.subr.bf16.mxu0 %v370
    %430 = vmatpush1.bf16.msra.mxu0 %v369
    %431 = vmatprep.subr.bf16.mxu0 %v374
    %432 = vmatpush1.bf16.msra.mxu0 %v373
    %433 = vmatprep.subr.bf16.mxu0 %v378
    %434 = vmatpush1.bf16.msra.mxu0 %v377
    %435 = vmatprep.subr.bf16.mxu0 %v382
    %436 = vmatpush1.bf16.msra.mxu0 %v381
    %437 = vmatprep.subr.bf16.mxu0 %v386
    %438 = vmatpush1.bf16.msra.mxu0 %v385
    %439 = vmatprep.subr.bf16.mxu0 %v390
    %440 = vmatpush1.bf16.msra.mxu0 %v389
    %441 = vmatprep.subr.bf16.mxu0 0
    %442 = vmatpush1.bf16.msra.mxu0 0
    %443 = vmatprep.subr.bf16.mxu0 0
    %444 = vmatpush1.bf16.msra.mxu0 0
    %445 = vmatprep.subr.bf16.mxu0 0
    %446 = vmatpush1.bf16.msra.mxu0 0
    %447 = vmatprep.subr.bf16.mxu0 0
    %448 = vmatpush1.bf16.msra.mxu0 0
    %449 = vmatprep.subr.bf16.mxu0 0
    %450 = vmatpush1.bf16.msra.mxu0 0
    %451 = vmatprep.subr.bf16.mxu0 0
    %452 = vmatpush1.bf16.msra.mxu0 0
    %453 = vmatprep.subr.bf16.mxu0 0
    %454 = vmatpush1.bf16.msra.mxu0 0
    %455 = vmatprep.subr.bf16.mxu0 0
    %456 = vmatpush1.bf16.msra.mxu0 0
    %457 = vmatprep.mubr.bf16.mxu0 0
    %458 = vmatmul.mubr.bf16.gmra.mrb[0].mxu0 %v207
    %v459 = vpop.f32.mrb[0].mxu0
    %v460 = vadd.f32 %v248, %v459
    %v461 = vpop.f32.mrb[0].mxu0
    %v462 = vadd.f32 %v252, %v461
    %v463 = vpop.f32.mrb[0].mxu0
    %v464 = vadd.f32 %v248, %v463
    %v465 = vpop.f32.mrb[0].mxu0
    %v466 = vadd.f32 %v252, %v465
    %467 = vmatprep.mubr.bf16.mxu0 0
    %468 = vmatmul.mubr.bf16.gmra.mrb[0].mxu0 %v208
    %v469 = vpop.f32.mrb[0].mxu0
    %v470 = vadd.f32 %v248, %v469
    %v471 = vpop.f32.mrb[0].mxu0
    %v472 = vadd.f32 %v252, %v471
    %v473 = vpop.f32.mrb[0].mxu0
    %v474 = vadd.f32 %v248, %v473
    %v475 = vpop.f32.mrb[0].mxu0
    %v476 = vadd.f32 %v252, %v475
    %477 = vmatprep.mubr.bf16.mxu0 0
    %478 = vmatmul.mubr.bf16.gmra.mrb[0].mxu0 %v209
    %v479 = vpop.f32.mrb[0].mxu0
    %v480 = vadd.f32 %v248, %v479
    %v481 = vpop.f32.mrb[0].mxu0
    %v482 = vadd.f32 %v252, %v481
    %v483 = vpop.f32.mrb[0].mxu0
    %v484 = vadd.f32 %v248, %v483
    %v485 = vpop.f32.mrb[0].mxu0
    %v486 = vadd.f32 %v252, %v485
    %487 = vmatprep.mubr.bf16.mxu0 0
    %488 = vmatmul.mubr.bf16.gmra.mrb[0].mxu0 %v210
    %v489 = vpop.f32.mrb[0].mxu0
    %v490 = vadd.f32 %v248, %v489
    %v491 = vpop.f32.mrb[0].mxu0
    %v492 = vadd.f32 %v252, %v491
    %v493 = vpop.f32.mrb[0].mxu0
    %v494 = vadd.f32 %v248, %v493
    %v495 = vpop.f32.mrb[0].mxu0
    %v496 = vadd.f32 %v252, %v495
    %497 = vdwg.mxu0
    %498 = vmatprep.subr.bf16.mxu0 %v364
    %499 = vmatpush1.bf16.msra.mxu0 %v363
    %500 = vmatprep.subr.bf16.mxu0 %v368
    %501 = vmatpush1.bf16.msra.mxu0 %v367
    %502 = vmatprep.subr.bf16.mxu0 %v372
    %503 = vmatpush1.bf16.msra.mxu0 %v371
    %504 = vmatprep.subr.bf16.mxu0 %v376
    %505 = vmatpush1.bf16.msra.mxu0 %v375
    %506 = vmatprep.subr.bf16.mxu0 %v380
    %507 = vmatpush1.bf16.msra.mxu0 %v379
    %508 = vmatprep.subr.bf16.mxu0 %v384
    %509 = vmatpush1.bf16.msra.mxu0 %v383
    %510 = vmatprep.subr.bf16.mxu0 %v388
    %511 = vmatpush1.bf16.msra.mxu0 %v387
    %512 = vmatprep.subr.bf16.mxu0 %v392
    %513 = vmatpush1.bf16.msra.mxu0 %v391
    %514 = vmatprep.subr.bf16.mxu0 0
    %515 = vmatpush1.bf16.msra.mxu0 0
    %516 = vmatprep.subr.bf16.mxu0 0
    %517 = vmatpush1.bf16.msra.mxu0 0
    %518 = vmatprep.subr.bf16.mxu0 0
    %519 = vmatpush1.bf16.msra.mxu0 0
    %520 = vmatprep.subr.bf16.mxu0 0
    %521 = vmatpush1.bf16.msra.mxu0 0
    %522 = vmatprep.subr.bf16.mxu0 0
    %523 = vmatpush1.bf16.msra.mxu0 0
    %524 = vmatprep.subr.bf16.mxu0 0
    %525 = vmatpush1.bf16.msra.mxu0 0
    %526 = vmatprep.subr.bf16.mxu0 0
    %527 = vmatpush1.bf16.msra.mxu0 0
    %528 = vmatprep.subr.bf16.mxu0 0
    %529 = vmatpush1.bf16.msra.mxu0 0
    %530 = vmatprep.mubr.bf16.mxu0 0
    %531 = vmatmul.mubr.bf16.gmra.mrb[0].mxu0 %v207
    %v532 = vpop.f32.mrb[0].mxu0
    %v533 = vadd.f32 %v256, %v532
    %v534 = vpop.f32.mrb[0].mxu0
    %v535 = vadd.f32 %v260, %v534
    %v536 = vpop.f32.mrb[0].mxu0
    %v537 = vadd.f32 %v256, %v536
    %v538 = vpop.f32.mrb[0].mxu0
    %v539 = vadd.f32 %v260, %v538
    %540 = vmatprep.mubr.bf16.mxu0 0
    %541 = vmatmul.mubr.bf16.gmra.mrb[0].mxu0 %v208
    %v542 = vpop.f32.mrb[0].mxu0
    %v543 = vadd.f32 %v256, %v542
    %v544 = vpop.f32.mrb[0].mxu0
    %v545 = vadd.f32 %v260, %v544
    %v546 = vpop.f32.mrb[0].mxu0
    %v547 = vadd.f32 %v256, %v546
    %v548 = vpop.f32.mrb[0].mxu0
    %v549 = vadd.f32 %v260, %v548
    %550 = vmatprep.mubr.bf16.mxu0 0
    %551 = vmatmul.mubr.bf16.gmra.mrb[0].mxu0 %v209
    %v552 = vpop.f32.mrb[0].mxu0
    %v553 = vadd.f32 %v256, %v552
    %v554 = vpop.f32.mrb[0].mxu0
    %v555 = vadd.f32 %v260, %v554
    %v556 = vpop.f32.mrb[0].mxu0
    %v557 = vadd.f32 %v256, %v556
    %v558 = vpop.f32.mrb[0].mxu0
    %v559 = vadd.f32 %v260, %v558
    %560 = vmatprep.mubr.bf16.mxu0 0
    %561 = vmatmul.mubr.bf16.gmra.mrb[0].mxu0 %v210
    %v562 = vpop.f32.mrb[0].mxu0
    %v563 = vadd.f32 %v256, %v562
    %v564 = vpop.f32.mrb[0].mxu0
    %v565 = vadd.f32 %v260, %v564
    %v566 = vpop.f32.mrb[0].mxu0
    %v567 = vadd.f32 %v256, %v566
    %v568 = vpop.f32.mrb[0].mxu0
    %v569 = vadd.f32 %v260, %v568
    %570 = vdwg.mxu0
    %571 = vst [vmem:[#allocation2] sm:$0xff] %v460
    %572 = vst [vmem:[#allocation2 + $0x8] sm:$0xff] %v462
    %573 = vst [vmem:[#allocation2 + $0x10] sm:$0xff] %v533
    %574 = vst [vmem:[#allocation2 + $0x18] sm:$0xff] %v535
    %575 = vst [vmem:[#allocation2 + $0x20] sm:$0xff] %v464
    %576 = vst [vmem:[#allocation2 + $0x28] sm:$0xff] %v466
    %577 = vst [vmem:[#allocation2 + $0x30] sm:$0xff] %v537
    %578 = vst [vmem:[#allocation2 + $0x38] sm:$0xff] %v539
    %579 = vst [vmem:[#allocation2 + $0x40] sm:$0xff] %v470
    %580 = vst [vmem:[#allocation2 + $0x48] sm:$0xff] %v472
    %581 = vst [vmem:[#allocation2 + $0x50] sm:$0xff] %v543
    %582 = vst [vmem:[#allocation2 + $0x58] sm:$0xff] %v545
    %583 = vst [vmem:[#allocation2 + $0x60] sm:$0xff] %v474
    %584 = vst [vmem:[#allocation2 + $0x68] sm:$0xff] %v476
    %585 = vst [vmem:[#allocation2 + $0x70] sm:$0xff] %v547
    %586 = vst [vmem:[#allocation2 + $0x78] sm:$0xff] %v549
    %587 = vst [vmem:[#allocation2 + $0x80] sm:$0xff] %v480
    %588 = vst [vmem:[#allocation2 + $0x88] sm:$0xff] %v482
    %589 = vst [vmem:[#allocation2 + $0x90] sm:$0xff] %v553
    %590 = vst [vmem:[#allocation2 + $0x98] sm:$0xff] %v555
    %591 = vst [vmem:[#allocation2 + $0xa0] sm:$0xff] %v484
    %592 = vst [vmem:[#allocation2 + $0xa8] sm:$0xff] %v486
    %593 = vst [vmem:[#allocation2 + $0xb0] sm:$0xff] %v557
    %594 = vst [vmem:[#allocation2 + $0xb8] sm:$0xff] %v559
    %595 = vst [vmem:[#allocation2 + $0xc0] sm:$0xff] %v490
    %596 = vst [vmem:[#allocation2 + $0xc8] sm:$0xff] %v492
    %597 = vst [vmem:[#allocation2 + $0xd0] sm:$0xff] %v563
    %598 = vst [vmem:[#allocation2 + $0xd8] sm:$0xff] %v565
    %599 = vst [vmem:[#allocation2 + $0xe0] sm:$0xff] %v494
    %600 = vst [vmem:[#allocation2 + $0xe8] sm:$0xff] %v496
    %601 = vst [vmem:[#allocation2 + $0xf0] sm:$0xff] %v567
    %602 = vst [vmem:[#allocation2 + $0xf8] sm:$0xff] %v569
    %s603 = smul.u32 0, 4
    %s604 = smul.addr %s603, 8
    %s605 = scalar_lea.vmem [#allocation2], %s604
    %v606 = vld [vmem:[%s605] sm:$0xff]
    %v607 = vld [vmem:[%s605 + $0x8] sm:$0xff]
    %v608 = vld [vmem:[%s605 + $0x10] sm:$0xff]
    %v609 = vld [vmem:[%s605 + $0x18] sm:$0xff]
    %v610 = vld [vmem:[#allocation10] sm:$0xff]
    %v611 = vld [vmem:[#allocation10 + $0x8] sm:$0xff]
    %v612 = vld [vmem:[#allocation10 + $0x10] sm:$0xff]
    %v613 = vld [vmem:[#allocation10 + $0x18] sm:$0xff]
    %v614 = vld [vmem:[#allocation10 + $0x20] sm:$0xff]
    %v615 = vld [vmem:[#allocation10 + $0x28] sm:$0xff]
    %v616 = vld [vmem:[#allocation10 + $0x30] sm:$0xff]
    %v617 = vld [vmem:[#allocation10 + $0x38] sm:$0xff]
    %v618 = vld [vmem:[#allocation10 + $0x40] sm:$0xff]
    %v619 = vld [vmem:[#allocation10 + $0x48] sm:$0xff]
    %v620 = vld [vmem:[#allocation10 + $0x50] sm:$0xff]
    %v621 = vld [vmem:[#allocation10 + $0x58] sm:$0xff]
    %v622 = vld [vmem:[#allocation10 + $0x60] sm:$0xff]
    %v623 = vld [vmem:[#allocation10 + $0x68] sm:$0xff]
    %v624 = vld [vmem:[#allocation10 + $0x70] sm:$0xff]
    %v625 = vld [vmem:[#allocation10 + $0x78] sm:$0xff]
    %v626 = vld [vmem:[#allocation10 + $0x80] sm:$0xff]
    %v627 = vld [vmem:[#allocation10 + $0x88] sm:$0xff]
    %v628 = vld [vmem:[#allocation10 + $0x90] sm:$0xff]
    %v629 = vld [vmem:[#allocation10 + $0x98] sm:$0xff]
    %v630 = vld [vmem:[#allocation10 + $0xa0] sm:$0xff]
    %v631 = vld [vmem:[#allocation10 + $0xa8] sm:$0xff]
    %v632 = vld [vmem:[#allocation10 + $0xb0] sm:$0xff]
    %v633 = vld [vmem:[#allocation10 + $0xb8] sm:$0xff]
    %v634 = vld [vmem:[#allocation10 + $0xc0] sm:$0xff]
    %v635 = vld [vmem:[#allocation10 + $0xc8] sm:$0xff]
    %v636 = vld [vmem:[#allocation10 + $0xd0] sm:$0xff]
    %v637 = vld [vmem:[#allocation10 + $0xd8] sm:$0xff]
    %v638 = vld [vmem:[#allocation10 + $0xe0] sm:$0xff]
    %v639 = vld [vmem:[#allocation10 + $0xe8] sm:$0xff]
    %v640 = vld [vmem:[#allocation10 + $0xf0] sm:$0xff]
    %v641 = vld [vmem:[#allocation10 + $0xf8] sm:$0xff]
    %v674 = vunpack.c.l.b16 %v610
    %v675 = vunpack.c.h.b16 %v610
    %v676 = vunpack.c.l.b16 %v611
    %v677 = vunpack.c.h.b16 %v611
    %v678 = vunpack.c.l.b16 %v612
    %v679 = vunpack.c.h.b16 %v612
    %v680 = vunpack.c.l.b16 %v613
    %v681 = vunpack.c.h.b16 %v613
    %v682 = vunpack.c.l.b16 %v614
    %v683 = vunpack.c.h.b16 %v614
    %v684 = vunpack.c.l.b16 %v615
    %v685 = vunpack.c.h.b16 %v615
    %v686 = vunpack.c.l.b16 %v616
    %v687 = vunpack.c.h.b16 %v616
    %v688 = vunpack.c.l.b16 %v617
    %v689 = vunpack.c.h.b16 %v617
    %v690 = vunpack.c.l.b16 %v618
    %v691 = vunpack.c.h.b16 %v618
    %v692 = vunpack.c.l.b16 %v619
    %v693 = vunpack.c.h.b16 %v619
    %v694 = vunpack.c.l.b16 %v620
    %v695 = vunpack.c.h.b16 %v620
    %v696 = vunpack.c.l.b16 %v621
    %v697 = vunpack.c.h.b16 %v621
    %v698 = vunpack.c.l.b16 %v622
    %v699 = vunpack.c.h.b16 %v622
    %v700 = vunpack.c.l.b16 %v623
    %v701 = vunpack.c.h.b16 %v623
    %v702 = vunpack.c.l.b16 %v624
    %v703 = vunpack.c.h.b16 %v624
    %v704 = vunpack.c.l.b16 %v625
    %v705 = vunpack.c.h.b16 %v625
    %v706 = vunpack.c.l.b16 %v626
    %v707 = vunpack.c.h.b16 %v626
    %v708 = vunpack.c.l.b16 %v627
    %v709 = vunpack.c.h.b16 %v627
    %v710 = vunpack.c.l.b16 %v628
    %v711 = vunpack.c.h.b16 %v628
    %v712 = vunpack.c.l.b16 %v629
    %v713 = vunpack.c.h.b16 %v629
    %v714 = vunpack.c.l.b16 %v630
    %v715 = vunpack.c.h.b16 %v630
    %v716 = vunpack.c.l.b16 %v631
    %v717 = vunpack.c.h.b16 %v631
    %v718 = vunpack.c.l.b16 %v632
    %v719 = vunpack.c.h.b16 %v632
    %v720 = vunpack.c.l.b16 %v633
    %v721 = vunpack.c.h.b16 %v633
    %v722 = vunpack.c.l.b16 %v634
    %v723 = vunpack.c.h.b16 %v634
    %v724 = vunpack.c.l.b16 %v635
    %v725 = vunpack.c.h.b16 %v635
    %v726 = vunpack.c.l.b16 %v636
    %v727 = vunpack.c.h.b16 %v636
    %v728 = vunpack.c.l.b16 %v637
    %v729 = vunpack.c.h.b16 %v637
    %v730 = vunpack.c.l.b16 %v638
    %v731 = vunpack.c.h.b16 %v638
    %v732 = vunpack.c.l.b16 %v639
    %v733 = vunpack.c.h.b16 %v639
    %v734 = vunpack.c.l.b16 %v640
    %v735 = vunpack.c.h.b16 %v640
    %v736 = vunpack.c.l.b16 %v641
    %v737 = vunpack.c.h.b16 %v641
    %v738 = vpack.c.b16 %v678, %v674
    %v739 = vpack.c.b16 %v679, %v675
    %v740 = vpack.c.b16 %v680, %v676
    %v741 = vpack.c.b16 %v681, %v677
    %v742 = vpack.c.b16 %v686, %v682
    %v743 = vpack.c.b16 %v687, %v683
    %v744 = vpack.c.b16 %v688, %v684
    %v745 = vpack.c.b16 %v689, %v685
    %v746 = vpack.c.b16 %v694, %v690
    %v747 = vpack.c.b16 %v695, %v691
    %v748 = vpack.c.b16 %v696, %v692
    %v749 = vpack.c.b16 %v697, %v693
    %v750 = vpack.c.b16 %v702, %v698
    %v751 = vpack.c.b16 %v703, %v699
    %v752 = vpack.c.b16 %v704, %v700
    %v753 = vpack.c.b16 %v705, %v701
    %v754 = vpack.c.b16 %v710, %v706
    %v755 = vpack.c.b16 %v711, %v707
    %v756 = vpack.c.b16 %v712, %v708
    %v757 = vpack.c.b16 %v713, %v709
    %v758 = vpack.c.b16 %v718, %v714
    %v759 = vpack.c.b16 %v719, %v715
    %v760 = vpack.c.b16 %v720, %v716
    %v761 = vpack.c.b16 %v721, %v717
    %v762 = vpack.c.b16 %v726, %v722
    %v763 = vpack.c.b16 %v727, %v723
    %v764 = vpack.c.b16 %v728, %v724
    %v765 = vpack.c.b16 %v729, %v725
    %v766 = vpack.c.b16 %v734, %v730
    %v767 = vpack.c.b16 %v735, %v731
    %v768 = vpack.c.b16 %v736, %v732
    %v769 = vpack.c.b16 %v737, %v733
    %802 = vmatprep.subr.bf16.mxu0 %v739
    %803 = vmatpush1.bf16.msra.mxu0 %v738
    %804 = vmatprep.subr.bf16.mxu0 %v743
    %805 = vmatpush1.bf16.msra.mxu0 %v742
    %806 = vmatprep.subr.bf16.mxu0 %v747
    %807 = vmatpush1.bf16.msra.mxu0 %v746
    %808 = vmatprep.subr.bf16.mxu0 %v751
    %809 = vmatpush1.bf16.msra.mxu0 %v750
    %810 = vmatprep.subr.bf16.mxu0 %v755
    %811 = vmatpush1.bf16.msra.mxu0 %v754
    %812 = vmatprep.subr.bf16.mxu0 %v759
    %813 = vmatpush1.bf16.msra.mxu0 %v758
    %814 = vmatprep.subr.bf16.mxu0 %v763
    %815 = vmatpush1.bf16.msra.mxu0 %v762
    %816 = vmatprep.subr.bf16.mxu0 %v767
    %817 = vmatpush1.bf16.msra.mxu0 %v766
    %818 = vmatprep.subr.bf16.mxu0 0
    %819 = vmatpush1.bf16.msra.mxu0 0
    %820 = vmatprep.subr.bf16.mxu0 0
    %821 = vmatpush1.bf16.msra.mxu0 0
    %822 = vmatprep.subr.bf16.mxu0 0
    %823 = vmatpush1.bf16.msra.mxu0 0
    %824 = vmatprep.subr.bf16.mxu0 0
    %825 = vmatpush1.bf16.msra.mxu0 0
    %826 = vmatprep.subr.bf16.mxu0 0
    %827 = vmatpush1.bf16.msra.mxu0 0
    %828 = vmatprep.subr.bf16.mxu0 0
    %829 = vmatpush1.bf16.msra.mxu0 0
    %830 = vmatprep.subr.bf16.mxu0 0
    %831 = vmatpush1.bf16.msra.mxu0 0
    %832 = vmatprep.subr.bf16.mxu0 0
    %833 = vmatpush1.bf16.msra.mxu0 0
    %834 = vmatprep.mubr.bf16.mxu0 0
    %835 = vmatmul.mubr.bf16.gmra.mrb[0].mxu0 0
    %v836 = vpop.f32.mrb[0].mxu0
    %v837 = vadd.f32 0.0, %v836
    %v838 = vpop.f32.mrb[0].mxu0
    %v839 = vadd.f32 0.0, %v838
    %v840 = vpop.f32.mrb[0].mxu0
    %v841 = vpop.f32.mrb[0].mxu0
    %842 = vdwg.mxu0
    %843 = vmatprep.subr.bf16.mxu0 %v741
    %844 = vmatpush1.bf16.msra.mxu0 %v740
    %845 = vmatprep.subr.bf16.mxu0 %v745
    %846 = vmatpush1.bf16.msra.mxu0 %v744
    %847 = vmatprep.subr.bf16.mxu0 %v749
    %848 = vmatpush1.bf16.msra.mxu0 %v748
    %849 = vmatprep.subr.bf16.mxu0 %v753
    %850 = vmatpush1.bf16.msra.mxu0 %v752
    %851 = vmatprep.subr.bf16.mxu0 %v757
    %852 = vmatpush1.bf16.msra.mxu0 %v756
    %853 = vmatprep.subr.bf16.mxu0 %v761
    %854 = vmatpush1.bf16.msra.mxu0 %v760
    %855 = vmatprep.subr.bf16.mxu0 %v765
    %856 = vmatpush1.bf16.msra.mxu0 %v764
    %857 = vmatprep.subr.bf16.mxu0 %v769
    %858 = vmatpush1.bf16.msra.mxu0 %v768
    %859 = vmatprep.subr.bf16.mxu0 0
    %860 = vmatpush1.bf16.msra.mxu0 0
    %861 = vmatprep.subr.bf16.mxu0 0
    %862 = vmatpush1.bf16.msra.mxu0 0
    %863 = vmatprep.subr.bf16.mxu0 0
    %864 = vmatpush1.bf16.msra.mxu0 0
    %865 = vmatprep.subr.bf16.mxu0 0
    %866 = vmatpush1.bf16.msra.mxu0 0
    %867 = vmatprep.subr.bf16.mxu0 0
    %868 = vmatpush1.bf16.msra.mxu0 0
    %869 = vmatprep.subr.bf16.mxu0 0
    %870 = vmatpush1.bf16.msra.mxu0 0
    %871 = vmatprep.subr.bf16.mxu0 0
    %872 = vmatpush1.bf16.msra.mxu0 0
    %873 = vmatprep.subr.bf16.mxu0 0
    %874 = vmatpush1.bf16.msra.mxu0 0
    %875 = vmatprep.mubr.bf16.mxu0 0
    %876 = vmatmul.mubr.bf16.gmra.mrb[0].mxu0 0
    %v877 = vpop.f32.mrb[0].mxu0
    %v878 = vadd.f32 0.0, %v877
    %v879 = vpop.f32.mrb[0].mxu0
    %v880 = vadd.f32 0.0, %v879
    %v881 = vpop.f32.mrb[0].mxu0
    %v882 = vpop.f32.mrb[0].mxu0
    %883 = vdwg.mxu0
    %v884 = vadd.f32 %v606, %v837
    %v885 = vadd.f32 %v607, %v839
    %v886 = vadd.f32 %v608, %v878
    %v887 = vadd.f32 %v609, %v880
    %v888 = vxor.u32 %v884, 2147483648
    %v889 = vmul.f32 %v888, 1.442695
    %v890 = vpow.pop %v889
    %v891 = vadd.f32 %v890, 1.0
    %v892 = vrcp.pop %v891
    %v893 = vmul.f32 1.0, %v892
    %v894 = vxor.u32 %v885, 2147483648
    %v895 = vmul.f32 %v894, 1.442695
    %v896 = vpow.pop %v895
    %v897 = vadd.f32 %v896, 1.0
    %v898 = vrcp.pop %v897
    %v899 = vmul.f32 1.0, %v898
    %v900 = vtanh.pop %v886
    %v901 = vxor.u32 %v887, 2147483648
    %v902 = vmul.f32 %v901, 1.442695
    %v903 = vpow.pop %v902
    %v904 = vadd.f32 %v903, 1.0
    %v905 = vrcp.pop %v904
    %v906 = vmul.f32 1.0, %v905
    %v907 = vmul.f32 %v899, 0.0
    %v908 = vmul.f32 %v893, %v900
    %v909 = vadd.f32 %v907, %v908
    %v910 = vtanh.pop %v909
    %v911 = vmul.f32 %v906, %v910
    %912 = vst [vmem:[#allocation3] sm:$0xff] %v911
    %s913 = smul.u32 1, 4
    %s914 = smul.addr %s913, 8
    %s915 = scalar_lea.vmem [#allocation2], %s914
    %v916 = vld [vmem:[%s915] sm:$0xff]
    %v917 = vld [vmem:[%s915 + $0x8] sm:$0xff]
    %v918 = vld [vmem:[%s915 + $0x10] sm:$0xff]
    %v919 = vld [vmem:[%s915 + $0x18] sm:$0xff]
    %v920 = vpack.c.bf16 %v911, %v911
    %v921 = vld [vmem:[#allocation10] sm:$0xff]
    %v922 = vld [vmem:[#allocation10 + $0x8] sm:$0xff]
    %v923 = vld [vmem:[#allocation10 + $0x10] sm:$0xff]
    %v924 = vld [vmem:[#allocation10 + $0x18] sm:$0xff]
    %v925 = vld [vmem:[#allocation10 + $0x20] sm:$0xff]
    %v926 = vld [vmem:[#allocation10 + $0x28] sm:$0xff]
    %v927 = vld [vmem:[#allocation10 + $0x30] sm:$0xff]
    %v928 = vld [vmem:[#allocation10 + $0x38] sm:$0xff]
    %v929 = vld [vmem:[#allocation10 + $0x40] sm:$0xff]
    %v930 = vld [vmem:[#allocation10 + $0x48] sm:$0xff]
    %v931 = vld [vmem:[#allocation10 + $0x50] sm:$0xff]
    %v932 = vld [vmem:[#allocation10 + $0x58] sm:$0xff]
    %v933 = vld [vmem:[#allocation10 + $0x60] sm:$0xff]
    %v934 = vld [vmem:[#allocation10 + $0x68] sm:$0xff]
    %v935 = vld [vmem:[#allocation10 + $0x70] sm:$0xff]
    %v936 = vld [vmem:[#allocation10 + $0x78] sm:$0xff]
    %v937 = vld [vmem:[#allocation10 + $0x80] sm:$0xff]
    %v938 = vld [vmem:[#allocation10 + $0x88] sm:$0xff]
    %v939 = vld [vmem:[#allocation10 + $0x90] sm:$0xff]
    %v940 = vld [vmem:[#allocation10 + $0x98] sm:$0xff]
    %v941 = vld [vmem:[#allocation10 + $0xa0] sm:$0xff]
    %v942 = vld [vmem:[#allocation10 + $0xa8] sm:$0xff]
    %v943 = vld [vmem:[#allocation10 + $0xb0] sm:$0xff]
    %v944 = vld [vmem:[#allocation10 + $0xb8] sm:$0xff]
    %v945 = vld [vmem:[#allocation10 + $0xc0] sm:$0xff]
    %v946 = vld [vmem:[#allocation10 + $0xc8] sm:$0xff]
    %v947 = vld [vmem:[#allocation10 + $0xd0] sm:$0xff]
    %v948 = vld [vmem:[#allocation10 + $0xd8] sm:$0xff]
    %v949 = vld [vmem:[#allocation10 + $0xe0] sm:$0xff]
    %v950 = vld [vmem:[#allocation10 + $0xe8] sm:$0xff]
    %v951 = vld [vmem:[#allocation10 + $0xf0] sm:$0xff]
    %v952 = vld [vmem:[#allocation10 + $0xf8] sm:$0xff]
    %v985 = vunpack.c.l.b16 %v921
    %v986 = vunpack.c.h.b16 %v921
    %v987 = vunpack.c.l.b16 %v922
    %v988 = vunpack.c.h.b16 %v922
    %v989 = vunpack.c.l.b16 %v923
    %v990 = vunpack.c.h.b16 %v923
    %v991 = vunpack.c.l.b16 %v924
    %v992 = vunpack.c.h.b16 %v924
    %v993 = vunpack.c.l.b16 %v925
    %v994 = vunpack.c.h.b16 %v925
    %v995 = vunpack.c.l.b16 %v926
    %v996 = vunpack.c.h.b16 %v926
    %v997 = vunpack.c.l.b16 %v927
    %v998 = vunpack.c.h.b16 %v927
    %v999 = vunpack.c.l.b16 %v928
    %v1000 = vunpack.c.h.b16 %v928
    %v1001 = vunpack.c.l.b16 %v929
    %v1002 = vunpack.c.h.b16 %v929
    %v1003 = vunpack.c.l.b16 %v930
    %v1004 = vunpack.c.h.b16 %v930
    %v1005 = vunpack.c.l.b16 %v931
    %v1006 = vunpack.c.h.b16 %v931
    %v1007 = vunpack.c.l.b16 %v932
    %v1008 = vunpack.c.h.b16 %v932
    %v1009 = vunpack.c.l.b16 %v933
    %v1010 = vunpack.c.h.b16 %v933
    %v1011 = vunpack.c.l.b16 %v934
    %v1012 = vunpack.c.h.b16 %v934
    %v1013 = vunpack.c.l.b16 %v935
    %v1014 = vunpack.c.h.b16 %v935
    %v1015 = vunpack.c.l.b16 %v936
    %v1016 = vunpack.c.h.b16 %v936
    %v1017 = vunpack.c.l.b16 %v937
    %v1018 = vunpack.c.h.b16 %v937
    %v1019 = vunpack.c.l.b16 %v938
    %v1020 = vunpack.c.h.b16 %v938
    %v1021 = vunpack.c.l.b16 %v939
    %v1022 = vunpack.c.h.b16 %v939
    %v1023 = vunpack.c.l.b16 %v940
    %v1024 = vunpack.c.h.b16 %v940
    %v1025 = vunpack.c.l.b16 %v941
    %v1026 = vunpack.c.h.b16 %v941
    %v1027 = vunpack.c.l.b16 %v942
    %v1028 = vunpack.c.h.b16 %v942
    %v1029 = vunpack.c.l.b16 %v943
    %v1030 = vunpack.c.h.b16 %v943
    %v1031 = vunpack.c.l.b16 %v944
    %v1032 = vunpack.c.h.b16 %v944
    %v1033 = vunpack.c.l.b16 %v945
    %v1034 = vunpack.c.h.b16 %v945
    %v1035 = vunpack.c.l.b16 %v946
    %v1036 = vunpack.c.h.b16 %v946
    %v1037 = vunpack.c.l.b16 %v947
    %v1038 = vunpack.c.h.b16 %v947
    %v1039 = vunpack.c.l.b16 %v948
    %v1040 = vunpack.c.h.b16 %v948
    %v1041 = vunpack.c.l.b16 %v949
    %v1042 = vunpack.c.h.b16 %v949
    %v1043 = vunpack.c.l.b16 %v950
    %v1044 = vunpack.c.h.b16 %v950
    %v1045 = vunpack.c.l.b16 %v951
    %v1046 = vunpack.c.h.b16 %v951
    %v1047 = vunpack.c.l.b16 %v952
    %v1048 = vunpack.c.h.b16 %v952
    %v1049 = vpack.c.b16 %v989, %v985
    %v1050 = vpack.c.b16 %v990, %v986
    %v1051 = vpack.c.b16 %v991, %v987
    %v1052 = vpack.c.b16 %v992, %v988
    %v1053 = vpack.c.b16 %v997, %v993
    %v1054 = vpack.c.b16 %v998, %v994
    %v1055 = vpack.c.b16 %v999, %v995
    %v1056 = vpack.c.b16 %v1000, %v996
    %v1057 = vpack.c.b16 %v1005, %v1001
    %v1058 = vpack.c.b16 %v1006, %v1002
    %v1059 = vpack.c.b16 %v1007, %v1003
    %v1060 = vpack.c.b16 %v1008, %v1004
    %v1061 = vpack.c.b16 %v1013, %v1009
    %v1062 = vpack.c.b16 %v1014, %v1010
    %v1063 = vpack.c.b16 %v1015, %v1011
    %v1064 = vpack.c.b16 %v1016, %v1012
    %v1065 = vpack.c.b16 %v1021, %v1017
    %v1066 = vpack.c.b16 %v1022, %v1018
    %v1067 = vpack.c.b16 %v1023, %v1019
    %v1068 = vpack.c.b16 %v1024, %v1020
    %v1069 = vpack.c.b16 %v1029, %v1025
    %v1070 = vpack.c.b16 %v1030, %v1026
    %v1071 = vpack.c.b16 %v1031, %v1027
    %v1072 = vpack.c.b16 %v1032, %v1028
    %v1073 = vpack.c.b16 %v1037, %v1033
    %v1074 = vpack.c.b16 %v1038, %v1034
    %v1075 = vpack.c.b16 %v1039, %v1035
    %v1076 = vpack.c.b16 %v1040, %v1036
    %v1077 = vpack.c.b16 %v1045, %v1041
    %v1078 = vpack.c.b16 %v1046, %v1042
    %v1079 = vpack.c.b16 %v1047, %v1043
    %v1080 = vpack.c.b16 %v1048, %v1044
    %1113 = vmatprep.subr.bf16.mxu0 %v1050
    %1114 = vmatpush1.bf16.msra.mxu0 %v1049
    %1115 = vmatprep.subr.bf16.mxu0 %v1054
    %1116 = vmatpush1.bf16.msra.mxu0 %v1053
    %1117 = vmatprep.subr.bf16.mxu0 %v1058
    %1118 = vmatpush1.bf16.msra.mxu0 %v1057
    %1119 = vmatprep.subr.bf16.mxu0 %v1062
    %1120 = vmatpush1.bf16.msra.mxu0 %v1061
    %1121 = vmatprep.subr.bf16.mxu0 %v1066
    %1122 = vmatpush1.bf16.msra.mxu0 %v1065
    %1123 = vmatprep.subr.bf16.mxu0 %v1070
    %1124 = vmatpush1.bf16.msra.mxu0 %v1069
    %1125 = vmatprep.subr.bf16.mxu0 %v1074
    %1126 = vmatpush1.bf16.msra.mxu0 %v1073
    %1127 = vmatprep.subr.bf16.mxu0 %v1078
    %1128 = vmatpush1.bf16.msra.mxu0 %v1077
    %1129 = vmatprep.subr.bf16.mxu0 0
    %1130 = vmatpush1.bf16.msra.mxu0 0
    %1131 = vmatprep.subr.bf16.mxu0 0
    %1132 = vmatpush1.bf16.msra.mxu0 0
    %1133 = vmatprep.subr.bf16.mxu0 0
    %1134 = vmatpush1.bf16.msra.mxu0 0
    %1135 = vmatprep.subr.bf16.mxu0 0
    %1136 = vmatpush1.bf16.msra.mxu0 0
    %1137 = vmatprep.subr.bf16.mxu0 0
    %1138 = vmatpush1.bf16.msra.mxu0 0
    %1139 = vmatprep.subr.bf16.mxu0 0
    %1140 = vmatpush1.bf16.msra.mxu0 0
    %1141 = vmatprep.subr.bf16.mxu0 0
    %1142 = vmatpush1.bf16.msra.mxu0 0
    %1143 = vmatprep.subr.bf16.mxu0 0
    %1144 = vmatpush1.bf16.msra.mxu0 0
    %1145 = vmatprep.mubr.bf16.mxu0 0
    %1146 = vmatmul.mubr.bf16.gmra.mrb[0].mxu0 %v920
    %v1147 = vpop.f32.mrb[0].mxu0
    %v1148 = vadd.f32 0.0, %v1147
    %v1149 = vpop.f32.mrb[0].mxu0
    %v1150 = vadd.f32 0.0, %v1149
    %v1151 = vpop.f32.mrb[0].mxu0
    %v1152 = vpop.f32.mrb[0].mxu0
    %1153 = vdwg.mxu0
    %1154 = vmatprep.subr.bf16.mxu0 %v1052
    %1155 = vmatpush1.bf16.msra.mxu0 %v1051
    %1156 = vmatprep.subr.bf16.mxu0 %v1056
    %1157 = vmatpush1.bf16.msra.mxu0 %v1055
    %1158 = vmatprep.subr.bf16.mxu0 %v1060
    %1159 = vmatpush1.bf16.msra.mxu0 %v1059
    %1160 = vmatprep.subr.bf16.mxu0 %v1064
    %1161 = vmatpush1.bf16.msra.mxu0 %v1063
    %1162 = vmatprep.subr.bf16.mxu0 %v1068
    %1163 = vmatpush1.bf16.msra.mxu0 %v1067
    %1164 = vmatprep.subr.bf16.mxu0 %v1072
    %1165 = vmatpush1.bf16.msra.mxu0 %v1071
    %1166 = vmatprep.subr.bf16.mxu0 %v1076
    %1167 = vmatpush1.bf16.msra.mxu0 %v1075
    %1168 = vmatprep.subr.bf16.mxu0 %v1080
    %1169 = vmatpush1.bf16.msra.mxu0 %v1079
    %1170 = vmatprep.subr.bf16.mxu0 0
    %1171 = vmatpush1.bf16.msra.mxu0 0
    %1172 = vmatprep.subr.bf16.mxu0 0
    %1173 = vmatpush1.bf16.msra.mxu0 0
    %1174 = vmatprep.subr.bf16.mxu0 0
    %1175 = vmatpush1.bf16.msra.mxu0 0
    %1176 = vmatprep.subr.bf16.mxu0 0
    %1177 = vmatpush1.bf16.msra.mxu0 0
    %1178 = vmatprep.subr.bf16.mxu0 0
    %1179 = vmatpush1.bf16.msra.mxu0 0
    %1180 = vmatprep.subr.bf16.mxu0 0
    %1181 = vmatpush1.bf16.msra.mxu0 0
    %1182 = vmatprep.subr.bf16.mxu0 0
    %1183 = vmatpush1.bf16.msra.mxu0 0
    %1184 = vmatprep.subr.bf16.mxu0 0
    %1185 = vmatpush1.bf16.msra.mxu0 0
    %1186 = vmatprep.mubr.bf16.mxu0 0
    %1187 = vmatmul.mubr.bf16.gmra.mrb[0].mxu0 %v920
    %v1188 = vpop.f32.mrb[0].mxu0
    %v1189 = vadd.f32 0.0, %v1188
    %v1190 = vpop.f32.mrb[0].mxu0
    %v1191 = vadd.f32 0.0, %v1190
    %v1192 = vpop.f32.mrb[0].mxu0
    %v1193 = vpop.f32.mrb[0].mxu0
    %1194 = vdwg.mxu0
    %v1195 = vadd.f32 %v916, %v1148
    %v1196 = vadd.f32 %v917, %v1150
    %v1197 = vadd.f32 %v918, %v1189
    %v1198 = vadd.f32 %v919, %v1191
    %v1199 = vxor.u32 %v1195, 2147483648
    %v1200 = vmul.f32 %v1199, 1.442695
    %v1201 = vpow.pop %v1200
    %v1202 = vadd.f32 %v1201, 1.0
    %v1203 = vrcp.pop %v1202
    %v1204 = vmul.f32 1.0, %v1203
    %v1205 = vxor.u32 %v1196, 2147483648
    %v1206 = vmul.f32 %v1205, 1.442695
    %v1207 = vpow.pop %v1206
    %v1208 = vadd.f32 %v1207, 1.0
    %v1209 = vrcp.pop %v1208
    %v1210 = vmul.f32 1.0, %v1209
    %v1211 = vtanh.pop %v1197
    %v1212 = vxor.u32 %v1198, 2147483648
    %v1213 = vmul.f32 %v1212, 1.442695
    %v1214 = vpow.pop %v1213
    %v1215 = vadd.f32 %v1214, 1.0
    %v1216 = vrcp.pop %v1215
    %v1217 = vmul.f32 1.0, %v1216
    %v1218 = vmul.f32 %v1210, %v909
    %v1219 = vmul.f32 %v1204, %v1211
    %v1220 = vadd.f32 %v1218, %v1219
    %v1221 = vtanh.pop %v1220
    %v1222 = vmul.f32 %v1217, %v1221
    %s1223 = scalar_lea.vmem [#allocation3], 8
    %1224 = vst [vmem:[%s1223] sm:$0xff] %v1222
    %s1225 = smul.u32 2, 4
    %s1226 = smul.addr %s1225, 8
    %s1227 = scalar_lea.vmem [#allocation2], %s1226
    %v1228 = vld [vmem:[%s1227] sm:$0xff]
    %v1229 = vld [vmem:[%s1227 + $0x8] sm:$0xff]
    %v1230 = vld [vmem:[%s1227 + $0x10] sm:$0xff]
    %v1231 = vld [vmem:[%s1227 + $0x18] sm:$0xff]
    %v1232 = vpack.c.bf16 %v1222, %v1222
    %v1233 = vld [vmem:[#allocation10] sm:$0xff]
    %v1234 = vld [vmem:[#allocation10 + $0x8] sm:$0xff]
    %v1235 = vld [vmem:[#allocation10 + $0x10] sm:$0xff]
    %v1236 = vld [vmem:[#allocation10 + $0x18] sm:$0xff]
    %v1237 = vld [vmem:[#allocation10 + $0x20] sm:$0xff]
    %v1238 = vld [vmem:[#allocation10 + $0x28] sm:$0xff]
    %v1239 = vld [vmem:[#allocation10 + $0x30] sm:$0xff]
    %v1240 = vld [vmem:[#allocation10 + $0x38] sm:$0xff]
    %v1241 = vld [vmem:[#allocation10 + $0x40] sm:$0xff]
    %v1242 = vld [vmem:[#allocation10 + $0x48] sm:$0xff]
    %v1243 = vld [vmem:[#allocation10 + $0x50] sm:$0xff]
    %v1244 = vld [vmem:[#allocation10 + $0x58] sm:$0xff]
    %v1245 = vld [vmem:[#allocation10 + $0x60] sm:$0xff]
    %v1246 = vld [vmem:[#allocation10 + $0x68] sm:$0xff]
    %v1247 = vld [vmem:[#allocation10 + $0x70] sm:$0xff]
    %v1248 = vld [vmem:[#allocation10 + $0x78] sm:$0xff]
    %v1249 = vld [vmem:[#allocation10 + $0x80] sm:$0xff]
    %v1250 = vld [vmem:[#allocation10 + $0x88] sm:$0xff]
    %v1251 = vld [vmem:[#allocation10 + $0x90] sm:$0xff]
    %v1252 = vld [vmem:[#allocation10 + $0x98] sm:$0xff]
    %v1253 = vld [vmem:[#allocation10 + $0xa0] sm:$0xff]
    %v1254 = vld [vmem:[#allocation10 + $0xa8] sm:$0xff]
    %v1255 = vld [vmem:[#allocation10 + $0xb0] sm:$0xff]
    %v1256 = vld [vmem:[#allocation10 + $0xb8] sm:$0xff]
    %v1257 = vld [vmem:[#allocation10 + $0xc0] sm:$0xff]
    %v1258 = vld [vmem:[#allocation10 + $0xc8] sm:$0xff]
    %v1259 = vld [vmem:[#allocation10 + $0xd0] sm:$0xff]
    %v1260 = vld [vmem:[#allocation10 + $0xd8] sm:$0xff]
    %v1261 = vld [vmem:[#allocation10 + $0xe0] sm:$0xff]
    %v1262 = vld [vmem:[#allocation10 + $0xe8] sm:$0xff]
    %v1263 = vld [vmem:[#allocation10 + $0xf0] sm:$0xff]
    %v1264 = vld [vmem:[#allocation10 + $0xf8] sm:$0xff]
    %v1297 = vunpack.c.l.b16 %v1233
    %v1298 = vunpack.c.h.b16 %v1233
    %v1299 = vunpack.c.l.b16 %v1234
    %v1300 = vunpack.c.h.b16 %v1234
    %v1301 = vunpack.c.l.b16 %v1235
    %v1302 = vunpack.c.h.b16 %v1235
    %v1303 = vunpack.c.l.b16 %v1236
    %v1304 = vunpack.c.h.b16 %v1236
    %v1305 = vunpack.c.l.b16 %v1237
    %v1306 = vunpack.c.h.b16 %v1237
    %v1307 = vunpack.c.l.b16 %v1238
    %v1308 = vunpack.c.h.b16 %v1238
    %v1309 = vunpack.c.l.b16 %v1239
    %v1310 = vunpack.c.h.b16 %v1239
    %v1311 = vunpack.c.l.b16 %v1240
    %v1312 = vunpack.c.h.b16 %v1240
    %v1313 = vunpack.c.l.b16 %v1241
    %v1314 = vunpack.c.h.b16 %v1241
    %v1315 = vunpack.c.l.b16 %v1242
    %v1316 = vunpack.c.h.b16 %v1242
    %v1317 = vunpack.c.l.b16 %v1243
    %v1318 = vunpack.c.h.b16 %v1243
    %v1319 = vunpack.c.l.b16 %v1244
    %v1320 = vunpack.c.h.b16 %v1244
    %v1321 = vunpack.c.l.b16 %v1245
    %v1322 = vunpack.c.h.b16 %v1245
    %v1323 = vunpack.c.l.b16 %v1246
    %v1324 = vunpack.c.h.b16 %v1246
    %v1325 = vunpack.c.l.b16 %v1247
    %v1326 = vunpack.c.h.b16 %v1247
    %v1327 = vunpack.c.l.b16 %v1248
    %v1328 = vunpack.c.h.b16 %v1248
    %v1329 = vunpack.c.l.b16 %v1249
    %v1330 = vunpack.c.h.b16 %v1249
    %v1331 = vunpack.c.l.b16 %v1250
    %v1332 = vunpack.c.h.b16 %v1250
    %v1333 = vunpack.c.l.b16 %v1251
    %v1334 = vunpack.c.h.b16 %v1251
    %v1335 = vunpack.c.l.b16 %v1252
    %v1336 = vunpack.c.h.b16 %v1252
    %v1337 = vunpack.c.l.b16 %v1253
    %v1338 = vunpack.c.h.b16 %v1253
    %v1339 = vunpack.c.l.b16 %v1254
    %v1340 = vunpack.c.h.b16 %v1254
    %v1341 = vunpack.c.l.b16 %v1255
    %v1342 = vunpack.c.h.b16 %v1255
    %v1343 = vunpack.c.l.b16 %v1256
    %v1344 = vunpack.c.h.b16 %v1256
    %v1345 = vunpack.c.l.b16 %v1257
    %v1346 = vunpack.c.h.b16 %v1257
    %v1347 = vunpack.c.l.b16 %v1258
    %v1348 = vunpack.c.h.b16 %v1258
    %v1349 = vunpack.c.l.b16 %v1259
    %v1350 = vunpack.c.h.b16 %v1259
    %v1351 = vunpack.c.l.b16 %v1260
    %v1352 = vunpack.c.h.b16 %v1260
    %v1353 = vunpack.c.l.b16 %v1261
    %v1354 = vunpack.c.h.b16 %v1261
    %v1355 = vunpack.c.l.b16 %v1262
    %v1356 = vunpack.c.h.b16 %v1262
    %v1357 = vunpack.c.l.b16 %v1263
    %v1358 = vunpack.c.h.b16 %v1263
    %v1359 = vunpack.c.l.b16 %v1264
    %v1360 = vunpack.c.h.b16 %v1264
    %v1361 = vpack.c.b16 %v1301, %v1297
    %v1362 = vpack.c.b16 %v1302, %v1298
    %v1363 = vpack.c.b16 %v1303, %v1299
    %v1364 = vpack.c.b16 %v1304, %v1300
    %v1365 = vpack.c.b16 %v1309, %v1305
    %v1366 = vpack.c.b16 %v1310, %v1306
    %v1367 = vpack.c.b16 %v1311, %v1307
    %v1368 = vpack.c.b16 %v1312, %v1308
    %v1369 = vpack.c.b16 %v1317, %v1313
    %v1370 = vpack.c.b16 %v1318, %v1314
    %v1371 = vpack.c.b16 %v1319, %v1315
    %v1372 = vpack.c.b16 %v1320, %v1316
    %v1373 = vpack.c.b16 %v1325, %v1321
    %v1374 = vpack.c.b16 %v1326, %v1322
    %v1375 = vpack.c.b16 %v1327, %v1323
    %v1376 = vpack.c.b16 %v1328, %v1324
    %v1377 = vpack.c.b16 %v1333, %v1329
    %v1378 = vpack.c.b16 %v1334, %v1330
    %v1379 = vpack.c.b16 %v1335, %v1331
    %v1380 = vpack.c.b16 %v1336, %v1332
    %v1381 = vpack.c.b16 %v1341, %v1337
    %v1382 = vpack.c.b16 %v1342, %v1338
    %v1383 = vpack.c.b16 %v1343, %v1339
    %v1384 = vpack.c.b16 %v1344, %v1340
    %v1385 = vpack.c.b16 %v1349, %v1345
    %v1386 = vpack.c.b16 %v1350, %v1346
    %v1387 = vpack.c.b16 %v1351, %v1347
    %v1388 = vpack.c.b16 %v1352, %v1348
    %v1389 = vpack.c.b16 %v1357, %v1353
    %v1390 = vpack.c.b16 %v1358, %v1354
    %v1391 = vpack.c.b16 %v1359, %v1355
    %v1392 = vpack.c.b16 %v1360, %v1356
    %1425 = vmatprep.subr.bf16.mxu0 %v1362
    %1426 = vmatpush1.bf16.msra.mxu0 %v1361
    %1427 = vmatprep.subr.bf16.mxu0 %v1366
    %1428 = vmatpush1.bf16.msra.mxu0 %v1365
    %1429 = vmatprep.subr.bf16.mxu0 %v1370
    %1430 = vmatpush1.bf16.msra.mxu0 %v1369
    %1431 = vmatprep.subr.bf16.mxu0 %v1374
    %1432 = vmatpush1.bf16.msra.mxu0 %v1373
    %1433 = vmatprep.subr.bf16.mxu0 %v1378
    %1434 = vmatpush1.bf16.msra.mxu0 %v1377
    %1435 = vmatprep.subr.bf16.mxu0 %v1382
    %1436 = vmatpush1.bf16.msra.mxu0 %v1381
    %1437 = vmatprep.subr.bf16.mxu0 %v1386
    %1438 = vmatpush1.bf16.msra.mxu0 %v1385
    %1439 = vmatprep.subr.bf16.mxu0 %v1390
    %1440 = vmatpush1.bf16.msra.mxu0 %v1389
    %1441 = vmatprep.subr.bf16.mxu0 0
    %1442 = vmatpush1.bf16.msra.mxu0 0
    %1443 = vmatprep.subr.bf16.mxu0 0
    %1444 = vmatpush1.bf16.msra.mxu0 0
    %1445 = vmatprep.subr.bf16.mxu0 0
    %1446 = vmatpush1.bf16.msra.mxu0 0
    %1447 = vmatprep.subr.bf16.mxu0 0
    %1448 = vmatpush1.bf16.msra.mxu0 0
    %1449 = vmatprep.subr.bf16.mxu0 0
    %1450 = vmatpush1.bf16.msra.mxu0 0
    %1451 = vmatprep.subr.bf16.mxu0 0
    %1452 = vmatpush1.bf16.msra.mxu0 0
    %1453 = vmatprep.subr.bf16.mxu0 0
    %1454 = vmatpush1.bf16.msra.mxu0 0
    %1455 = vmatprep.subr.bf16.mxu0 0
    %1456 = vmatpush1.bf16.msra.mxu0 0
    %1457 = vmatprep.mubr.bf16.mxu0 0
    %1458 = vmatmul.mubr.bf16.gmra.mrb[0].mxu0 %v1232
    %v1459 = vpop.f32.mrb[0].mxu0
    %v1460 = vadd.f32 0.0, %v1459
    %v1461 = vpop.f32.mrb[0].mxu0
    %v1462 = vadd.f32 0.0, %v1461
    %v1463 = vpop.f32.mrb[0].mxu0
    %v1464 = vpop.f32.mrb[0].mxu0
    %1465 = vdwg.mxu0
    %1466 = vmatprep.subr.bf16.mxu0 %v1364
    %1467 = vmatpush1.bf16.msra.mxu0 %v1363
    %1468 = vmatprep.subr.bf16.mxu0 %v1368
    %1469 = vmatpush1.bf16.msra.mxu0 %v1367
    %1470 = vmatprep.subr.bf16.mxu0 %v1372
    %1471 = vmatpush1.bf16.msra.mxu0 %v1371
    %1472 = vmatprep.subr.bf16.mxu0 %v1376
    %1473 = vmatpush1.bf16.msra.mxu0 %v1375
    %1474 = vmatprep.subr.bf16.mxu0 %v1380
    %1475 = vmatpush1.bf16.msra.mxu0 %v1379
    %1476 = vmatprep.subr.bf16.mxu0 %v1384
    %1477 = vmatpush1.bf16.msra.mxu0 %v1383
    %1478 = vmatprep.subr.bf16.mxu0 %v1388
    %1479 = vmatpush1.bf16.msra.mxu0 %v1387
    %1480 = vmatprep.subr.bf16.mxu0 %v1392
    %1481 = vmatpush1.bf16.msra.mxu0 %v1391
    %1482 = vmatprep.subr.bf16.mxu0 0
    %1483 = vmatpush1.bf16.msra.mxu0 0
    %1484 = vmatprep.subr.bf16.mxu0 0
    %1485 = vmatpush1.bf16.msra.mxu0 0
    %1486 = vmatprep.subr.bf16.mxu0 0
    %1487 = vmatpush1.bf16.msra.mxu0 0
    %1488 = vmatprep.subr.bf16.mxu0 0
    %1489 = vmatpush1.bf16.msra.mxu0 0
    %1490 = vmatprep.subr.bf16.mxu0 0
    %1491 = vmatpush1.bf16.msra.mxu0 0
    %1492 = vmatprep.subr.bf16.mxu0 0
    %1493 = vmatpush1.bf16.msra.mxu0 0
    %1494 = vmatprep.subr.bf16.mxu0 0
    %1495 = vmatpush1.bf16.msra.mxu0 0
    %1496 = vmatprep.subr.bf16.mxu0 0
    %1497 = vmatpush1.bf16.msra.mxu0 0
    %1498 = vmatprep.mubr.bf16.mxu0 0
    %1499 = vmatmul.mubr.bf16.gmra.mrb[0].mxu0 %v1232
    %v1500 = vpop.f32.mrb[0].mxu0
    %v1501 = vadd.f32 0.0, %v1500
    %v1502 = vpop.f32.mrb[0].mxu0
    %v1503 = vadd.f32 0.0, %v1502
    %v1504 = vpop.f32.mrb[0].mxu0
    %v1505 = vpop.f32.mrb[0].mxu0
    %1506 = vdwg.mxu0
    %v1507 = vadd.f32 %v1228, %v1460
    %v1508 = vadd.f32 %v1229, %v1462
    %v1509 = vadd.f32 %v1230, %v1501
    %v1510 = vadd.f32 %v1231, %v1503
    %v1511 = vxor.u32 %v1507, 2147483648
    %v1512 = vmul.f32 %v1511, 1.442695
    %v1513 = vpow.pop %v1512
    %v1514 = vadd.f32 %v1513, 1.0
    %v1515 = vrcp.pop %v1514
    %v1516 = vmul.f32 1.0, %v1515
    %v1517 = vxor.u32 %v1508, 2147483648
    %v1518 = vmul.f32 %v1517, 1.442695
    %v1519 = vpow.pop %v1518
    %v1520 = vadd.f32 %v1519, 1.0
    %v1521 = vrcp.pop %v1520
    %v1522 = vmul.f32 1.0, %v1521
    %v1523 = vtanh.pop %v1509
    %v1524 = vxor.u32 %v1510, 2147483648
    %v1525 = vmul.f32 %v1524, 1.442695
    %v1526 = vpow.pop %v1525
    %v1527 = vadd.f32 %v1526, 1.0
    %v1528 = vrcp.pop %v1527
    %v1529 = vmul.f32 1.0, %v1528
    %v1530 = vmul.f32 %v1522, %v1220
    %v1531 = vmul.f32 %v1516, %v1523
    %v1532 = vadd.f32 %v1530, %v1531
    %v1533 = vtanh.pop %v1532
    %v1534 = vmul.f32 %v1529, %v1533
    %s1535 = scalar_lea.vmem [#allocation3], 16
    %1536 = vst [vmem:[%s1535] sm:$0xff] %v1534
    %s1537 = smul.u32 3, 4
    %s1538 = smul.addr %s1537, 8
    %s1539 = scalar_lea.vmem [#allocation2], %s1538
    %v1540 = vld [vmem:[%s1539] sm:$0xff]
    %v1541 = vld [vmem:[%s1539 + $0x8] sm:$0xff]
    %v1542 = vld [vmem:[%s1539 + $0x10] sm:$0xff]
    %v1543 = vld [vmem:[%s1539 + $0x18] sm:$0xff]
    %v1544 = vpack.c.bf16 %v1534, %v1534
    %v1545 = vld [vmem:[#allocation10] sm:$0xff]
    %v1546 = vld [vmem:[#allocation10 + $0x8] sm:$0xff]
    %v1547 = vld [vmem:[#allocation10 + $0x10] sm:$0xff]
    %v1548 = vld [vmem:[#allocation10 + $0x18] sm:$0xff]
    %v1549 = vld [vmem:[#allocation10 + $0x20] sm:$0xff]
    %v1550 = vld [vmem:[#allocation10 + $0x28] sm:$0xff]
    %v1551 = vld [vmem:[#allocation10 + $0x30] sm:$0xff]
    %v1552 = vld [vmem:[#allocation10 + $0x38] sm:$0xff]
    %v1553 = vld [vmem:[#allocation10 + $0x40] sm:$0xff]
    %v1554 = vld [vmem:[#allocation10 + $0x48] sm:$0xff]
    %v1555 = vld [vmem:[#allocation10 + $0x50] sm:$0xff]
    %v1556 = vld [vmem:[#allocation10 + $0x58] sm:$0xff]
    %v1557 = vld [vmem:[#allocation10 + $0x60] sm:$0xff]
    %v1558 = vld [vmem:[#allocation10 + $0x68] sm:$0xff]
    %v1559 = vld [vmem:[#allocation10 + $0x70] sm:$0xff]
    %v1560 = vld [vmem:[#allocation10 + $0x78] sm:$0xff]
    %v1561 = vld [vmem:[#allocation10 + $0x80] sm:$0xff]
    %v1562 = vld [vmem:[#allocation10 + $0x88] sm:$0xff]
    %v1563 = vld [vmem:[#allocation10 + $0x90] sm:$0xff]
    %v1564 = vld [vmem:[#allocation10 + $0x98] sm:$0xff]
    %v1565 = vld [vmem:[#allocation10 + $0xa0] sm:$0xff]
    %v1566 = vld [vmem:[#allocation10 + $0xa8] sm:$0xff]
    %v1567 = vld [vmem:[#allocation10 + $0xb0] sm:$0xff]
    %v1568 = vld [vmem:[#allocation10 + $0xb8] sm:$0xff]
    %v1569 = vld [vmem:[#allocation10 + $0xc0] sm:$0xff]
    %v1570 = vld [vmem:[#allocation10 + $0xc8] sm:$0xff]
    %v1571 = vld [vmem:[#allocation10 + $0xd0] sm:$0xff]
    %v1572 = vld [vmem:[#allocation10 + $0xd8] sm:$0xff]
    %v1573 = vld [vmem:[#allocation10 + $0xe0] sm:$0xff]
    %v1574 = vld [vmem:[#allocation10 + $0xe8] sm:$0xff]
    %v1575 = vld [vmem:[#allocation10 + $0xf0] sm:$0xff]
    %v1576 = vld [vmem:[#allocation10 + $0xf8] sm:$0xff]
    %v1609 = vunpack.c.l.b16 %v1545
    %v1610 = vunpack.c.h.b16 %v1545
    %v1611 = vunpack.c.l.b16 %v1546
    %v1612 = vunpack.c.h.b16 %v1546
    %v1613 = vunpack.c.l.b16 %v1547
    %v1614 = vunpack.c.h.b16 %v1547
    %v1615 = vunpack.c.l.b16 %v1548
    %v1616 = vunpack.c.h.b16 %v1548
    %v1617 = vunpack.c.l.b16 %v1549
    %v1618 = vunpack.c.h.b16 %v1549
    %v1619 = vunpack.c.l.b16 %v1550
    %v1620 = vunpack.c.h.b16 %v1550
    %v1621 = vunpack.c.l.b16 %v1551
    %v1622 = vunpack.c.h.b16 %v1551
    %v1623 = vunpack.c.l.b16 %v1552
    %v1624 = vunpack.c.h.b16 %v1552
    %v1625 = vunpack.c.l.b16 %v1553
    %v1626 = vunpack.c.h.b16 %v1553
    %v1627 = vunpack.c.l.b16 %v1554
    %v1628 = vunpack.c.h.b16 %v1554
    %v1629 = vunpack.c.l.b16 %v1555
    %v1630 = vunpack.c.h.b16 %v1555
    %v1631 = vunpack.c.l.b16 %v1556
    %v1632 = vunpack.c.h.b16 %v1556
    %v1633 = vunpack.c.l.b16 %v1557
    %v1634 = vunpack.c.h.b16 %v1557
    %v1635 = vunpack.c.l.b16 %v1558
    %v1636 = vunpack.c.h.b16 %v1558
    %v1637 = vunpack.c.l.b16 %v1559
    %v1638 = vunpack.c.h.b16 %v1559
    %v1639 = vunpack.c.l.b16 %v1560
    %v1640 = vunpack.c.h.b16 %v1560
    %v1641 = vunpack.c.l.b16 %v1561
    %v1642 = vunpack.c.h.b16 %v1561
    %v1643 = vunpack.c.l.b16 %v1562
    %v1644 = vunpack.c.h.b16 %v1562
    %v1645 = vunpack.c.l.b16 %v1563
    %v1646 = vunpack.c.h.b16 %v1563
    %v1647 = vunpack.c.l.b16 %v1564
    %v1648 = vunpack.c.h.b16 %v1564
    %v1649 = vunpack.c.l.b16 %v1565
    %v1650 = vunpack.c.h.b16 %v1565
    %v1651 = vunpack.c.l.b16 %v1566
    %v1652 = vunpack.c.h.b16 %v1566
    %v1653 = vunpack.c.l.b16 %v1567
    %v1654 = vunpack.c.h.b16 %v1567
    %v1655 = vunpack.c.l.b16 %v1568
    %v1656 = vunpack.c.h.b16 %v1568
    %v1657 = vunpack.c.l.b16 %v1569
    %v1658 = vunpack.c.h.b16 %v1569
    %v1659 = vunpack.c.l.b16 %v1570
    %v1660 = vunpack.c.h.b16 %v1570
    %v1661 = vunpack.c.l.b16 %v1571
    %v1662 = vunpack.c.h.b16 %v1571
    %v1663 = vunpack.c.l.b16 %v1572
    %v1664 = vunpack.c.h.b16 %v1572
    %v1665 = vunpack.c.l.b16 %v1573
    %v1666 = vunpack.c.h.b16 %v1573
    %v1667 = vunpack.c.l.b16 %v1574
    %v1668 = vunpack.c.h.b16 %v1574
    %v1669 = vunpack.c.l.b16 %v1575
    %v1670 = vunpack.c.h.b16 %v1575
    %v1671 = vunpack.c.l.b16 %v1576
    %v1672 = vunpack.c.h.b16 %v1576
    %v1673 = vpack.c.b16 %v1613, %v1609
    %v1674 = vpack.c.b16 %v1614, %v1610
    %v1675 = vpack.c.b16 %v1615, %v1611
    %v1676 = vpack.c.b16 %v1616, %v1612
    %v1677 = vpack.c.b16 %v1621, %v1617
    %v1678 = vpack.c.b16 %v1622, %v1618
    %v1679 = vpack.c.b16 %v1623, %v1619
    %v1680 = vpack.c.b16 %v1624, %v1620
    %v1681 = vpack.c.b16 %v1629, %v1625
    %v1682 = vpack.c.b16 %v1630, %v1626
    %v1683 = vpack.c.b16 %v1631, %v1627
    %v1684 = vpack.c.b16 %v1632, %v1628
    %v1685 = vpack.c.b16 %v1637, %v1633
    %v1686 = vpack.c.b16 %v1638, %v1634
    %v1687 = vpack.c.b16 %v1639, %v1635
    %v1688 = vpack.c.b16 %v1640, %v1636
    %v1689 = vpack.c.b16 %v1645, %v1641
    %v1690 = vpack.c.b16 %v1646, %v1642
    %v1691 = vpack.c.b16 %v1647, %v1643
    %v1692 = vpack.c.b16 %v1648, %v1644
    %v1693 = vpack.c.b16 %v1653, %v1649
    %v1694 = vpack.c.b16 %v1654, %v1650
    %v1695 = vpack.c.b16 %v1655, %v1651
    %v1696 = vpack.c.b16 %v1656, %v1652
    %v1697 = vpack.c.b16 %v1661, %v1657
    %v1698 = vpack.c.b16 %v1662, %v1658
    %v1699 = vpack.c.b16 %v1663, %v1659
    %v1700 = vpack.c.b16 %v1664, %v1660
    %v1701 = vpack.c.b16 %v1669, %v1665
    %v1702 = vpack.c.b16 %v1670, %v1666
    %v1703 = vpack.c.b16 %v1671, %v1667
    %v1704 = vpack.c.b16 %v1672, %v1668
    %1737 = vmatprep.subr.bf16.mxu0 %v1674
    %1738 = vmatpush1.bf16.msra.mxu0 %v1673
    %1739 = vmatprep.subr.bf16.mxu0 %v1678
    %1740 = vmatpush1.bf16.msra.mxu0 %v1677
    %1741 = vmatprep.subr.bf16.mxu0 %v1682
    %1742 = vmatpush1.bf16.msra.mxu0 %v1681
    %1743 = vmatprep.subr.bf16.mxu0 %v1686
    %1744 = vmatpush1.bf16.msra.mxu0 %v1685
    %1745 = vmatprep.subr.bf16.mxu0 %v1690
    %1746 = vmatpush1.bf16.msra.mxu0 %v1689
    %1747 = vmatprep.subr.bf16.mxu0 %v1694
    %1748 = vmatpush1.bf16.msra.mxu0 %v1693
    %1749 = vmatprep.subr.bf16.mxu0 %v1698
    %1750 = vmatpush1.bf16.msra.mxu0 %v1697
    %1751 = vmatprep.subr.bf16.mxu0 %v1702
    %1752 = vmatpush1.bf16.msra.mxu0 %v1701
    %1753 = vmatprep.subr.bf16.mxu0 0
    %1754 = vmatpush1.bf16.msra.mxu0 0
    %1755 = vmatprep.subr.bf16.mxu0 0
    %1756 = vmatpush1.bf16.msra.mxu0 0
    %1757 = vmatprep.subr.bf16.mxu0 0
    %1758 = vmatpush1.bf16.msra.mxu0 0
    %1759 = vmatprep.subr.bf16.mxu0 0
    %1760 = vmatpush1.bf16.msra.mxu0 0
    %1761 = vmatprep.subr.bf16.mxu0 0
    %1762 = vmatpush1.bf16.msra.mxu0 0
    %1763 = vmatprep.subr.bf16.mxu0 0
    %1764 = vmatpush1.bf16.msra.mxu0 0
    %1765 = vmatprep.subr.bf16.mxu0 0
    %1766 = vmatpush1.bf16.msra.mxu0 0
    %1767 = vmatprep.subr.bf16.mxu0 0
    %1768 = vmatpush1.bf16.msra.mxu0 0
    %1769 = vmatprep.mubr.bf16.mxu0 0
    %1770 = vmatmul.mubr.bf16.gmra.mrb[0].mxu0 %v1544
    %v1771 = vpop.f32.mrb[0].mxu0
    %v1772 = vadd.f32 0.0, %v1771
    %v1773 = vpop.f32.mrb[0].mxu0
    %v1774 = vadd.f32 0.0, %v1773
    %v1775 = vpop.f32.mrb[0].mxu0
    %v1776 = vpop.f32.mrb[0].mxu0
    %1777 = vdwg.mxu0
    %1778 = vmatprep.subr.bf16.mxu0 %v1676
    %1779 = vmatpush1.bf16.msra.mxu0 %v1675
    %1780 = vmatprep.subr.bf16.mxu0 %v1680
    %1781 = vmatpush1.bf16.msra.mxu0 %v1679
    %1782 = vmatprep.subr.bf16.mxu0 %v1684
    %1783 = vmatpush1.bf16.msra.mxu0 %v1683
    %1784 = vmatprep.subr.bf16.mxu0 %v1688
    %1785 = vmatpush1.bf16.msra.mxu0 %v1687
    %1786 = vmatprep.subr.bf16.mxu0 %v1692
    %1787 = vmatpush1.bf16.msra.mxu0 %v1691
    %1788 = vmatprep.subr.bf16.mxu0 %v1696
    %1789 = vmatpush1.bf16.msra.mxu0 %v1695
    %1790 = vmatprep.subr.bf16.mxu0 %v1700
    %1791 = vmatpush1.bf16.msra.mxu0 %v1699
    %1792 = vmatprep.subr.bf16.mxu0 %v1704
    %1793 = vmatpush1.bf16.msra.mxu0 %v1703
    %1794 = vmatprep.subr.bf16.mxu0 0
    %1795 = vmatpush1.bf16.msra.mxu0 0
    %1796 = vmatprep.subr.bf16.mxu0 0
    %1797 = vmatpush1.bf16.msra.mxu0 0
    %1798 = vmatprep.subr.bf16.mxu0 0
    %1799 = vmatpush1.bf16.msra.mxu0 0
    %1800 = vmatprep.subr.bf16.mxu0 0
    %1801 = vmatpush1.bf16.msra.mxu0 0
    %1802 = vmatprep.subr.bf16.mxu0 0
    %1803 = vmatpush1.bf16.msra.mxu0 0
    %1804 = vmatprep.subr.bf16.mxu0 0
    %1805 = vmatpush1.bf16.msra.mxu0 0
    %1806 = vmatprep.subr.bf16.mxu0 0
    %1807 = vmatpush1.bf16.msra.mxu0 0
    %1808 = vmatprep.subr.bf16.mxu0 0
    %1809 = vmatpush1.bf16.msra.mxu0 0
    %1810 = vmatprep.mubr.bf16.mxu0 0
    %1811 = vmatmul.mubr.bf16.gmra.mrb[0].mxu0 %v1544
    %v1812 = vpop.f32.mrb[0].mxu0
    %v1813 = vadd.f32 0.0, %v1812
    %v1814 = vpop.f32.mrb[0].mxu0
    %v1815 = vadd.f32 0.0, %v1814
    %v1816 = vpop.f32.mrb[0].mxu0
    %v1817 = vpop.f32.mrb[0].mxu0
    %1818 = vdwg.mxu0
    %v1819 = vadd.f32 %v1540, %v1772
    %v1820 = vadd.f32 %v1541, %v1774
    %v1821 = vadd.f32 %v1542, %v1813
    %v1822 = vadd.f32 %v1543, %v1815
    %v1823 = vxor.u32 %v1819, 2147483648
    %v1824 = vmul.f32 %v1823, 1.442695
    %v1825 = vpow.pop %v1824
    %v1826 = vadd.f32 %v1825, 1.0
    %v1827 = vrcp.pop %v1826
    %v1828 = vmul.f32 1.0, %v1827
    %v1829 = vxor.u32 %v1820, 2147483648
    %v1830 = vmul.f32 %v1829, 1.442695
    %v1831 = vpow.pop %v1830
    %v1832 = vadd.f32 %v1831, 1.0
    %v1833 = vrcp.pop %v1832
    %v1834 = vmul.f32 1.0, %v1833
    %v1835 = vtanh.pop %v1821
    %v1836 = vxor.u32 %v1822, 2147483648
    %v1837 = vmul.f32 %v1836, 1.442695
    %v1838 = vpow.pop %v1837
    %v1839 = vadd.f32 %v1838, 1.0
    %v1840 = vrcp.pop %v1839
    %v1841 = vmul.f32 1.0, %v1840
    %v1842 = vmul.f32 %v1834, %v1532
    %v1843 = vmul.f32 %v1828, %v1835
    %v1844 = vadd.f32 %v1842, %v1843
    %v1845 = vtanh.pop %v1844
    %v1846 = vmul.f32 %v1841, %v1845
    %s1847 = scalar_lea.vmem [#allocation3], 24
    %1848 = vst [vmem:[%s1847] sm:$0xff] %v1846
    %s1849 = smul.u32 4, 4
    %s1850 = smul.addr %s1849, 8
    %s1851 = scalar_lea.vmem [#allocation2], %s1850
    %v1852 = vld [vmem:[%s1851] sm:$0xff]
    %v1853 = vld [vmem:[%s1851 + $0x8] sm:$0xff]
    %v1854 = vld [vmem:[%s1851 + $0x10] sm:$0xff]
    %v1855 = vld [vmem:[%s1851 + $0x18] sm:$0xff]
    %v1856 = vpack.c.bf16 %v1846, %v1846
    %v1857 = vld [vmem:[#allocation10] sm:$0xff]
    %v1858 = vld [vmem:[#allocation10 + $0x8] sm:$0xff]
    %v1859 = vld [vmem:[#allocation10 + $0x10] sm:$0xff]
    %v1860 = vld [vmem:[#allocation10 + $0x18] sm:$0xff]
    %v1861 = vld [vmem:[#allocation10 + $0x20] sm:$0xff]
    %v1862 = vld [vmem:[#allocation10 + $0x28] sm:$0xff]
    %v1863 = vld [vmem:[#allocation10 + $0x30] sm:$0xff]
    %v1864 = vld [vmem:[#allocation10 + $0x38] sm:$0xff]
    %v1865 = vld [vmem:[#allocation10 + $0x40] sm:$0xff]
    %v1866 = vld [vmem:[#allocation10 + $0x48] sm:$0xff]
    %v1867 = vld [vmem:[#allocation10 + $0x50] sm:$0xff]
    %v1868 = vld [vmem:[#allocation10 + $0x58] sm:$0xff]
    %v1869 = vld [vmem:[#allocation10 + $0x60] sm:$0xff]
    %v1870 = vld [vmem:[#allocation10 + $0x68] sm:$0xff]
    %v1871 = vld [vmem:[#allocation10 + $0x70] sm:$0xff]
    %v1872 = vld [vmem:[#allocation10 + $0x78] sm:$0xff]
    %v1873 = vld [vmem:[#allocation10 + $0x80] sm:$0xff]
    %v1874 = vld [vmem:[#allocation10 + $0x88] sm:$0xff]
    %v1875 = vld [vmem:[#allocation10 + $0x90] sm:$0xff]
    %v1876 = vld [vmem:[#allocation10 + $0x98] sm:$0xff]
    %v1877 = vld [vmem:[#allocation10 + $0xa0] sm:$0xff]
    %v1878 = vld [vmem:[#allocation10 + $0xa8] sm:$0xff]
    %v1879 = vld [vmem:[#allocation10 + $0xb0] sm:$0xff]
    %v1880 = vld [vmem:[#allocation10 + $0xb8] sm:$0xff]
    %v1881 = vld [vmem:[#allocation10 + $0xc0] sm:$0xff]
    %v1882 = vld [vmem:[#allocation10 + $0xc8] sm:$0xff]
    %v1883 = vld [vmem:[#allocation10 + $0xd0] sm:$0xff]
    %v1884 = vld [vmem:[#allocation10 + $0xd8] sm:$0xff]
    %v1885 = vld [vmem:[#allocation10 + $0xe0] sm:$0xff]
    %v1886 = vld [vmem:[#allocation10 + $0xe8] sm:$0xff]
    %v1887 = vld [vmem:[#allocation10 + $0xf0] sm:$0xff]
    %v1888 = vld [vmem:[#allocation10 + $0xf8] sm:$0xff]
    %v1921 = vunpack.c.l.b16 %v1857
    %v1922 = vunpack.c.h.b16 %v1857
    %v1923 = vunpack.c.l.b16 %v1858
    %v1924 = vunpack.c.h.b16 %v1858
    %v1925 = vunpack.c.l.b16 %v1859
    %v1926 = vunpack.c.h.b16 %v1859
    %v1927 = vunpack.c.l.b16 %v1860
    %v1928 = vunpack.c.h.b16 %v1860
    %v1929 = vunpack.c.l.b16 %v1861
    %v1930 = vunpack.c.h.b16 %v1861
    %v1931 = vunpack.c.l.b16 %v1862
    %v1932 = vunpack.c.h.b16 %v1862
    %v1933 = vunpack.c.l.b16 %v1863
    %v1934 = vunpack.c.h.b16 %v1863
    %v1935 = vunpack.c.l.b16 %v1864
    %v1936 = vunpack.c.h.b16 %v1864
    %v1937 = vunpack.c.l.b16 %v1865
    %v1938 = vunpack.c.h.b16 %v1865
    %v1939 = vunpack.c.l.b16 %v1866
    %v1940 = vunpack.c.h.b16 %v1866
    %v1941 = vunpack.c.l.b16 %v1867
    %v1942 = vunpack.c.h.b16 %v1867
    %v1943 = vunpack.c.l.b16 %v1868
    %v1944 = vunpack.c.h.b16 %v1868
    %v1945 = vunpack.c.l.b16 %v1869
    %v1946 = vunpack.c.h.b16 %v1869
    %v1947 = vunpack.c.l.b16 %v1870
    %v1948 = vunpack.c.h.b16 %v1870
    %v1949 = vunpack.c.l.b16 %v1871
    %v1950 = vunpack.c.h.b16 %v1871
    %v1951 = vunpack.c.l.b16 %v1872
    %v1952 = vunpack.c.h.b16 %v1872
    %v1953 = vunpack.c.l.b16 %v1873
    %v1954 = vunpack.c.h.b16 %v1873
    %v1955 = vunpack.c.l.b16 %v1874
    %v1956 = vunpack.c.h.b16 %v1874
    %v1957 = vunpack.c.l.b16 %v1875
    %v1958 = vunpack.c.h.b16 %v1875
    %v1959 = vunpack.c.l.b16 %v1876
    %v1960 = vunpack.c.h.b16 %v1876
    %v1961 = vunpack.c.l.b16 %v1877
    %v1962 = vunpack.c.h.b16 %v1877
    %v1963 = vunpack.c.l.b16 %v1878
    %v1964 = vunpack.c.h.b16 %v1878
    %v1965 = vunpack.c.l.b16 %v1879
    %v1966 = vunpack.c.h.b16 %v1879
    %v1967 = vunpack.c.l.b16 %v1880
    %v1968 = vunpack.c.h.b16 %v1880
    %v1969 = vunpack.c.l.b16 %v1881
    %v1970 = vunpack.c.h.b16 %v1881
    %v1971 = vunpack.c.l.b16 %v1882
    %v1972 = vunpack.c.h.b16 %v1882
    %v1973 = vunpack.c.l.b16 %v1883
    %v1974 = vunpack.c.h.b16 %v1883
    %v1975 = vunpack.c.l.b16 %v1884
    %v1976 = vunpack.c.h.b16 %v1884
    %v1977 = vunpack.c.l.b16 %v1885
    %v1978 = vunpack.c.h.b16 %v1885
    %v1979 = vunpack.c.l.b16 %v1886
    %v1980 = vunpack.c.h.b16 %v1886
    %v1981 = vunpack.c.l.b16 %v1887
    %v1982 = vunpack.c.h.b16 %v1887
    %v1983 = vunpack.c.l.b16 %v1888
    %v1984 = vunpack.c.h.b16 %v1888
    %v1985 = vpack.c.b16 %v1925, %v1921
    %v1986 = vpack.c.b16 %v1926, %v1922
    %v1987 = vpack.c.b16 %v1927, %v1923
    %v1988 = vpack.c.b16 %v1928, %v1924
    %v1989 = vpack.c.b16 %v1933, %v1929
    %v1990 = vpack.c.b16 %v1934, %v1930
    %v1991 = vpack.c.b16 %v1935, %v1931
    %v1992 = vpack.c.b16 %v1936, %v1932
    %v1993 = vpack.c.b16 %v1941, %v1937
    %v1994 = vpack.c.b16 %v1942, %v1938
    %v1995 = vpack.c.b16 %v1943, %v1939
    %v1996 = vpack.c.b16 %v1944, %v1940
    %v1997 = vpack.c.b16 %v1949, %v1945
    %v1998 = vpack.c.b16 %v1950, %v1946
    %v1999 = vpack.c.b16 %v1951, %v1947
    %v2000 = vpack.c.b16 %v1952, %v1948
    %v2001 = vpack.c.b16 %v1957, %v1953
    %v2002 = vpack.c.b16 %v1958, %v1954
    %v2003 = vpack.c.b16 %v1959, %v1955
    %v2004 = vpack.c.b16 %v1960, %v1956
    %v2005 = vpack.c.b16 %v1965, %v1961
    %v2006 = vpack.c.b16 %v1966, %v1962
    %v2007 = vpack.c.b16 %v1967, %v1963
    %v2008 = vpack.c.b16 %v1968, %v1964
    %v2009 = vpack.c.b16 %v1973, %v1969
    %v2010 = vpack.c.b16 %v1974, %v1970
    %v2011 = vpack.c.b16 %v1975, %v1971
    %v2012 = vpack.c.b16 %v1976, %v1972
    %v2013 = vpack.c.b16 %v1981, %v1977
    %v2014 = vpack.c.b16 %v1982, %v1978
    %v2015 = vpack.c.b16 %v1983, %v1979
    %v2016 = vpack.c.b16 %v1984, %v1980
    %2049 = vmatprep.subr.bf16.mxu0 %v1986
    %2050 = vmatpush1.bf16.msra.mxu0 %v1985
    %2051 = vmatprep.subr.bf16.mxu0 %v1990
    %2052 = vmatpush1.bf16.msra.mxu0 %v1989
    %2053 = vmatprep.subr.bf16.mxu0 %v1994
    %2054 = vmatpush1.bf16.msra.mxu0 %v1993
    %2055 = vmatprep.subr.bf16.mxu0 %v1998
    %2056 = vmatpush1.bf16.msra.mxu0 %v1997
    %2057 = vmatprep.subr.bf16.mxu0 %v2002
    %2058 = vmatpush1.bf16.msra.mxu0 %v2001
    %2059 = vmatprep.subr.bf16.mxu0 %v2006
    %2060 = vmatpush1.bf16.msra.mxu0 %v2005
    %2061 = vmatprep.subr.bf16.mxu0 %v2010
    %2062 = vmatpush1.bf16.msra.mxu0 %v2009
    %2063 = vmatprep.subr.bf16.mxu0 %v2014
    %2064 = vmatpush1.bf16.msra.mxu0 %v2013
    %2065 = vmatprep.subr.bf16.mxu0 0
    %2066 = vmatpush1.bf16.msra.mxu0 0
    %2067 = vmatprep.subr.bf16.mxu0 0
    %2068 = vmatpush1.bf16.msra.mxu0 0
    %2069 = vmatprep.subr.bf16.mxu0 0
    %2070 = vmatpush1.bf16.msra.mxu0 0
    %2071 = vmatprep.subr.bf16.mxu0 0
    %2072 = vmatpush1.bf16.msra.mxu0 0
    %2073 = vmatprep.subr.bf16.mxu0 0
    %2074 = vmatpush1.bf16.msra.mxu0 0
    %2075 = vmatprep.subr.bf16.mxu0 0
    %2076 = vmatpush1.bf16.msra.mxu0 0
    %2077 = vmatprep.subr.bf16.mxu0 0
    %2078 = vmatpush1.bf16.msra.mxu0 0
    %2079 = vmatprep.subr.bf16.mxu0 0
    %2080 = vmatpush1.bf16.msra.mxu0 0
    %2081 = vmatprep.mubr.bf16.mxu0 0
    %2082 = vmatmul.mubr.bf16.gmra.mrb[0].mxu0 %v1856
    %v2083 = vpop.f32.mrb[0].mxu0
    %v2084 = vadd.f32 0.0, %v2083
    %v2085 = vpop.f32.mrb[0].mxu0
    %v2086 = vadd.f32 0.0, %v2085
    %v2087 = vpop.f32.mrb[0].mxu0
    %v2088 = vpop.f32.mrb[0].mxu0
    %2089 = vdwg.mxu0
    %2090 = vmatprep.subr.bf16.mxu0 %v1988
    %2091 = vmatpush1.bf16.msra.mxu0 %v1987
    %2092 = vmatprep.subr.bf16.mxu0 %v1992
    %2093 = vmatpush1.bf16.msra.mxu0 %v1991
    %2094 = vmatprep.subr.bf16.mxu0 %v1996
    %2095 = vmatpush1.bf16.msra.mxu0 %v1995
    %2096 = vmatprep.subr.bf16.mxu0 %v2000
    %2097 = vmatpush1.bf16.msra.mxu0 %v1999
    %2098 = vmatprep.subr.bf16.mxu0 %v2004
    %2099 = vmatpush1.bf16.msra.mxu0 %v2003
    %2100 = vmatprep.subr.bf16.mxu0 %v2008
    %2101 = vmatpush1.bf16.msra.mxu0 %v2007
    %2102 = vmatprep.subr.bf16.mxu0 %v2012
    %2103 = vmatpush1.bf16.msra.mxu0 %v2011
    %2104 = vmatprep.subr.bf16.mxu0 %v2016
    %2105 = vmatpush1.bf16.msra.mxu0 %v2015
    %2106 = vmatprep.subr.bf16.mxu0 0
    %2107 = vmatpush1.bf16.msra.mxu0 0
    %2108 = vmatprep.subr.bf16.mxu0 0
    %2109 = vmatpush1.bf16.msra.mxu0 0
    %2110 = vmatprep.subr.bf16.mxu0 0
    %2111 = vmatpush1.bf16.msra.mxu0 0
    %2112 = vmatprep.subr.bf16.mxu0 0
    %2113 = vmatpush1.bf16.msra.mxu0 0
    %2114 = vmatprep.subr.bf16.mxu0 0
    %2115 = vmatpush1.bf16.msra.mxu0 0
    %2116 = vmatprep.subr.bf16.mxu0 0
    %2117 = vmatpush1.bf16.msra.mxu0 0
    %2118 = vmatprep.subr.bf16.mxu0 0
    %2119 = vmatpush1.bf16.msra.mxu0 0
    %2120 = vmatprep.subr.bf16.mxu0 0
    %2121 = vmatpush1.bf16.msra.mxu0 0
    %2122 = vmatprep.mubr.bf16.mxu0 0
    %2123 = vmatmul.mubr.bf16.gmra.mrb[0].mxu0 %v1856
    %v2124 = vpop.f32.mrb[0].mxu0
    %v2125 = vadd.f32 0.0, %v2124
    %v2126 = vpop.f32.mrb[0].mxu0
    %v2127 = vadd.f32 0.0, %v2126
    %v2128 = vpop.f32.mrb[0].mxu0
    %v2129 = vpop.f32.mrb[0].mxu0
    %2130 = vdwg.mxu0
    %v2131 = vadd.f32 %v1852, %v2084
    %v2132 = vadd.f32 %v1853, %v2086
    %v2133 = vadd.f32 %v1854, %v2125
    %v2134 = vadd.f32 %v1855, %v2127
    %v2135 = vxor.u32 %v2131, 2147483648
    %v2136 = vmul.f32 %v2135, 1.442695
    %v2137 = vpow.pop %v2136
    %v2138 = vadd.f32 %v2137, 1.0
    %v2139 = vrcp.pop %v2138
    %v2140 = vmul.f32 1.0, %v2139
    %v2141 = vxor.u32 %v2132, 2147483648
    %v2142 = vmul.f32 %v2141, 1.442695
    %v2143 = vpow.pop %v2142
    %v2144 = vadd.f32 %v2143, 1.0
    %v2145 = vrcp.pop %v2144
    %v2146 = vmul.f32 1.0, %v2145
    %v2147 = vtanh.pop %v2133
    %v2148 = vxor.u32 %v2134, 2147483648
    %v2149 = vmul.f32 %v2148, 1.442695
    %v2150 = vpow.pop %v2149
    %v2151 = vadd.f32 %v2150, 1.0
    %v2152 = vrcp.pop %v2151
    %v2153 = vmul.f32 1.0, %v2152
    %v2154 = vmul.f32 %v2146, %v1844
    %v2155 = vmul.f32 %v2140, %v2147
    %v2156 = vadd.f32 %v2154, %v2155
    %v2157 = vtanh.pop %v2156
    %v2158 = vmul.f32 %v2153, %v2157
    %s2159 = scalar_lea.vmem [#allocation3], 32
    %2160 = vst [vmem:[%s2159] sm:$0xff] %v2158
    %s2161 = smul.u32 5, 4
    %s2162 = smul.addr %s2161, 8
    %s2163 = scalar_lea.vmem [#allocation2], %s2162
    %v2164 = vld [vmem:[%s2163] sm:$0xff]
    %v2165 = vld [vmem:[%s2163 + $0x8] sm:$0xff]
    %v2166 = vld [vmem:[%s2163 + $0x10] sm:$0xff]
    %v2167 = vld [vmem:[%s2163 + $0x18] sm:$0xff]
    %v2168 = vpack.c.bf16 %v2158, %v2158
    %v2169 = vld [vmem:[#allocation10] sm:$0xff]
    %v2170 = vld [vmem:[#allocation10 + $0x8] sm:$0xff]
    %v2171 = vld [vmem:[#allocation10 + $0x10] sm:$0xff]
    %v2172 = vld [vmem:[#allocation10 + $0x18] sm:$0xff]
    %v2173 = vld [vmem:[#allocation10 + $0x20] sm:$0xff]
    %v2174 = vld [vmem:[#allocation10 + $0x28] sm:$0xff]
    %v2175 = vld [vmem:[#allocation10 + $0x30] sm:$0xff]
    %v2176 = vld [vmem:[#allocation10 + $0x38] sm:$0xff]
    %v2177 = vld [vmem:[#allocation10 + $0x40] sm:$0xff]
    %v2178 = vld [vmem:[#allocation10 + $0x48] sm:$0xff]
    %v2179 = vld [vmem:[#allocation10 + $0x50] sm:$0xff]
    %v2180 = vld [vmem:[#allocation10 + $0x58] sm:$0xff]
    %v2181 = vld [vmem:[#allocation10 + $0x60] sm:$0xff]
    %v2182 = vld [vmem:[#allocation10 + $0x68] sm:$0xff]
    %v2183 = vld [vmem:[#allocation10 + $0x70] sm:$0xff]
    %v2184 = vld [vmem:[#allocation10 + $0x78] sm:$0xff]
    %v2185 = vld [vmem:[#allocation10 + $0x80] sm:$0xff]
    %v2186 = vld [vmem:[#allocation10 + $0x88] sm:$0xff]
    %v2187 = vld [vmem:[#allocation10 + $0x90] sm:$0xff]
    %v2188 = vld [vmem:[#allocation10 + $0x98] sm:$0xff]
    %v2189 = vld [vmem:[#allocation10 + $0xa0] sm:$0xff]
    %v2190 = vld [vmem:[#allocation10 + $0xa8] sm:$0xff]
    %v2191 = vld [vmem:[#allocation10 + $0xb0] sm:$0xff]
    %v2192 = vld [vmem:[#allocation10 + $0xb8] sm:$0xff]
    %v2193 = vld [vmem:[#allocation10 + $0xc0] sm:$0xff]
    %v2194 = vld [vmem:[#allocation10 + $0xc8] sm:$0xff]
    %v2195 = vld [vmem:[#allocation10 + $0xd0] sm:$0xff]
    %v2196 = vld [vmem:[#allocation10 + $0xd8] sm:$0xff]
    %v2197 = vld [vmem:[#allocation10 + $0xe0] sm:$0xff]
    %v2198 = vld [vmem:[#allocation10 + $0xe8] sm:$0xff]
    %v2199 = vld [vmem:[#allocation10 + $0xf0] sm:$0xff]
    %v2200 = vld [vmem:[#allocation10 + $0xf8] sm:$0xff]
    %v2233 = vunpack.c.l.b16 %v2169
    %v2234 = vunpack.c.h.b16 %v2169
    %v2235 = vunpack.c.l.b16 %v2170
    %v2236 = vunpack.c.h.b16 %v2170
    %v2237 = vunpack.c.l.b16 %v2171
    %v2238 = vunpack.c.h.b16 %v2171
    %v2239 = vunpack.c.l.b16 %v2172
    %v2240 = vunpack.c.h.b16 %v2172
    %v2241 = vunpack.c.l.b16 %v2173
    %v2242 = vunpack.c.h.b16 %v2173
    %v2243 = vunpack.c.l.b16 %v2174
    %v2244 = vunpack.c.h.b16 %v2174
    %v2245 = vunpack.c.l.b16 %v2175
    %v2246 = vunpack.c.h.b16 %v2175
    %v2247 = vunpack.c.l.b16 %v2176
    %v2248 = vunpack.c.h.b16 %v2176
    %v2249 = vunpack.c.l.b16 %v2177
    %v2250 = vunpack.c.h.b16 %v2177
    %v2251 = vunpack.c.l.b16 %v2178
    %v2252 = vunpack.c.h.b16 %v2178
    %v2253 = vunpack.c.l.b16 %v2179
    %v2254 = vunpack.c.h.b16 %v2179
    %v2255 = vunpack.c.l.b16 %v2180
    %v2256 = vunpack.c.h.b16 %v2180
    %v2257 = vunpack.c.l.b16 %v2181
    %v2258 = vunpack.c.h.b16 %v2181
    %v2259 = vunpack.c.l.b16 %v2182
    %v2260 = vunpack.c.h.b16 %v2182
    %v2261 = vunpack.c.l.b16 %v2183
    %v2262 = vunpack.c.h.b16 %v2183
    %v2263 = vunpack.c.l.b16 %v2184
    %v2264 = vunpack.c.h.b16 %v2184
    %v2265 = vunpack.c.l.b16 %v2185
    %v2266 = vunpack.c.h.b16 %v2185
    %v2267 = vunpack.c.l.b16 %v2186
    %v2268 = vunpack.c.h.b16 %v2186
    %v2269 = vunpack.c.l.b16 %v2187
    %v2270 = vunpack.c.h.b16 %v2187
    %v2271 = vunpack.c.l.b16 %v2188
    %v2272 = vunpack.c.h.b16 %v2188
    %v2273 = vunpack.c.l.b16 %v2189
    %v2274 = vunpack.c.h.b16 %v2189
    %v2275 = vunpack.c.l.b16 %v2190
    %v2276 = vunpack.c.h.b16 %v2190
    %v2277 = vunpack.c.l.b16 %v2191
    %v2278 = vunpack.c.h.b16 %v2191
    %v2279 = vunpack.c.l.b16 %v2192
    %v2280 = vunpack.c.h.b16 %v2192
    %v2281 = vunpack.c.l.b16 %v2193
    %v2282 = vunpack.c.h.b16 %v2193
    %v2283 = vunpack.c.l.b16 %v2194
    %v2284 = vunpack.c.h.b16 %v2194
    %v2285 = vunpack.c.l.b16 %v2195
    %v2286 = vunpack.c.h.b16 %v2195
    %v2287 = vunpack.c.l.b16 %v2196
    %v2288 = vunpack.c.h.b16 %v2196
    %v2289 = vunpack.c.l.b16 %v2197
    %v2290 = vunpack.c.h.b16 %v2197
    %v2291 = vunpack.c.l.b16 %v2198
    %v2292 = vunpack.c.h.b16 %v2198
    %v2293 = vunpack.c.l.b16 %v2199
    %v2294 = vunpack.c.h.b16 %v2199
    %v2295 = vunpack.c.l.b16 %v2200
    %v2296 = vunpack.c.h.b16 %v2200
    %v2297 = vpack.c.b16 %v2237, %v2233
    %v2298 = vpack.c.b16 %v2238, %v2234
    %v2299 = vpack.c.b16 %v2239, %v2235
    %v2300 = vpack.c.b16 %v2240, %v2236
    %v2301 = vpack.c.b16 %v2245, %v2241
    %v2302 = vpack.c.b16 %v2246, %v2242
    %v2303 = vpack.c.b16 %v2247, %v2243
    %v2304 = vpack.c.b16 %v2248, %v2244
    %v2305 = vpack.c.b16 %v2253, %v2249
    %v2306 = vpack.c.b16 %v2254, %v2250
    %v2307 = vpack.c.b16 %v2255, %v2251
    %v2308 = vpack.c.b16 %v2256, %v2252
    %v2309 = vpack.c.b16 %v2261, %v2257
    %v2310 = vpack.c.b16 %v2262, %v2258
    %v2311 = vpack.c.b16 %v2263, %v2259
    %v2312 = vpack.c.b16 %v2264, %v2260
    %v2313 = vpack.c.b16 %v2269, %v2265
    %v2314 = vpack.c.b16 %v2270, %v2266
    %v2315 = vpack.c.b16 %v2271, %v2267
    %v2316 = vpack.c.b16 %v2272, %v2268
    %v2317 = vpack.c.b16 %v2277, %v2273
    %v2318 = vpack.c.b16 %v2278, %v2274
    %v2319 = vpack.c.b16 %v2279, %v2275
    %v2320 = vpack.c.b16 %v2280, %v2276
    %v2321 = vpack.c.b16 %v2285, %v2281
    %v2322 = vpack.c.b16 %v2286, %v2282
    %v2323 = vpack.c.b16 %v2287, %v2283
    %v2324 = vpack.c.b16 %v2288, %v2284
    %v2325 = vpack.c.b16 %v2293, %v2289
    %v2326 = vpack.c.b16 %v2294, %v2290
    %v2327 = vpack.c.b16 %v2295, %v2291
    %v2328 = vpack.c.b16 %v2296, %v2292
    %2361 = vmatprep.subr.bf16.mxu0 %v2298
    %2362 = vmatpush1.bf16.msra.mxu0 %v2297
    %2363 = vmatprep.subr.bf16.mxu0 %v2302
    %2364 = vmatpush1.bf16.msra.mxu0 %v2301
    %2365 = vmatprep.subr.bf16.mxu0 %v2306
    %2366 = vmatpush1.bf16.msra.mxu0 %v2305
    %2367 = vmatprep.subr.bf16.mxu0 %v2310
    %2368 = vmatpush1.bf16.msra.mxu0 %v2309
    %2369 = vmatprep.subr.bf16.mxu0 %v2314
    %2370 = vmatpush1.bf16.msra.mxu0 %v2313
    %2371 = vmatprep.subr.bf16.mxu0 %v2318
    %2372 = vmatpush1.bf16.msra.mxu0 %v2317
    %2373 = vmatprep.subr.bf16.mxu0 %v2322
    %2374 = vmatpush1.bf16.msra.mxu0 %v2321
    %2375 = vmatprep.subr.bf16.mxu0 %v2326
    %2376 = vmatpush1.bf16.msra.mxu0 %v2325
    %2377 = vmatprep.subr.bf16.mxu0 0
    %2378 = vmatpush1.bf16.msra.mxu0 0
    %2379 = vmatprep.subr.bf16.mxu0 0
    %2380 = vmatpush1.bf16.msra.mxu0 0
    %2381 = vmatprep.subr.bf16.mxu0 0
    %2382 = vmatpush1.bf16.msra.mxu0 0
    %2383 = vmatprep.subr.bf16.mxu0 0
    %2384 = vmatpush1.bf16.msra.mxu0 0
    %2385 = vmatprep.subr.bf16.mxu0 0
    %2386 = vmatpush1.bf16.msra.mxu0 0
    %2387 = vmatprep.subr.bf16.mxu0 0
    %2388 = vmatpush1.bf16.msra.mxu0 0
    %2389 = vmatprep.subr.bf16.mxu0 0
    %2390 = vmatpush1.bf16.msra.mxu0 0
    %2391 = vmatprep.subr.bf16.mxu0 0
    %2392 = vmatpush1.bf16.msra.mxu0 0
    %2393 = vmatprep.mubr.bf16.mxu0 0
    %2394 = vmatmul.mubr.bf16.gmra.mrb[0].mxu0 %v2168
    %v2395 = vpop.f32.mrb[0].mxu0
    %v2396 = vadd.f32 0.0, %v2395
    %v2397 = vpop.f32.mrb[0].mxu0
    %v2398 = vadd.f32 0.0, %v2397
    %v2399 = vpop.f32.mrb[0].mxu0
    %v2400 = vpop.f32.mrb[0].mxu0
    %2401 = vdwg.mxu0
    %2402 = vmatprep.subr.bf16.mxu0 %v2300
    %2403 = vmatpush1.bf16.msra.mxu0 %v2299
    %2404 = vmatprep.subr.bf16.mxu0 %v2304
    %2405 = vmatpush1.bf16.msra.mxu0 %v2303
    %2406 = vmatprep.subr.bf16.mxu0 %v2308
    %2407 = vmatpush1.bf16.msra.mxu0 %v2307
    %2408 = vmatprep.subr.bf16.mxu0 %v2312
    %2409 = vmatpush1.bf16.msra.mxu0 %v2311
    %2410 = vmatprep.subr.bf16.mxu0 %v2316
    %2411 = vmatpush1.bf16.msra.mxu0 %v2315
    %2412 = vmatprep.subr.bf16.mxu0 %v2320
    %2413 = vmatpush1.bf16.msra.mxu0 %v2319
    %2414 = vmatprep.subr.bf16.mxu0 %v2324
    %2415 = vmatpush1.bf16.msra.mxu0 %v2323
    %2416 = vmatprep.subr.bf16.mxu0 %v2328
    %2417 = vmatpush1.bf16.msra.mxu0 %v2327
    %2418 = vmatprep.subr.bf16.mxu0 0
    %2419 = vmatpush1.bf16.msra.mxu0 0
    %2420 = vmatprep.subr.bf16.mxu0 0
    %2421 = vmatpush1.bf16.msra.mxu0 0
    %2422 = vmatprep.subr.bf16.mxu0 0
    %2423 = vmatpush1.bf16.msra.mxu0 0
    %2424 = vmatprep.subr.bf16.mxu0 0
    %2425 = vmatpush1.bf16.msra.mxu0 0
    %2426 = vmatprep.subr.bf16.mxu0 0
    %2427 = vmatpush1.bf16.msra.mxu0 0
    %2428 = vmatprep.subr.bf16.mxu0 0
    %2429 = vmatpush1.bf16.msra.mxu0 0
    %2430 = vmatprep.subr.bf16.mxu0 0
    %2431 = vmatpush1.bf16.msra.mxu0 0
    %2432 = vmatprep.subr.bf16.mxu0 0
    %2433 = vmatpush1.bf16.msra.mxu0 0
    %2434 = vmatprep.mubr.bf16.mxu0 0
    %2435 = vmatmul.mubr.bf16.gmra.mrb[0].mxu0 %v2168
    %v2436 = vpop.f32.mrb[0].mxu0
    %v2437 = vadd.f32 0.0, %v2436
    %v2438 = vpop.f32.mrb[0].mxu0
    %v2439 = vadd.f32 0.0, %v2438
    %v2440 = vpop.f32.mrb[0].mxu0
    %v2441 = vpop.f32.mrb[0].mxu0
    %2442 = vdwg.mxu0
    %v2443 = vadd.f32 %v2164, %v2396
    %v2444 = vadd.f32 %v2165, %v2398
    %v2445 = vadd.f32 %v2166, %v2437
    %v2446 = vadd.f32 %v2167, %v2439
    %v2447 = vxor.u32 %v2443, 2147483648
    %v2448 = vmul.f32 %v2447, 1.442695
    %v2449 = vpow.pop %v2448
    %v2450 = vadd.f32 %v2449, 1.0
    %v2451 = vrcp.pop %v2450
    %v2452 = vmul.f32 1.0, %v2451
    %v2453 = vxor.u32 %v2444, 2147483648
    %v2454 = vmul.f32 %v2453, 1.442695
    %v2455 = vpow.pop %v2454
    %v2456 = vadd.f32 %v2455, 1.0
    %v2457 = vrcp.pop %v2456
    %v2458 = vmul.f32 1.0, %v2457
    %v2459 = vtanh.pop %v2445
    %v2460 = vxor.u32 %v2446, 2147483648
    %v2461 = vmul.f32 %v2460, 1.442695
    %v2462 = vpow.pop %v2461
    %v2463 = vadd.f32 %v2462, 1.0
    %v2464 = vrcp.pop %v2463
    %v2465 = vmul.f32 1.0, %v2464
    %v2466 = vmul.f32 %v2458, %v2156
    %v2467 = vmul.f32 %v2452, %v2459
    %v2468 = vadd.f32 %v2466, %v2467
    %v2469 = vtanh.pop %v2468
    %v2470 = vmul.f32 %v2465, %v2469
    %s2471 = scalar_lea.vmem [#allocation3], 40
    %2472 = vst [vmem:[%s2471] sm:$0xff] %v2470
    %s2473 = smul.u32 6, 4
    %s2474 = smul.addr %s2473, 8
    %s2475 = scalar_lea.vmem [#allocation2], %s2474
    %v2476 = vld [vmem:[%s2475] sm:$0xff]
    %v2477 = vld [vmem:[%s2475 + $0x8] sm:$0xff]
    %v2478 = vld [vmem:[%s2475 + $0x10] sm:$0xff]
    %v2479 = vld [vmem:[%s2475 + $0x18] sm:$0xff]
    %v2480 = vpack.c.bf16 %v2470, %v2470
    %v2481 = vld [vmem:[#allocation10] sm:$0xff]
    %v2482 = vld [vmem:[#allocation10 + $0x8] sm:$0xff]
    %v2483 = vld [vmem:[#allocation10 + $0x10] sm:$0xff]
    %v2484 = vld [vmem:[#allocation10 + $0x18] sm:$0xff]
    %v2485 = vld [vmem:[#allocation10 + $0x20] sm:$0xff]
    %v2486 = vld [vmem:[#allocation10 + $0x28] sm:$0xff]
    %v2487 = vld [vmem:[#allocation10 + $0x30] sm:$0xff]
    %v2488 = vld [vmem:[#allocation10 + $0x38] sm:$0xff]
    %v2489 = vld [vmem:[#allocation10 + $0x40] sm:$0xff]
    %v2490 = vld [vmem:[#allocation10 + $0x48] sm:$0xff]
    %v2491 = vld [vmem:[#allocation10 + $0x50] sm:$0xff]
    %v2492 = vld [vmem:[#allocation10 + $0x58] sm:$0xff]
    %v2493 = vld [vmem:[#allocation10 + $0x60] sm:$0xff]
    %v2494 = vld [vmem:[#allocation10 + $0x68] sm:$0xff]
    %v2495 = vld [vmem:[#allocation10 + $0x70] sm:$0xff]
    %v2496 = vld [vmem:[#allocation10 + $0x78] sm:$0xff]
    %v2497 = vld [vmem:[#allocation10 + $0x80] sm:$0xff]
    %v2498 = vld [vmem:[#allocation10 + $0x88] sm:$0xff]
    %v2499 = vld [vmem:[#allocation10 + $0x90] sm:$0xff]
    %v2500 = vld [vmem:[#allocation10 + $0x98] sm:$0xff]
    %v2501 = vld [vmem:[#allocation10 + $0xa0] sm:$0xff]
    %v2502 = vld [vmem:[#allocation10 + $0xa8] sm:$0xff]
    %v2503 = vld [vmem:[#allocation10 + $0xb0] sm:$0xff]
    %v2504 = vld [vmem:[#allocation10 + $0xb8] sm:$0xff]
    %v2505 = vld [vmem:[#allocation10 + $0xc0] sm:$0xff]
    %v2506 = vld [vmem:[#allocation10 + $0xc8] sm:$0xff]
    %v2507 = vld [vmem:[#allocation10 + $0xd0] sm:$0xff]
    %v2508 = vld [vmem:[#allocation10 + $0xd8] sm:$0xff]
    %v2509 = vld [vmem:[#allocation10 + $0xe0] sm:$0xff]
    %v2510 = vld [vmem:[#allocation10 + $0xe8] sm:$0xff]
    %v2511 = vld [vmem:[#allocation10 + $0xf0] sm:$0xff]
    %v2512 = vld [vmem:[#allocation10 + $0xf8] sm:$0xff]
    %v2545 = vunpack.c.l.b16 %v2481
    %v2546 = vunpack.c.h.b16 %v2481
    %v2547 = vunpack.c.l.b16 %v2482
    %v2548 = vunpack.c.h.b16 %v2482
    %v2549 = vunpack.c.l.b16 %v2483
    %v2550 = vunpack.c.h.b16 %v2483
    %v2551 = vunpack.c.l.b16 %v2484
    %v2552 = vunpack.c.h.b16 %v2484
    %v2553 = vunpack.c.l.b16 %v2485
    %v2554 = vunpack.c.h.b16 %v2485
    %v2555 = vunpack.c.l.b16 %v2486
    %v2556 = vunpack.c.h.b16 %v2486
    %v2557 = vunpack.c.l.b16 %v2487
    %v2558 = vunpack.c.h.b16 %v2487
    %v2559 = vunpack.c.l.b16 %v2488
    %v2560 = vunpack.c.h.b16 %v2488
    %v2561 = vunpack.c.l.b16 %v2489
    %v2562 = vunpack.c.h.b16 %v2489
    %v2563 = vunpack.c.l.b16 %v2490
    %v2564 = vunpack.c.h.b16 %v2490
    %v2565 = vunpack.c.l.b16 %v2491
    %v2566 = vunpack.c.h.b16 %v2491
    %v2567 = vunpack.c.l.b16 %v2492
    %v2568 = vunpack.c.h.b16 %v2492
    %v2569 = vunpack.c.l.b16 %v2493
    %v2570 = vunpack.c.h.b16 %v2493
    %v2571 = vunpack.c.l.b16 %v2494
    %v2572 = vunpack.c.h.b16 %v2494
    %v2573 = vunpack.c.l.b16 %v2495
    %v2574 = vunpack.c.h.b16 %v2495
    %v2575 = vunpack.c.l.b16 %v2496
    %v2576 = vunpack.c.h.b16 %v2496
    %v2577 = vunpack.c.l.b16 %v2497
    %v2578 = vunpack.c.h.b16 %v2497
    %v2579 = vunpack.c.l.b16 %v2498
    %v2580 = vunpack.c.h.b16 %v2498
    %v2581 = vunpack.c.l.b16 %v2499
    %v2582 = vunpack.c.h.b16 %v2499
    %v2583 = vunpack.c.l.b16 %v2500
    %v2584 = vunpack.c.h.b16 %v2500
    %v2585 = vunpack.c.l.b16 %v2501
    %v2586 = vunpack.c.h.b16 %v2501
    %v2587 = vunpack.c.l.b16 %v2502
    %v2588 = vunpack.c.h.b16 %v2502
    %v2589 = vunpack.c.l.b16 %v2503
    %v2590 = vunpack.c.h.b16 %v2503
    %v2591 = vunpack.c.l.b16 %v2504
    %v2592 = vunpack.c.h.b16 %v2504
    %v2593 = vunpack.c.l.b16 %v2505
    %v2594 = vunpack.c.h.b16 %v2505
    %v2595 = vunpack.c.l.b16 %v2506
    %v2596 = vunpack.c.h.b16 %v2506
    %v2597 = vunpack.c.l.b16 %v2507
    %v2598 = vunpack.c.h.b16 %v2507
    %v2599 = vunpack.c.l.b16 %v2508
    %v2600 = vunpack.c.h.b16 %v2508
    %v2601 = vunpack.c.l.b16 %v2509
    %v2602 = vunpack.c.h.b16 %v2509
    %v2603 = vunpack.c.l.b16 %v2510
    %v2604 = vunpack.c.h.b16 %v2510
    %v2605 = vunpack.c.l.b16 %v2511
    %v2606 = vunpack.c.h.b16 %v2511
    %v2607 = vunpack.c.l.b16 %v2512
    %v2608 = vunpack.c.h.b16 %v2512
    %v2609 = vpack.c.b16 %v2549, %v2545
    %v2610 = vpack.c.b16 %v2550, %v2546
    %v2611 = vpack.c.b16 %v2551, %v2547
    %v2612 = vpack.c.b16 %v2552, %v2548
    %v2613 = vpack.c.b16 %v2557, %v2553
    %v2614 = vpack.c.b16 %v2558, %v2554
    %v2615 = vpack.c.b16 %v2559, %v2555
    %v2616 = vpack.c.b16 %v2560, %v2556
    %v2617 = vpack.c.b16 %v2565, %v2561
    %v2618 = vpack.c.b16 %v2566, %v2562
    %v2619 = vpack.c.b16 %v2567, %v2563
    %v2620 = vpack.c.b16 %v2568, %v2564
    %v2621 = vpack.c.b16 %v2573, %v2569
    %v2622 = vpack.c.b16 %v2574, %v2570
    %v2623 = vpack.c.b16 %v2575, %v2571
    %v2624 = vpack.c.b16 %v2576, %v2572
    %v2625 = vpack.c.b16 %v2581, %v2577
    %v2626 = vpack.c.b16 %v2582, %v2578
    %v2627 = vpack.c.b16 %v2583, %v2579
    %v2628 = vpack.c.b16 %v2584, %v2580
    %v2629 = vpack.c.b16 %v2589, %v2585
    %v2630 = vpack.c.b16 %v2590, %v2586
    %v2631 = vpack.c.b16 %v2591, %v2587
    %v2632 = vpack.c.b16 %v2592, %v2588
    %v2633 = vpack.c.b16 %v2597, %v2593
    %v2634 = vpack.c.b16 %v2598, %v2594
    %v2635 = vpack.c.b16 %v2599, %v2595
    %v2636 = vpack.c.b16 %v2600, %v2596
    %v2637 = vpack.c.b16 %v2605, %v2601
    %v2638 = vpack.c.b16 %v2606, %v2602
    %v2639 = vpack.c.b16 %v2607, %v2603
    %v2640 = vpack.c.b16 %v2608, %v2604
    %2673 = vmatprep.subr.bf16.mxu0 %v2610
    %2674 = vmatpush1.bf16.msra.mxu0 %v2609
    %2675 = vmatprep.subr.bf16.mxu0 %v2614
    %2676 = vmatpush1.bf16.msra.mxu0 %v2613
    %2677 = vmatprep.subr.bf16.mxu0 %v2618
    %2678 = vmatpush1.bf16.msra.mxu0 %v2617
    %2679 = vmatprep.subr.bf16.mxu0 %v2622
    %2680 = vmatpush1.bf16.msra.mxu0 %v2621
    %2681 = vmatprep.subr.bf16.mxu0 %v2626
    %2682 = vmatpush1.bf16.msra.mxu0 %v2625
    %2683 = vmatprep.subr.bf16.mxu0 %v2630
    %2684 = vmatpush1.bf16.msra.mxu0 %v2629
    %2685 = vmatprep.subr.bf16.mxu0 %v2634
    %2686 = vmatpush1.bf16.msra.mxu0 %v2633
    %2687 = vmatprep.subr.bf16.mxu0 %v2638
    %2688 = vmatpush1.bf16.msra.mxu0 %v2637
    %2689 = vmatprep.subr.bf16.mxu0 0
    %2690 = vmatpush1.bf16.msra.mxu0 0
    %2691 = vmatprep.subr.bf16.mxu0 0
    %2692 = vmatpush1.bf16.msra.mxu0 0
    %2693 = vmatprep.subr.bf16.mxu0 0
    %2694 = vmatpush1.bf16.msra.mxu0 0
    %2695 = vmatprep.subr.bf16.mxu0 0
    %2696 = vmatpush1.bf16.msra.mxu0 0
    %2697 = vmatprep.subr.bf16.mxu0 0
    %2698 = vmatpush1.bf16.msra.mxu0 0
    %2699 = vmatprep.subr.bf16.mxu0 0
    %2700 = vmatpush1.bf16.msra.mxu0 0
    %2701 = vmatprep.subr.bf16.mxu0 0
    %2702 = vmatpush1.bf16.msra.mxu0 0
    %2703 = vmatprep.subr.bf16.mxu0 0
    %2704 = vmatpush1.bf16.msra.mxu0 0
    %2705 = vmatprep.mubr.bf16.mxu0 0
    %2706 = vmatmul.mubr.bf16.gmra.mrb[0].mxu0 %v2480
    %v2707 = vpop.f32.mrb[0].mxu0
    %v2708 = vadd.f32 0.0, %v2707
    %v2709 = vpop.f32.mrb[0].mxu0
    %v2710 = vadd.f32 0.0, %v2709
    %v2711 = vpop.f32.mrb[0].mxu0
    %v2712 = vpop.f32.mrb[0].mxu0
    %2713 = vdwg.mxu0
    %2714 = vmatprep.subr.bf16.mxu0 %v2612
    %2715 = vmatpush1.bf16.msra.mxu0 %v2611
    %2716 = vmatprep.subr.bf16.mxu0 %v2616
    %2717 = vmatpush1.bf16.msra.mxu0 %v2615
    %2718 = vmatprep.subr.bf16.mxu0 %v2620
    %2719 = vmatpush1.bf16.msra.mxu0 %v2619
    %2720 = vmatprep.subr.bf16.mxu0 %v2624
    %2721 = vmatpush1.bf16.msra.mxu0 %v2623
    %2722 = vmatprep.subr.bf16.mxu0 %v2628
    %2723 = vmatpush1.bf16.msra.mxu0 %v2627
    %2724 = vmatprep.subr.bf16.mxu0 %v2632
    %2725 = vmatpush1.bf16.msra.mxu0 %v2631
    %2726 = vmatprep.subr.bf16.mxu0 %v2636
    %2727 = vmatpush1.bf16.msra.mxu0 %v2635
    %2728 = vmatprep.subr.bf16.mxu0 %v2640
    %2729 = vmatpush1.bf16.msra.mxu0 %v2639
    %2730 = vmatprep.subr.bf16.mxu0 0
    %2731 = vmatpush1.bf16.msra.mxu0 0
    %2732 = vmatprep.subr.bf16.mxu0 0
    %2733 = vmatpush1.bf16.msra.mxu0 0
    %2734 = vmatprep.subr.bf16.mxu0 0
    %2735 = vmatpush1.bf16.msra.mxu0 0
    %2736 = vmatprep.subr.bf16.mxu0 0
    %2737 = vmatpush1.bf16.msra.mxu0 0
    %2738 = vmatprep.subr.bf16.mxu0 0
    %2739 = vmatpush1.bf16.msra.mxu0 0
    %2740 = vmatprep.subr.bf16.mxu0 0
    %2741 = vmatpush1.bf16.msra.mxu0 0
    %2742 = vmatprep.subr.bf16.mxu0 0
    %2743 = vmatpush1.bf16.msra.mxu0 0
    %2744 = vmatprep.subr.bf16.mxu0 0
    %2745 = vmatpush1.bf16.msra.mxu0 0
    %2746 = vmatprep.mubr.bf16.mxu0 0
    %2747 = vmatmul.mubr.bf16.gmra.mrb[0].mxu0 %v2480
    %v2748 = vpop.f32.mrb[0].mxu0
    %v2749 = vadd.f32 0.0, %v2748
    %v2750 = vpop.f32.mrb[0].mxu0
    %v2751 = vadd.f32 0.0, %v2750
    %v2752 = vpop.f32.mrb[0].mxu0
    %v2753 = vpop.f32.mrb[0].mxu0
    %2754 = vdwg.mxu0
    %v2755 = vadd.f32 %v2476, %v2708
    %v2756 = vadd.f32 %v2477, %v2710
    %v2757 = vadd.f32 %v2478, %v2749
    %v2758 = vadd.f32 %v2479, %v2751
    %v2759 = vxor.u32 %v2755, 2147483648
    %v2760 = vmul.f32 %v2759, 1.442695
    %v2761 = vpow.pop %v2760
    %v2762 = vadd.f32 %v2761, 1.0
    %v2763 = vrcp.pop %v2762
    %v2764 = vmul.f32 1.0, %v2763
    %v2765 = vxor.u32 %v2756, 2147483648
    %v2766 = vmul.f32 %v2765, 1.442695
    %v2767 = vpow.pop %v2766
    %v2768 = vadd.f32 %v2767, 1.0
    %v2769 = vrcp.pop %v2768
    %v2770 = vmul.f32 1.0, %v2769
    %v2771 = vtanh.pop %v2757
    %v2772 = vxor.u32 %v2758, 2147483648
    %v2773 = vmul.f32 %v2772, 1.442695
    %v2774 = vpow.pop %v2773
    %v2775 = vadd.f32 %v2774, 1.0
    %v2776 = vrcp.pop %v2775
    %v2777 = vmul.f32 1.0, %v2776
    %v2778 = vmul.f32 %v2770, %v2468
    %v2779 = vmul.f32 %v2764, %v2771
    %v2780 = vadd.f32 %v2778, %v2779
    %v2781 = vtanh.pop %v2780
    %v2782 = vmul.f32 %v2777, %v2781
    %s2783 = scalar_lea.vmem [#allocation3], 48
    %2784 = vst [vmem:[%s2783] sm:$0xff] %v2782
    %s2785 = smul.u32 7, 4
    %s2786 = smul.addr %s2785, 8
    %s2787 = scalar_lea.vmem [#allocation2], %s2786
    %v2788 = vld [vmem:[%s2787] sm:$0xff]
    %v2789 = vld [vmem:[%s2787 + $0x8] sm:$0xff]
    %v2790 = vld [vmem:[%s2787 + $0x10] sm:$0xff]
    %v2791 = vld [vmem:[%s2787 + $0x18] sm:$0xff]
    %v2792 = vpack.c.bf16 %v2782, %v2782
    %v2793 = vld [vmem:[#allocation10] sm:$0xff]
    %v2794 = vld [vmem:[#allocation10 + $0x8] sm:$0xff]
    %v2795 = vld [vmem:[#allocation10 + $0x10] sm:$0xff]
    %v2796 = vld [vmem:[#allocation10 + $0x18] sm:$0xff]
    %v2797 = vld [vmem:[#allocation10 + $0x20] sm:$0xff]
    %v2798 = vld [vmem:[#allocation10 + $0x28] sm:$0xff]
    %v2799 = vld [vmem:[#allocation10 + $0x30] sm:$0xff]
    %v2800 = vld [vmem:[#allocation10 + $0x38] sm:$0xff]
    %v2801 = vld [vmem:[#allocation10 + $0x40] sm:$0xff]
    %v2802 = vld [vmem:[#allocation10 + $0x48] sm:$0xff]
    %v2803 = vld [vmem:[#allocation10 + $0x50] sm:$0xff]
    %v2804 = vld [vmem:[#allocation10 + $0x58] sm:$0xff]
    %v2805 = vld [vmem:[#allocation10 + $0x60] sm:$0xff]
    %v2806 = vld [vmem:[#allocation10 + $0x68] sm:$0xff]
    %v2807 = vld [vmem:[#allocation10 + $0x70] sm:$0xff]
    %v2808 = vld [vmem:[#allocation10 + $0x78] sm:$0xff]
    %v2809 = vld [vmem:[#allocation10 + $0x80] sm:$0xff]
    %v2810 = vld [vmem:[#allocation10 + $0x88] sm:$0xff]
    %v2811 = vld [vmem:[#allocation10 + $0x90] sm:$0xff]
    %v2812 = vld [vmem:[#allocation10 + $0x98] sm:$0xff]
    %v2813 = vld [vmem:[#allocation10 + $0xa0] sm:$0xff]
    %v2814 = vld [vmem:[#allocation10 + $0xa8] sm:$0xff]
    %v2815 = vld [vmem:[#allocation10 + $0xb0] sm:$0xff]
    %v2816 = vld [vmem:[#allocation10 + $0xb8] sm:$0xff]
    %v2817 = vld [vmem:[#allocation10 + $0xc0] sm:$0xff]
    %v2818 = vld [vmem:[#allocation10 + $0xc8] sm:$0xff]
    %v2819 = vld [vmem:[#allocation10 + $0xd0] sm:$0xff]
    %v2820 = vld [vmem:[#allocation10 + $0xd8] sm:$0xff]
    %v2821 = vld [vmem:[#allocation10 + $0xe0] sm:$0xff]
    %v2822 = vld [vmem:[#allocation10 + $0xe8] sm:$0xff]
    %v2823 = vld [vmem:[#allocation10 + $0xf0] sm:$0xff]
    %v2824 = vld [vmem:[#allocation10 + $0xf8] sm:$0xff]
    %v2857 = vunpack.c.l.b16 %v2793
    %v2858 = vunpack.c.h.b16 %v2793
    %v2859 = vunpack.c.l.b16 %v2794
    %v2860 = vunpack.c.h.b16 %v2794
    %v2861 = vunpack.c.l.b16 %v2795
    %v2862 = vunpack.c.h.b16 %v2795
    %v2863 = vunpack.c.l.b16 %v2796
    %v2864 = vunpack.c.h.b16 %v2796
    %v2865 = vunpack.c.l.b16 %v2797
    %v2866 = vunpack.c.h.b16 %v2797
    %v2867 = vunpack.c.l.b16 %v2798
    %v2868 = vunpack.c.h.b16 %v2798
    %v2869 = vunpack.c.l.b16 %v2799
    %v2870 = vunpack.c.h.b16 %v2799
    %v2871 = vunpack.c.l.b16 %v2800
    %v2872 = vunpack.c.h.b16 %v2800
    %v2873 = vunpack.c.l.b16 %v2801
    %v2874 = vunpack.c.h.b16 %v2801
    %v2875 = vunpack.c.l.b16 %v2802
    %v2876 = vunpack.c.h.b16 %v2802
    %v2877 = vunpack.c.l.b16 %v2803
    %v2878 = vunpack.c.h.b16 %v2803
    %v2879 = vunpack.c.l.b16 %v2804
    %v2880 = vunpack.c.h.b16 %v2804
    %v2881 = vunpack.c.l.b16 %v2805
    %v2882 = vunpack.c.h.b16 %v2805
    %v2883 = vunpack.c.l.b16 %v2806
    %v2884 = vunpack.c.h.b16 %v2806
    %v2885 = vunpack.c.l.b16 %v2807
    %v2886 = vunpack.c.h.b16 %v2807
    %v2887 = vunpack.c.l.b16 %v2808
    %v2888 = vunpack.c.h.b16 %v2808
    %v2889 = vunpack.c.l.b16 %v2809
    %v2890 = vunpack.c.h.b16 %v2809
    %v2891 = vunpack.c.l.b16 %v2810
    %v2892 = vunpack.c.h.b16 %v2810
    %v2893 = vunpack.c.l.b16 %v2811
    %v2894 = vunpack.c.h.b16 %v2811
    %v2895 = vunpack.c.l.b16 %v2812
    %v2896 = vunpack.c.h.b16 %v2812
    %v2897 = vunpack.c.l.b16 %v2813
    %v2898 = vunpack.c.h.b16 %v2813
    %v2899 = vunpack.c.l.b16 %v2814
    %v2900 = vunpack.c.h.b16 %v2814
    %v2901 = vunpack.c.l.b16 %v2815
    %v2902 = vunpack.c.h.b16 %v2815
    %v2903 = vunpack.c.l.b16 %v2816
    %v2904 = vunpack.c.h.b16 %v2816
    %v2905 = vunpack.c.l.b16 %v2817
    %v2906 = vunpack.c.h.b16 %v2817
    %v2907 = vunpack.c.l.b16 %v2818
    %v2908 = vunpack.c.h.b16 %v2818
    %v2909 = vunpack.c.l.b16 %v2819
    %v2910 = vunpack.c.h.b16 %v2819
    %v2911 = vunpack.c.l.b16 %v2820
    %v2912 = vunpack.c.h.b16 %v2820
    %v2913 = vunpack.c.l.b16 %v2821
    %v2914 = vunpack.c.h.b16 %v2821
    %v2915 = vunpack.c.l.b16 %v2822
    %v2916 = vunpack.c.h.b16 %v2822
    %v2917 = vunpack.c.l.b16 %v2823
    %v2918 = vunpack.c.h.b16 %v2823
    %v2919 = vunpack.c.l.b16 %v2824
    %v2920 = vunpack.c.h.b16 %v2824
    %v2921 = vpack.c.b16 %v2861, %v2857
    %v2922 = vpack.c.b16 %v2862, %v2858
    %v2923 = vpack.c.b16 %v2863, %v2859
    %v2924 = vpack.c.b16 %v2864, %v2860
    %v2925 = vpack.c.b16 %v2869, %v2865
    %v2926 = vpack.c.b16 %v2870, %v2866
    %v2927 = vpack.c.b16 %v2871, %v2867
    %v2928 = vpack.c.b16 %v2872, %v2868
    %v2929 = vpack.c.b16 %v2877, %v2873
    %v2930 = vpack.c.b16 %v2878, %v2874
    %v2931 = vpack.c.b16 %v2879, %v2875
    %v2932 = vpack.c.b16 %v2880, %v2876
    %v2933 = vpack.c.b16 %v2885, %v2881
    %v2934 = vpack.c.b16 %v2886, %v2882
    %v2935 = vpack.c.b16 %v2887, %v2883
    %v2936 = vpack.c.b16 %v2888, %v2884
    %v2937 = vpack.c.b16 %v2893, %v2889
    %v2938 = vpack.c.b16 %v2894, %v2890
    %v2939 = vpack.c.b16 %v2895, %v2891
    %v2940 = vpack.c.b16 %v2896, %v2892
    %v2941 = vpack.c.b16 %v2901, %v2897
    %v2942 = vpack.c.b16 %v2902, %v2898
    %v2943 = vpack.c.b16 %v2903, %v2899
    %v2944 = vpack.c.b16 %v2904, %v2900
    %v2945 = vpack.c.b16 %v2909, %v2905
    %v2946 = vpack.c.b16 %v2910, %v2906
    %v2947 = vpack.c.b16 %v2911, %v2907
    %v2948 = vpack.c.b16 %v2912, %v2908
    %v2949 = vpack.c.b16 %v2917, %v2913
    %v2950 = vpack.c.b16 %v2918, %v2914
    %v2951 = vpack.c.b16 %v2919, %v2915
    %v2952 = vpack.c.b16 %v2920, %v2916
    %2985 = vmatprep.subr.bf16.mxu0 %v2922
    %2986 = vmatpush1.bf16.msra.mxu0 %v2921
    %2987 = vmatprep.subr.bf16.mxu0 %v2926
    %2988 = vmatpush1.bf16.msra.mxu0 %v2925
    %2989 = vmatprep.subr.bf16.mxu0 %v2930
    %2990 = vmatpush1.bf16.msra.mxu0 %v2929
    %2991 = vmatprep.subr.bf16.mxu0 %v2934
    %2992 = vmatpush1.bf16.msra.mxu0 %v2933
    %2993 = vmatprep.subr.bf16.mxu0 %v2938
    %2994 = vmatpush1.bf16.msra.mxu0 %v2937
    %2995 = vmatprep.subr.bf16.mxu0 %v2942
    %2996 = vmatpush1.bf16.msra.mxu0 %v2941
    %2997 = vmatprep.subr.bf16.mxu0 %v2946
    %2998 = vmatpush1.bf16.msra.mxu0 %v2945
    %2999 = vmatprep.subr.bf16.mxu0 %v2950
    %3000 = vmatpush1.bf16.msra.mxu0 %v2949
    %3001 = vmatprep.subr.bf16.mxu0 0
    %3002 = vmatpush1.bf16.msra.mxu0 0
    %3003 = vmatprep.subr.bf16.mxu0 0
    %3004 = vmatpush1.bf16.msra.mxu0 0
    %3005 = vmatprep.subr.bf16.mxu0 0
    %3006 = vmatpush1.bf16.msra.mxu0 0
    %3007 = vmatprep.subr.bf16.mxu0 0
    %3008 = vmatpush1.bf16.msra.mxu0 0
    %3009 = vmatprep.subr.bf16.mxu0 0
    %3010 = vmatpush1.bf16.msra.mxu0 0
    %3011 = vmatprep.subr.bf16.mxu0 0
    %3012 = vmatpush1.bf16.msra.mxu0 0
    %3013 = vmatprep.subr.bf16.mxu0 0
    %3014 = vmatpush1.bf16.msra.mxu0 0
    %3015 = vmatprep.subr.bf16.mxu0 0
    %3016 = vmatpush1.bf16.msra.mxu0 0
    %3017 = vmatprep.mubr.bf16.mxu0 0
    %3018 = vmatmul.mubr.bf16.gmra.mrb[0].mxu0 %v2792
    %v3019 = vpop.f32.mrb[0].mxu0
    %v3020 = vadd.f32 0.0, %v3019
    %v3021 = vpop.f32.mrb[0].mxu0
    %v3022 = vadd.f32 0.0, %v3021
    %v3023 = vpop.f32.mrb[0].mxu0
    %v3024 = vpop.f32.mrb[0].mxu0
    %3025 = vdwg.mxu0
    %3026 = vmatprep.subr.bf16.mxu0 %v2924
    %3027 = vmatpush1.bf16.msra.mxu0 %v2923
    %3028 = vmatprep.subr.bf16.mxu0 %v2928
    %3029 = vmatpush1.bf16.msra.mxu0 %v2927
    %3030 = vmatprep.subr.bf16.mxu0 %v2932
    %3031 = vmatpush1.bf16.msra.mxu0 %v2931
    %3032 = vmatprep.subr.bf16.mxu0 %v2936
    %3033 = vmatpush1.bf16.msra.mxu0 %v2935
    %3034 = vmatprep.subr.bf16.mxu0 %v2940
    %3035 = vmatpush1.bf16.msra.mxu0 %v2939
    %3036 = vmatprep.subr.bf16.mxu0 %v2944
    %3037 = vmatpush1.bf16.msra.mxu0 %v2943
    %3038 = vmatprep.subr.bf16.mxu0 %v2948
    %3039 = vmatpush1.bf16.msra.mxu0 %v2947
    %3040 = vmatprep.subr.bf16.mxu0 %v2952
    %3041 = vmatpush1.bf16.msra.mxu0 %v2951
    %3042 = vmatprep.subr.bf16.mxu0 0
    %3043 = vmatpush1.bf16.msra.mxu0 0
    %3044 = vmatprep.subr.bf16.mxu0 0
    %3045 = vmatpush1.bf16.msra.mxu0 0
    %3046 = vmatprep.subr.bf16.mxu0 0
    %3047 = vmatpush1.bf16.msra.mxu0 0
    %3048 = vmatprep.subr.bf16.mxu0 0
    %3049 = vmatpush1.bf16.msra.mxu0 0
    %3050 = vmatprep.subr.bf16.mxu0 0
    %3051 = vmatpush1.bf16.msra.mxu0 0
    %3052 = vmatprep.subr.bf16.mxu0 0
    %3053 = vmatpush1.bf16.msra.mxu0 0
    %3054 = vmatprep.subr.bf16.mxu0 0
    %3055 = vmatpush1.bf16.msra.mxu0 0
    %3056 = vmatprep.subr.bf16.mxu0 0
    %3057 = vmatpush1.bf16.msra.mxu0 0
    %3058 = vmatprep.mubr.bf16.mxu0 0
    %3059 = vmatmul.mubr.bf16.gmra.mrb[0].mxu0 %v2792
    %v3060 = vpop.f32.mrb[0].mxu0
    %v3061 = vadd.f32 0.0, %v3060
    %v3062 = vpop.f32.mrb[0].mxu0
    %v3063 = vadd.f32 0.0, %v3062
    %v3064 = vpop.f32.mrb[0].mxu0
    %v3065 = vpop.f32.mrb[0].mxu0
    %3066 = vdwg.mxu0
    %v3067 = vadd.f32 %v2788, %v3020
    %v3068 = vadd.f32 %v2789, %v3022
    %v3069 = vadd.f32 %v2790, %v3061
    %v3070 = vadd.f32 %v2791, %v3063
    %v3071 = vxor.u32 %v3067, 2147483648
    %v3072 = vmul.f32 %v3071, 1.442695
    %v3073 = vpow.pop %v3072
    %v3074 = vadd.f32 %v3073, 1.0
    %v3075 = vrcp.pop %v3074
    %v3076 = vmul.f32 1.0, %v3075
    %v3077 = vxor.u32 %v3068, 2147483648
    %v3078 = vmul.f32 %v3077, 1.442695
    %v3079 = vpow.pop %v3078
    %v3080 = vadd.f32 %v3079, 1.0
    %v3081 = vrcp.pop %v3080
    %v3082 = vmul.f32 1.0, %v3081
    %v3083 = vtanh.pop %v3069
    %v3084 = vxor.u32 %v3070, 2147483648
    %v3085 = vmul.f32 %v3084, 1.442695
    %v3086 = vpow.pop %v3085
    %v3087 = vadd.f32 %v3086, 1.0
    %v3088 = vrcp.pop %v3087
    %v3089 = vmul.f32 1.0, %v3088
    %v3090 = vmul.f32 %v3082, %v2780
    %v3091 = vmul.f32 %v3076, %v3083
    %v3092 = vadd.f32 %v3090, %v3091
    %v3093 = vtanh.pop %v3092
    %v3094 = vmul.f32 %v3089, %v3093
    %s3095 = scalar_lea.vmem [#allocation3], 56
    %3096 = vst [vmem:[%s3095] sm:$0xff] %v3094
    %v3097 = vld [vmem:[#allocation3] sm:$0xff]
    %v3098 = vld [vmem:[#allocation3 + $0x8] sm:$0xff]
    %v3099 = vld [vmem:[#allocation3 + $0x10] sm:$0xff]
    %v3100 = vld [vmem:[#allocation3 + $0x18] sm:$0xff]
    %v3101 = vld [vmem:[#allocation3 + $0x20] sm:$0xff]
    %v3102 = vld [vmem:[#allocation3 + $0x28] sm:$0xff]
    %v3103 = vld [vmem:[#allocation3 + $0x30] sm:$0xff]
    %v3104 = vld [vmem:[#allocation3 + $0x38] sm:$0xff]
    %v3105 = vpack.c.bf16 %v3098, %v3097
    %v3106 = vpack.c.bf16 %v3100, %v3099
    %v3107 = vpack.c.bf16 %v3102, %v3101
    %v3108 = vpack.c.bf16 %v3104, %v3103
    %v3109 = vld [vmem:[#allocation12] sm:$0xf]
    %v3110 = vld [vmem:[#allocation12 + $0x4] sm:$0xf]
    %v3111 = vld [vmem:[#allocation12 + $0x8] sm:$0xf]
    %v3112 = vld [vmem:[#allocation12 + $0xc] sm:$0xf]
    %v3113 = vld [vmem:[#allocation12 + $0x10] sm:$0xf]
    %v3114 = vld [vmem:[#allocation12 + $0x14] sm:$0xf]
    %v3115 = vld [vmem:[#allocation12 + $0x18] sm:$0xf]
    %v3116 = vld [vmem:[#allocation12 + $0x1c] sm:$0xf]
    %v3117 = vld [vmem:[#allocation12 + $0x20] sm:$0xf]
    %v3118 = vld [vmem:[#allocation12 + $0x24] sm:$0xf]
    %v3119 = vld [vmem:[#allocation12 + $0x28] sm:$0xf]
    %v3120 = vld [vmem:[#allocation12 + $0x2c] sm:$0xf]
    %v3121 = vld [vmem:[#allocation12 + $0x30] sm:$0xf]
    %v3122 = vld [vmem:[#allocation12 + $0x34] sm:$0xf]
    %v3123 = vld [vmem:[#allocation12 + $0x38] sm:$0xf]
    %v3124 = vld [vmem:[#allocation12 + $0x3c] sm:$0xf]
    %v3125 = vld [vmem:[%s7] sm:$0x1]
    %v3127 = vlaneseq
    %v3128 = vshrl.u32 %v3127, 7
    %v3129 = vsub.s32 0, %v3128
    %v3130 = vrot.slane %v3125, %v3129
    %v3148 = vunpack.c.l.b16 %v3109
    %v3149 = vunpack.c.l.b16 %v3110
    %v3150 = vunpack.c.l.b16 %v3111
    %v3151 = vunpack.c.l.b16 %v3112
    %v3152 = vunpack.c.l.b16 %v3113
    %v3153 = vunpack.c.l.b16 %v3114
    %v3154 = vunpack.c.l.b16 %v3115
    %v3155 = vunpack.c.l.b16 %v3116
    %v3156 = vunpack.c.l.b16 %v3117
    %v3157 = vunpack.c.l.b16 %v3118
    %v3158 = vunpack.c.l.b16 %v3119
    %v3159 = vunpack.c.l.b16 %v3120
    %v3160 = vunpack.c.l.b16 %v3121
    %v3161 = vunpack.c.l.b16 %v3122
    %v3162 = vunpack.c.l.b16 %v3123
    %v3163 = vunpack.c.l.b16 %v3124
    %v3164 = vpack.c.b16 %v3149, %v3148
    %v3165 = vpack.c.b16 %v3151, %v3150
    %v3166 = vpack.c.b16 %v3153, %v3152
    %v3167 = vpack.c.b16 %v3155, %v3154
    %v3168 = vpack.c.b16 %v3157, %v3156
    %v3169 = vpack.c.b16 %v3159, %v3158
    %v3170 = vpack.c.b16 %v3161, %v3160
    %v3171 = vpack.c.b16 %v3163, %v3162
    %3180 = vmatprep.subr.bf16.mxu0 0
    %3181 = vmatpush1.bf16.msra.mxu0 %v3164
    %3182 = vmatprep.subr.bf16.mxu0 0
    %3183 = vmatpush1.bf16.msra.mxu0 %v3165
    %3184 = vmatprep.subr.bf16.mxu0 0
    %3185 = vmatpush1.bf16.msra.mxu0 %v3166
    %3186 = vmatprep.subr.bf16.mxu0 0
    %3187 = vmatpush1.bf16.msra.mxu0 %v3167
    %3188 = vmatprep.subr.bf16.mxu0 0
    %3189 = vmatpush1.bf16.msra.mxu0 %v3168
    %3190 = vmatprep.subr.bf16.mxu0 0
    %3191 = vmatpush1.bf16.msra.mxu0 %v3169
    %3192 = vmatprep.subr.bf16.mxu0 0
    %3193 = vmatpush1.bf16.msra.mxu0 %v3170
    %3194 = vmatprep.subr.bf16.mxu0 0
    %3195 = vmatpush1.bf16.msra.mxu0 %v3171
    %3196 = vmatprep.subr.bf16.mxu0 0
    %3197 = vmatpush1.bf16.msra.mxu0 0
    %3198 = vmatprep.subr.bf16.mxu0 0
    %3199 = vmatpush1.bf16.msra.mxu0 0
    %3200 = vmatprep.subr.bf16.mxu0 0
    %3201 = vmatpush1.bf16.msra.mxu0 0
    %3202 = vmatprep.subr.bf16.mxu0 0
    %3203 = vmatpush1.bf16.msra.mxu0 0
    %3204 = vmatprep.subr.bf16.mxu0 0
    %3205 = vmatpush1.bf16.msra.mxu0 0
    %3206 = vmatprep.subr.bf16.mxu0 0
    %3207 = vmatpush1.bf16.msra.mxu0 0
    %3208 = vmatprep.subr.bf16.mxu0 0
    %3209 = vmatpush1.bf16.msra.mxu0 0
    %3210 = vmatprep.subr.bf16.mxu0 0
    %3211 = vmatpush1.bf16.msra.mxu0 0
    %3212 = vmatprep.mubr.bf16.mxu0 0
    %3213 = vmatmul.mubr.bf16.gmra.mrb[0].mxu0 %v3105
    %v3214 = vpop.f32.mrb[0].mxu0
    %v3215 = vadd.f32 %v3130, %v3214
    %v3216 = vpop.f32.mrb[0].mxu0
    %v3217 = vpop.f32.mrb[0].mxu0
    %v3218 = vadd.f32 %v3130, %v3217
    %v3219 = vpop.f32.mrb[0].mxu0
    %3220 = vmatprep.mubr.bf16.mxu0 0
    %3221 = vmatmul.mubr.bf16.gmra.mrb[0].mxu0 %v3106
    %v3222 = vpop.f32.mrb[0].mxu0
    %v3223 = vadd.f32 %v3130, %v3222
    %v3224 = vpop.f32.mrb[0].mxu0
    %v3225 = vpop.f32.mrb[0].mxu0
    %v3226 = vadd.f32 %v3130, %v3225
    %v3227 = vpop.f32.mrb[0].mxu0
    %3228 = vmatprep.mubr.bf16.mxu0 0
    %3229 = vmatmul.mubr.bf16.gmra.mrb[0].mxu0 %v3107
    %v3230 = vpop.f32.mrb[0].mxu0
    %v3231 = vadd.f32 %v3130, %v3230
    %v3232 = vpop.f32.mrb[0].mxu0
    %v3233 = vpop.f32.mrb[0].mxu0
    %v3234 = vadd.f32 %v3130, %v3233
    %v3235 = vpop.f32.mrb[0].mxu0
    %3236 = vmatprep.mubr.bf16.mxu0 0
    %3237 = vmatmul.mubr.bf16.gmra.mrb[0].mxu0 %v3108
    %v3238 = vpop.f32.mrb[0].mxu0
    %v3239 = vadd.f32 %v3130, %v3238
    %v3240 = vpop.f32.mrb[0].mxu0
    %v3241 = vpop.f32.mrb[0].mxu0
    %v3242 = vadd.f32 %v3130, %v3241
    %v3243 = vpop.f32.mrb[0].mxu0
    %3244 = vdwg.mxu0
    %v3245 = vxor.u32 %v3215, 2147483648
    %v3246 = vxor.u32 %v3218, 2147483648
    %v3247 = vxor.u32 %v3223, 2147483648
    %v3248 = vxor.u32 %v3226, 2147483648
    %v3249 = vxor.u32 %v3231, 2147483648
    %v3250 = vxor.u32 %v3234, 2147483648
    %v3251 = vxor.u32 %v3239, 2147483648
    %v3252 = vxor.u32 %v3242, 2147483648
    %v3253 = vmul.f32 %v3245, 1.442695
    %v3254 = vpow.pop %v3253
    %v3255 = vmul.f32 %v3246, 1.442695
    %v3256 = vpow.pop %v3255
    %v3257 = vmul.f32 %v3247, 1.442695
    %v3258 = vpow.pop %v3257
    %v3259 = vmul.f32 %v3248, 1.442695
    %v3260 = vpow.pop %v3259
    %v3261 = vmul.f32 %v3249, 1.442695
    %v3262 = vpow.pop %v3261
    %v3263 = vmul.f32 %v3250, 1.442695
    %v3264 = vpow.pop %v3263
    %v3265 = vmul.f32 %v3251, 1.442695
    %v3266 = vpow.pop %v3265
    %v3267 = vmul.f32 %v3252, 1.442695
    %v3268 = vpow.pop %v3267
    %v3269 = vadd.f32 %v3254, 1.0
    %v3270 = vadd.f32 %v3256, 1.0
    %v3271 = vadd.f32 %v3258, 1.0
    %v3272 = vadd.f32 %v3260, 1.0
    %v3273 = vadd.f32 %v3262, 1.0
    %v3274 = vadd.f32 %v3264, 1.0
    %v3275 = vadd.f32 %v3266, 1.0
    %v3276 = vadd.f32 %v3268, 1.0
    %v3277 = vrcp.pop %v3269
    %v3278 = vmul.f32 1.0, %v3277
    %v3279 = vrcp.pop %v3270
    %v3280 = vmul.f32 1.0, %v3279
    %v3281 = vrcp.pop %v3271
    %v3282 = vmul.f32 1.0, %v3281
    %v3283 = vrcp.pop %v3272
    %v3284 = vmul.f32 1.0, %v3283
    %v3285 = vrcp.pop %v3273
    %v3286 = vmul.f32 1.0, %v3285
    %v3287 = vrcp.pop %v3274
    %v3288 = vmul.f32 1.0, %v3287
    %v3289 = vrcp.pop %v3275
    %v3290 = vmul.f32 1.0, %v3289
    %v3291 = vrcp.pop %v3276
    %v3292 = vmul.f32 1.0, %v3291
    %3293 = vst [vmem:[#allocation13] sm:$0xff] %v3278
    %3294 = vst [vmem:[#allocation13 + $0x8] sm:$0xff] %v3280
    %3295 = vst [vmem:[#allocation13 + $0x10] sm:$0xff] %v3282
    %3296 = vst [vmem:[#allocation13 + $0x18] sm:$0xff] %v3284
    %3297 = vst [vmem:[#allocation13 + $0x20] sm:$0xff] %v3286
    %3298 = vst [vmem:[#allocation13 + $0x28] sm:$0xff] %v3288
    %3299 = vst [vmem:[#allocation13 + $0x30] sm:$0xff] %v3290
    %3300 = vst [vmem:[#allocation13 + $0x38] sm:$0xff] %v3292
    // Predicated region
    $region54: #{tpu_custom_call.1} parent=1 // pred_check
      _
    $region55: #{tpu_custom_call.1} parent=1 // pred_check_branch
      %3302 = sbr.rel (0) target = $region57
    $region56: #{tpu_custom_call.1} parent=1 // pred_region
      %s3304 = ssub.s32 1024, 1024
      %3305 = vsyncadd [#allocation6], %s3304
      %s3306 = sshll.u32 [#allocation13], 4
      %s3307 = int_to_ptr.vmem [resolvable:$true] %s3306
      %3312 = dma.vmem_to_hbm [thread:$0]  %s3307, 1024, %s8, [#allocation6], 128, 128, 8
    $region57: #{tpu_custom_call.1} parent=1 // pred_fallthru
      _
    // Predicated region
    $region58: #{tpu_custom_call.1} parent=1 // pred_check
      _
    $region59: #{tpu_custom_call.1} parent=1 // pred_check_branch
      %3314 = sbr.rel (0) target = $region61
    $region60: #{tpu_custom_call.1} parent=1 // pred_region
      %3315 = dma.done [#allocation6], 1024
    $region61: #{tpu_custom_call.1} parent=1 // pred_fallthru
      _
    %3316 = vsyncpa [#allocation5], 1
    %3317 = vsyncpa [#allocation8], 1
    %3318 = vsyncpa [#allocation11], 1
    %3319 = vsyncpa [#allocation6], 1

</llo_original>
